<compile_context>
chip_gen: v7x
topology: tpu7x:2x2x1
jax: 0.10.0
libtpu: 0.0.40
codegen_flags: <defaults>
</compile_context>

<pallas_src>
import math
from functools import partial

import jax
import jax.numpy as jnp
import numpy as np
from jax.experimental import pallas as pl
from jax.experimental.pallas import tpu as pltpu

# ----------------------- small synthetic ViT config -----------------------
B = 2            # batch
C = 3            # RGB channels (module asserts [bs, 3, w, h])
IMG = 16         # spatial size
P = 4            # patch size
D = 32           # embed dim
DEPTH = 2        # transformer blocks
NH = 4           # attention heads
DH = D // NH     # head dim
HID = 4 * D      # MLP hidden dim
K = (IMG // P) ** 2   # patch tokens per image
S = K + 1             # +CLS token
PPC = P * P * C       # patchified feature length
EPS = 1e-6
SCALE = DH ** -0.5
GPAD = 8              # sublane-aligned start of the positional rows in gvec


# ------------------------------ shared math ------------------------------
def _layernorm(x, w, b):
    mu = jnp.mean(x, axis=-1, keepdims=True)
    xc = x - mu
    var = jnp.mean(xc * xc, axis=-1, keepdims=True)
    return xc * jax.lax.rsqrt(var + EPS) * w + b


def _gelu_exact(x):
    # torch.nn.GELU() default = exact erf-based GELU (reference model only)
    return 0.5 * x * (1.0 + jax.lax.erf(x * np.float32(0.7071067811865476)))


def _gelu_tanh(x):
    # tanh approximation -> EUP slot inside the kernel
    c0 = np.float32(0.7978845608028654)   # sqrt(2/pi)
    c1 = np.float32(0.044715)
    return 0.5 * x * (1.0 + jnp.tanh(c0 * (x + c1 * x * x * x)))


def _patchify(x_nchw):
    # NCHW -> [B, K, P*P*C], per-patch feature order (C, ph, pw)
    Bb, Cc, H, W = x_nchw.shape
    gh, gw = H // P, W // P
    p = x_nchw.reshape(Bb, Cc, gh, P, gw, P)
    p = p.transpose(0, 2, 4, 1, 3, 5)
    return p.reshape(Bb, gh * gw, Cc * P * P)


# ------------------------------- the kernel -------------------------------
def vit_kernel(patches_ref, patch_w_ref, gvec_ref,
               wq_ref, wk_ref, wv_ref, bq_ref, bk_ref, bv_ref, wo_ref,
               fc1w_ref, fc1b_ref, fc2w_ref, lvec_ref,
               out_ref):
    f32 = jnp.float32
    bf16 = jnp.bfloat16
    mm = partial(jnp.dot, preferred_element_type=f32)

    # --- packed global vectors (sublane-aligned) ---
    normw = gvec_ref[0:1, :]                     # final LN weight
    normb = gvec_ref[1:2, :]                     # final LN bias
    crow = gvec_ref[2:3, :]                      # cls token + its pos embed
    ppos = gvec_ref[GPAD:GPAD + K, :]            # patch pos embeds + patch-embed bias

    # --- patch embedding: stride-P conv == patchify (host) + one bf16 matmul ---
    ptok = mm(patches_ref[...], patch_w_ref[...]) + ppos          # (K, D) f32
    x = jnp.concatenate([ptok, crow], axis=0)                     # (S, D), CLS last

    # --- transformer blocks (DEPTH static -> fully unrolled) ---
    for l in range(DEPTH):
        lv = lvec_ref[l]                         # (8, D) packed per-layer vectors
        ln1w, ln1b = lv[0:1, :], lv[1:2, :]
        bo, ls1 = lv[2:3, :], lv[3:4, :]
        ln2w, ln2b = lv[4:5, :], lv[5:6, :]
        fc2b, ls2 = lv[6:7, :], lv[7:8, :]

        # attention: head index on a leading ref axis (no sub-lane slicing);
        # output projection accumulated per head (no lane concat).
        xn = _layernorm(x, ln1w, ln1b).astype(bf16)
        att = jnp.zeros((S, D), f32)
        for h in range(NH):
            q = mm(xn, wq_ref[l, h]) + bq_ref[l, h]     # (S, DH); q pre-scaled
            k = mm(xn, wk_ref[l, h]) + bk_ref[l, h]
            v = mm(xn, wv_ref[l, h]) + bv_ref[l, h]
            s = jax.lax.dot_general(q.astype(bf16), k.astype(bf16),
                                    (((1,), (1,)), ((), ())),
                                    preferred_element_type=f32)   # (S, S)
            s = s - jnp.max(s, axis=-1, keepdims=True)
            e = jnp.exp(s)
            inv = pl.reciprocal(jnp.sum(e, axis=-1, keepdims=True), approx=True)
            pv = mm(e.astype(bf16), v.astype(bf16)) * inv         # (S, DH)
            att = att + mm(pv.astype(bf16), wo_ref[l, h])         # (S, D)
        x = x + ls1 * (att + bo)                                  # LayerScale + res

        # MLP
        xn2 = _layernorm(x, ln2w, ln2b)
        hid = _gelu_tanh(mm(xn2.astype(bf16), fc1w_ref[l]) + fc1b_ref[l])   # (S, HID)
        x = x + ls2 * (mm(hid.astype(bf16), fc2w_ref[l]) + fc2b)

    # final LayerNorm (get_intermediate_layers default norm=True); drop CLS row
    xf = _layernorm(x, normw, normb)
    out_ref[...] = xf[0:K, :]


# ------------------------------ param packing ------------------------------
def pack_params(p):
    bf16 = jnp.bfloat16
    scale = np.float32(SCALE)

    patch_w = p["patch_w"].astype(bf16)                                  # (PPC, D)

    # gvec rows: 0 normw | 1 normb | 2 cls+pos_cls | 3-7 pad | 8..8+K-1 pos+patch_b
    pad = jnp.zeros((GPAD - 3, D), jnp.float32)
    gvec = jnp.concatenate([p["normw"], p["normb"],
                            p["cls"] + p["pos"][K:K + 1],
                            pad,
                            p["pos"][:K] + p["patch_b"]], axis=0)        # (GPAD+K, D)

    wq = (p["wq"] * scale).astype(bf16)       # (DEPTH, NH, D, DH), q pre-scaled
    wk = p["wk"].astype(bf16)
    wv = p["wv"].astype(bf16)
    bq = (p["bq"] * scale).astype(jnp.float32)
    bk = p["bk"]
    bv = p["bv"]
    wo = p["wo"].astype(bf16)                 # (DEPTH, NH, DH, D)

    fc1w = p["fc1w"].astype(bf16)
    fc1b = p["fc1b"]
    fc2w = p["fc2w"].astype(bf16)

    lvec = jnp.concatenate([p["ln1w"], p["ln1b"], p["bo"], p["ls1"],
                            p["ln2w"], p["ln2b"], p["fc2b"], p["ls2"]],
                           axis=1)            # (DEPTH, 8, D)

    return (patch_w, gvec, wq, wk, wv, bq, bk, bv, wo, fc1w, fc1b, fc2w, lvec)


# ------------------------------ host wrapper ------------------------------
def dinov2_backbone_forward(x_nchw, params):
    assert x_nchw.ndim == 4 and x_nchw.shape[1] == C
    assert x_nchw.shape == (B, C, IMG, IMG)
    patches = _patchify(x_nchw).reshape(B * K, PPC).astype(jnp.bfloat16)
    packed = pack_params(params)

    # weights: whole-array blocks + constant index maps -> loaded once, resident.
    weight_specs = [pl.BlockSpec(w.shape, lambda b, nd=w.ndim: (0,) * nd)
                    for w in packed]

    fn = pl.pallas_call(
        vit_kernel,
        out_shape=jax.ShapeDtypeStruct((B * K, D), jnp.float32),
        grid_spec=pltpu.PrefetchScalarGridSpec(
            num_scalar_prefetch=0,
            grid=(B,),                                            # one image / step
            in_specs=[pl.BlockSpec((K, PPC), lambda b: (b, 0))] + weight_specs,
            out_specs=pl.BlockSpec((K, D), lambda b: (b, 0)),
        ),
        compiler_params=pltpu.CompilerParams(
            dimension_semantics=("parallel",)),                   # v7x: 1 image / TC
    )
    y = fn(patches, *packed)                  # (B*K, D)
    return y.reshape(B, K, D)


# ------------------------- deterministic parameters -------------------------
def init_params(key):
    keys = iter(jax.random.split(key, 32))

    def nrm(shape, scale):
        return (scale * jax.random.normal(next(keys), shape)).astype(jnp.float32)

    p = {}
    p["patch_w"] = nrm((PPC, D), 1.0 / math.sqrt(PPC))
    p["patch_b"] = nrm((1, D), 0.02)
    p["cls"] = nrm((1, D), 0.02)
    p["pos"] = nrm((S, D), 0.02)
    p["ln1w"] = 1.0 + nrm((DEPTH, 1, D), 0.02)
    p["ln1b"] = nrm((DEPTH, 1, D), 0.02)
    p["wq"] = nrm((DEPTH, NH, D, DH), 1.0 / math.sqrt(D))
    p["bq"] = nrm((DEPTH, NH, 1, DH), 0.02)
    p["wk"] = nrm((DEPTH, NH, D, DH), 1.0 / math.sqrt(D))
    p["bk"] = nrm((DEPTH, NH, 1, DH), 0.02)
    p["wv"] = nrm((DEPTH, NH, D, DH), 1.0 / math.sqrt(D))
    p["bv"] = nrm((DEPTH, NH, 1, DH), 0.02)
    p["wo"] = nrm((DEPTH, NH, DH, D), 1.0 / math.sqrt(D))
    p["bo"] = nrm((DEPTH, 1, D), 0.02)
    p["ls1"] = nrm((DEPTH, 1, D), 0.1)
    p["ln2w"] = 1.0 + nrm((DEPTH, 1, D), 0.02)
    p["ln2b"] = nrm((DEPTH, 1, D), 0.02)
    p["fc1w"] = nrm((DEPTH, D, HID), 1.0 / math.sqrt(D))
    p["fc1b"] = nrm((DEPTH, 1, HID), 0.02)
    p["fc2w"] = nrm((DEPTH, HID, D), 1.0 / math.sqrt(HID))
    p["fc2b"] = nrm((DEPTH, 1, D), 0.02)
    p["ls2"] = nrm((DEPTH, 1, D), 0.1)
    p["normw"] = 1.0 + nrm((1, D), 0.02)
    p["normb"] = nrm((1, D), 0.02)
    return p


# ------------------------- pure-JAX reference model -------------------------
def reference_forward(x_nchw, p):
    patches = _patchify(x_nchw).astype(jnp.float32)

    def one(pb):
        ptok = pb @ p["patch_w"] + p["patch_b"]
        x = jnp.concatenate([ptok + p["pos"][:K], p["cls"] + p["pos"][K:]], axis=0)
        for l in range(DEPTH):
            xn = _layernorm(x, p["ln1w"][l], p["ln1b"][l])
            attn = jnp.zeros((S, D), jnp.float32)
            for h in range(NH):
                q = xn @ p["wq"][l, h] + p["bq"][l, h]
                k = xn @ p["wk"][l, h] + p["bk"][l, h]
                v = xn @ p["wv"][l, h] + p["bv"][l, h]
                s = (q * SCALE) @ k.T
                a = jax.nn.softmax(s, axis=-1)
                attn = attn + (a @ v) @ p["wo"][l, h]
            attn = attn + p["bo"][l]
            x = x + p["ls1"][l] * attn
            xn2 = _layernorm(x, p["ln2w"][l], p["ln2b"][l])
            hid = _gelu_exact(xn2 @ p["fc1w"][l] + p["fc1b"][l])
            mlp = hid @ p["fc2w"][l] + p["fc2b"][l]
            x = x + p["ls2"][l] * mlp
        xf = _layernorm(x, p["normw"], p["normb"])
        return xf[:K]

    return jnp.stack([one(patches[b]) for b in range(x_nchw.shape[0])])


# ----------------------------------- main -----------------------------------
if __name__ == "__main__":
    key = jax.random.PRNGKey(0)
    pkey, xkey = jax.random.split(key)
    params = init_params(pkey)
    x = jax.random.normal(xkey, (B, C, IMG, IMG), jnp.float32)   # [bs, 3, w, h]

    y = dinov2_backbone_forward(x, params)
    y = jax.block_until_ready(y)
    assert y.shape == (B, K, D), y.shape

    y_ref = jax.block_until_ready(reference_forward(x, params))
    np.testing.assert_allclose(np.asarray(y), np.asarray(y_ref), atol=5e-2, rtol=5e-2)

    print("KERNEL_OK")
</pallas_src>

<mosaic_0001>
module attributes {stable_mosaic.version = 11 : i64} {
  func.func @vit_kernel(%arg0: i32, %arg1: memref<16x48xbf16, #tpu.memory_space<vmem>>, %arg2: memref<48x32xbf16, #tpu.memory_space<vmem>>, %arg3: memref<24x32xf32, #tpu.memory_space<vmem>>, %arg4: memref<2x4x32x8xbf16, #tpu.memory_space<vmem>>, %arg5: memref<2x4x32x8xbf16, #tpu.memory_space<vmem>>, %arg6: memref<2x4x32x8xbf16, #tpu.memory_space<vmem>>, %arg7: memref<2x4x1x8xf32, #tpu.memory_space<vmem>>, %arg8: memref<2x4x1x8xf32, #tpu.memory_space<vmem>>, %arg9: memref<2x4x1x8xf32, #tpu.memory_space<vmem>>, %arg10: memref<2x4x8x32xbf16, #tpu.memory_space<vmem>>, %arg11: memref<2x32x128xbf16, #tpu.memory_space<vmem>>, %arg12: memref<2x1x128xf32, #tpu.memory_space<vmem>>, %arg13: memref<2x128x32xbf16, #tpu.memory_space<vmem>>, %arg14: memref<2x8x32xf32, #tpu.memory_space<vmem>>, %arg15: memref<16x32xf32, #tpu.memory_space<vmem>>) attributes {dimension_semantics = [#tpu.dimension_semantics<parallel>], iteration_bounds = array<i64: 2>, scalar_prefetch = 0 : i64, scratch_operands = 0 : i64, tpu.core_type = #tpu.core_type<tc>, window_params = [{transform_indices = @transform_0, window_bounds = array<i64: 16, 48>}, {pipeline_mode = #tpu.pipeline_mode<synchronous>, transform_indices = @transform_1, window_bounds = array<i64: 48, 32>}, {pipeline_mode = #tpu.pipeline_mode<synchronous>, transform_indices = @transform_2, window_bounds = array<i64: 24, 32>}, {pipeline_mode = #tpu.pipeline_mode<synchronous>, transform_indices = @transform_3, window_bounds = array<i64: 2, 4, 32, 8>}, {pipeline_mode = #tpu.pipeline_mode<synchronous>, transform_indices = @transform_4, window_bounds = array<i64: 2, 4, 32, 8>}, {pipeline_mode = #tpu.pipeline_mode<synchronous>, transform_indices = @transform_5, window_bounds = array<i64: 2, 4, 32, 8>}, {pipeline_mode = #tpu.pipeline_mode<synchronous>, transform_indices = @transform_6, window_bounds = array<i64: 2, 4, 1, 8>}, {pipeline_mode = #tpu.pipeline_mode<synchronous>, transform_indices = @transform_7, window_bounds = array<i64: 2, 4, 1, 8>}, {pipeline_mode = #tpu.pipeline_mode<synchronous>, transform_indices = @transform_8, window_bounds = array<i64: 2, 4, 1, 8>}, {pipeline_mode = #tpu.pipeline_mode<synchronous>, transform_indices = @transform_9, window_bounds = array<i64: 2, 4, 8, 32>}, {pipeline_mode = #tpu.pipeline_mode<synchronous>, transform_indices = @transform_10, window_bounds = array<i64: 2, 32, 128>}, {pipeline_mode = #tpu.pipeline_mode<synchronous>, transform_indices = @transform_11, window_bounds = array<i64: 2, 1, 128>}, {pipeline_mode = #tpu.pipeline_mode<synchronous>, transform_indices = @transform_12, window_bounds = array<i64: 2, 128, 32>}, {pipeline_mode = #tpu.pipeline_mode<synchronous>, transform_indices = @transform_13, window_bounds = array<i64: 2, 8, 32>}, {transform_indices = @transform_14, window_bounds = array<i64: 16, 32>}]} {
    %c0 = arith.constant 0 : index
    %c0_0 = arith.constant 0 : index
    %0 = vector.load %arg3[%c0, %c0_0] : memref<24x32xf32, #tpu.memory_space<vmem>>, vector<1x32xf32>
    %c1 = arith.constant 1 : index
    %c0_1 = arith.constant 0 : index
    %1 = vector.load %arg3[%c1, %c0_1] : memref<24x32xf32, #tpu.memory_space<vmem>>, vector<1x32xf32>
    %c2 = arith.constant 2 : index
    %c0_2 = arith.constant 0 : index
    %2 = vector.load %arg3[%c2, %c0_2] : memref<24x32xf32, #tpu.memory_space<vmem>>, vector<1x32xf32>
    %c8 = arith.constant 8 : index
    %c0_3 = arith.constant 0 : index
    %3 = vector.load %arg3[%c8, %c0_3] : memref<24x32xf32, #tpu.memory_space<vmem>>, vector<16x32xf32>
    %c0_4 = arith.constant 0 : index
    %c0_5 = arith.constant 0 : index
    %4 = vector.load %arg1[%c0_4, %c0_5] : memref<16x48xbf16, #tpu.memory_space<vmem>>, vector<16x48xbf16>
    %c0_6 = arith.constant 0 : index
    %c0_7 = arith.constant 0 : index
    %5 = vector.load %arg2[%c0_6, %c0_7] : memref<48x32xbf16, #tpu.memory_space<vmem>>, vector<48x32xbf16>
    %cst = arith.constant dense<0.000000e+00> : vector<16x32xf32>
    %6 = tpu.matmul %4, %5, %cst {dimension_numbers = #tpu.dot_dimension_numbers<[1], [0], [0], [1], [0, 0, 1, 1], [], []>} : vector<16x48xbf16>, vector<48x32xbf16>, vector<16x32xf32> -> vector<16x32xf32>
    %7 = arith.addf %6, %3 : vector<16x32xf32>
    %8 = tpu.concatenate %7, %2 in 0 : vector<16x32xf32>, vector<1x32xf32> -> vector<17x32xf32>
    %c0_8 = arith.constant 0 : index
    %c0_9 = arith.constant 0 : index
    %c0_10 = arith.constant 0 : index
    %9 = vector.load %arg14[%c0_8, %c0_9, %c0_10] : memref<2x8x32xf32, #tpu.memory_space<vmem>>, vector<1x8x32xf32>
    %10 = vector.shape_cast %9 : vector<1x8x32xf32> to vector<8x32xf32>
    %11 = vector.extract_strided_slice %10 {offsets = [0, 0], sizes = [1, 32], strides = [1, 1]} : vector<8x32xf32> to vector<1x32xf32>
    %12 = vector.extract_strided_slice %10 {offsets = [1, 0], sizes = [1, 32], strides = [1, 1]} : vector<8x32xf32> to vector<1x32xf32>
    %13 = vector.extract_strided_slice %10 {offsets = [2, 0], sizes = [1, 32], strides = [1, 1]} : vector<8x32xf32> to vector<1x32xf32>
    %14 = vector.extract_strided_slice %10 {offsets = [3, 0], sizes = [1, 32], strides = [1, 1]} : vector<8x32xf32> to vector<1x32xf32>
    %15 = vector.extract_strided_slice %10 {offsets = [4, 0], sizes = [1, 32], strides = [1, 1]} : vector<8x32xf32> to vector<1x32xf32>
    %16 = vector.extract_strided_slice %10 {offsets = [5, 0], sizes = [1, 32], strides = [1, 1]} : vector<8x32xf32> to vector<1x32xf32>
    %17 = vector.extract_strided_slice %10 {offsets = [6, 0], sizes = [1, 32], strides = [1, 1]} : vector<8x32xf32> to vector<1x32xf32>
    %18 = vector.extract_strided_slice %10 {offsets = [7, 0], sizes = [1, 32], strides = [1, 1]} : vector<8x32xf32> to vector<1x32xf32>
    %cst_11 = arith.constant dense<0.000000e+00> : vector<17xf32>
    %19 = vector.multi_reduction <add>, %8, %cst_11 [1] : vector<17x32xf32> to vector<17xf32>
    %20 = vector.shape_cast %19 : vector<17xf32> to vector<17x1xf32>
    %cst_12 = arith.constant 3.200000e+01 : f32
    %21 = vector.broadcast %cst_12 : f32 to vector<17x1xf32>
    %22 = arith.divf %20, %21 : vector<17x1xf32>
    %23 = vector.broadcast %22 : vector<17x1xf32> to vector<17x32xf32>
    %24 = arith.subf %8, %23 : vector<17x32xf32>
    %25 = arith.mulf %24, %24 : vector<17x32xf32>
    %cst_13 = arith.constant dense<0.000000e+00> : vector<17xf32>
    %26 = vector.multi_reduction <add>, %25, %cst_13 [1] : vector<17x32xf32> to vector<17xf32>
    %27 = vector.shape_cast %26 : vector<17xf32> to vector<17x1xf32>
    %cst_14 = arith.constant 3.200000e+01 : f32
    %28 = vector.broadcast %cst_14 : f32 to vector<17x1xf32>
    %29 = arith.divf %27, %28 : vector<17x1xf32>
    %cst_15 = arith.constant 9.99999997E-7 : f32
    %30 = vector.broadcast %cst_15 : f32 to vector<17x1xf32>
    %31 = arith.addf %29, %30 : vector<17x1xf32>
    %32 = math.rsqrt %31 : vector<17x1xf32>
    %33 = vector.broadcast %32 : vector<17x1xf32> to vector<17x32xf32>
    %34 = arith.mulf %24, %33 : vector<17x32xf32>
    %35 = vector.broadcast %11 : vector<1x32xf32> to vector<17x32xf32>
    %36 = arith.mulf %34, %35 : vector<17x32xf32>
    %37 = vector.broadcast %12 : vector<1x32xf32> to vector<17x32xf32>
    %38 = arith.addf %36, %37 : vector<17x32xf32>
    %39 = arith.truncf %38 : vector<17x32xf32> to vector<17x32xbf16>
    %cst_16 = arith.constant 0.000000e+00 : f32
    %40 = vector.broadcast %cst_16 : f32 to vector<17x32xf32>
    %c0_17 = arith.constant 0 : index
    %c0_18 = arith.constant 0 : index
    %c0_19 = arith.constant 0 : index
    %c0_20 = arith.constant 0 : index
    %41 = vector.load %arg4[%c0_17, %c0_18, %c0_19, %c0_20] : memref<2x4x32x8xbf16, #tpu.memory_space<vmem>>, vector<1x1x32x8xbf16>
    %42 = vector.shape_cast %41 : vector<1x1x32x8xbf16> to vector<32x8xbf16>
    %cst_21 = arith.constant dense<0.000000e+00> : vector<17x8xf32>
    %43 = tpu.matmul %39, %42, %cst_21 {dimension_numbers = #tpu.dot_dimension_numbers<[1], [0], [0], [1], [0, 0, 1, 1], [], []>} : vector<17x32xbf16>, vector<32x8xbf16>, vector<17x8xf32> -> vector<17x8xf32>
    %c0_22 = arith.constant 0 : index
    %c0_23 = arith.constant 0 : index
    %c0_24 = arith.constant 0 : index
    %c0_25 = arith.constant 0 : index
    %44 = vector.load %arg7[%c0_22, %c0_23, %c0_24, %c0_25] : memref<2x4x1x8xf32, #tpu.memory_space<vmem>>, vector<1x1x1x8xf32>
    %45 = vector.shape_cast %44 : vector<1x1x1x8xf32> to vector<1x8xf32>
    %46 = vector.broadcast %45 : vector<1x8xf32> to vector<17x8xf32>
    %47 = arith.addf %43, %46 : vector<17x8xf32>
    %c0_26 = arith.constant 0 : index
    %c0_27 = arith.constant 0 : index
    %c0_28 = arith.constant 0 : index
    %c0_29 = arith.constant 0 : index
    %48 = vector.load %arg5[%c0_26, %c0_27, %c0_28, %c0_29] : memref<2x4x32x8xbf16, #tpu.memory_space<vmem>>, vector<1x1x32x8xbf16>
    %49 = vector.shape_cast %48 : vector<1x1x32x8xbf16> to vector<32x8xbf16>
    %cst_30 = arith.constant dense<0.000000e+00> : vector<17x8xf32>
    %50 = tpu.matmul %39, %49, %cst_30 {dimension_numbers = #tpu.dot_dimension_numbers<[1], [0], [0], [1], [0, 0, 1, 1], [], []>} : vector<17x32xbf16>, vector<32x8xbf16>, vector<17x8xf32> -> vector<17x8xf32>
    %c0_31 = arith.constant 0 : index
    %c0_32 = arith.constant 0 : index
    %c0_33 = arith.constant 0 : index
    %c0_34 = arith.constant 0 : index
    %51 = vector.load %arg8[%c0_31, %c0_32, %c0_33, %c0_34] : memref<2x4x1x8xf32, #tpu.memory_space<vmem>>, vector<1x1x1x8xf32>
    %52 = vector.shape_cast %51 : vector<1x1x1x8xf32> to vector<1x8xf32>
    %53 = vector.broadcast %52 : vector<1x8xf32> to vector<17x8xf32>
    %54 = arith.addf %50, %53 : vector<17x8xf32>
    %c0_35 = arith.constant 0 : index
    %c0_36 = arith.constant 0 : index
    %c0_37 = arith.constant 0 : index
    %c0_38 = arith.constant 0 : index
    %55 = vector.load %arg6[%c0_35, %c0_36, %c0_37, %c0_38] : memref<2x4x32x8xbf16, #tpu.memory_space<vmem>>, vector<1x1x32x8xbf16>
    %56 = vector.shape_cast %55 : vector<1x1x32x8xbf16> to vector<32x8xbf16>
    %cst_39 = arith.constant dense<0.000000e+00> : vector<17x8xf32>
    %57 = tpu.matmul %39, %56, %cst_39 {dimension_numbers = #tpu.dot_dimension_numbers<[1], [0], [0], [1], [0, 0, 1, 1], [], []>} : vector<17x32xbf16>, vector<32x8xbf16>, vector<17x8xf32> -> vector<17x8xf32>
    %c0_40 = arith.constant 0 : index
    %c0_41 = arith.constant 0 : index
    %c0_42 = arith.constant 0 : index
    %c0_43 = arith.constant 0 : index
    %58 = vector.load %arg9[%c0_40, %c0_41, %c0_42, %c0_43] : memref<2x4x1x8xf32, #tpu.memory_space<vmem>>, vector<1x1x1x8xf32>
    %59 = vector.shape_cast %58 : vector<1x1x1x8xf32> to vector<1x8xf32>
    %60 = vector.broadcast %59 : vector<1x8xf32> to vector<17x8xf32>
    %61 = arith.addf %57, %60 : vector<17x8xf32>
    %62 = arith.truncf %47 : vector<17x8xf32> to vector<17x8xbf16>
    %63 = arith.truncf %54 : vector<17x8xf32> to vector<17x8xbf16>
    %cst_44 = arith.constant dense<0.000000e+00> : vector<17x17xf32>
    %64 = tpu.matmul %62, %63, %cst_44 {dimension_numbers = #tpu.dot_dimension_numbers<[1], [1], [0], [0], [0, 0, 1, 0], [], []>} : vector<17x8xbf16>, vector<17x8xbf16>, vector<17x17xf32> -> vector<17x17xf32>
    %cst_45 = arith.constant dense<0xFF800000> : vector<17xf32>
    %65 = vector.multi_reduction <maximumf>, %64, %cst_45 [1] : vector<17x17xf32> to vector<17xf32>
    %66 = vector.shape_cast %65 : vector<17xf32> to vector<17x1xf32>
    %67 = vector.broadcast %66 : vector<17x1xf32> to vector<17x17xf32>
    %68 = arith.subf %64, %67 : vector<17x17xf32>
    %69 = math.exp %68 : vector<17x17xf32>
    %cst_46 = arith.constant dense<0.000000e+00> : vector<17xf32>
    %70 = vector.multi_reduction <add>, %69, %cst_46 [1] : vector<17x17xf32> to vector<17xf32>
    %71 = vector.shape_cast %70 : vector<17xf32> to vector<17x1xf32>
    %72 = tpu.reciprocal %71 {approx = true} : vector<17x1xf32> -> vector<17x1xf32>
    %73 = arith.truncf %69 : vector<17x17xf32> to vector<17x17xbf16>
    %74 = arith.truncf %61 : vector<17x8xf32> to vector<17x8xbf16>
    %cst_47 = arith.constant dense<0.000000e+00> : vector<17x8xf32>
    %75 = tpu.matmul %73, %74, %cst_47 {dimension_numbers = #tpu.dot_dimension_numbers<[1], [0], [0], [1], [0, 0, 1, 1], [], []>} : vector<17x17xbf16>, vector<17x8xbf16>, vector<17x8xf32> -> vector<17x8xf32>
    %76 = vector.broadcast %72 : vector<17x1xf32> to vector<17x8xf32>
    %77 = arith.mulf %75, %76 : vector<17x8xf32>
    %78 = arith.truncf %77 : vector<17x8xf32> to vector<17x8xbf16>
    %c0_48 = arith.constant 0 : index
    %c0_49 = arith.constant 0 : index
    %c0_50 = arith.constant 0 : index
    %c0_51 = arith.constant 0 : index
    %79 = vector.load %arg10[%c0_48, %c0_49, %c0_50, %c0_51] : memref<2x4x8x32xbf16, #tpu.memory_space<vmem>>, vector<1x1x8x32xbf16>
    %80 = vector.shape_cast %79 : vector<1x1x8x32xbf16> to vector<8x32xbf16>
    %cst_52 = arith.constant dense<0.000000e+00> : vector<17x32xf32>
    %81 = tpu.matmul %78, %80, %cst_52 {dimension_numbers = #tpu.dot_dimension_numbers<[1], [0], [0], [1], [0, 0, 1, 1], [], []>} : vector<17x8xbf16>, vector<8x32xbf16>, vector<17x32xf32> -> vector<17x32xf32>
    %82 = arith.addf %40, %81 : vector<17x32xf32>
    %c0_53 = arith.constant 0 : index
    %c1_54 = arith.constant 1 : index
    %c0_55 = arith.constant 0 : index
    %c0_56 = arith.constant 0 : index
    %83 = vector.load %arg4[%c0_53, %c1_54, %c0_55, %c0_56] : memref<2x4x32x8xbf16, #tpu.memory_space<vmem>>, vector<1x1x32x8xbf16>
    %84 = vector.shape_cast %83 : vector<1x1x32x8xbf16> to vector<32x8xbf16>
    %cst_57 = arith.constant dense<0.000000e+00> : vector<17x8xf32>
    %85 = tpu.matmul %39, %84, %cst_57 {dimension_numbers = #tpu.dot_dimension_numbers<[1], [0], [0], [1], [0, 0, 1, 1], [], []>} : vector<17x32xbf16>, vector<32x8xbf16>, vector<17x8xf32> -> vector<17x8xf32>
    %c0_58 = arith.constant 0 : index
    %c1_59 = arith.constant 1 : index
    %c0_60 = arith.constant 0 : index
    %c0_61 = arith.constant 0 : index
    %86 = vector.load %arg7[%c0_58, %c1_59, %c0_60, %c0_61] : memref<2x4x1x8xf32, #tpu.memory_space<vmem>>, vector<1x1x1x8xf32>
    %87 = vector.shape_cast %86 : vector<1x1x1x8xf32> to vector<1x8xf32>
    %88 = vector.broadcast %87 : vector<1x8xf32> to vector<17x8xf32>
    %89 = arith.addf %85, %88 : vector<17x8xf32>
    %c0_62 = arith.constant 0 : index
    %c1_63 = arith.constant 1 : index
    %c0_64 = arith.constant 0 : index
    %c0_65 = arith.constant 0 : index
    %90 = vector.load %arg5[%c0_62, %c1_63, %c0_64, %c0_65] : memref<2x4x32x8xbf16, #tpu.memory_space<vmem>>, vector<1x1x32x8xbf16>
    %91 = vector.shape_cast %90 : vector<1x1x32x8xbf16> to vector<32x8xbf16>
    %cst_66 = arith.constant dense<0.000000e+00> : vector<17x8xf32>
    %92 = tpu.matmul %39, %91, %cst_66 {dimension_numbers = #tpu.dot_dimension_numbers<[1], [0], [0], [1], [0, 0, 1, 1], [], []>} : vector<17x32xbf16>, vector<32x8xbf16>, vector<17x8xf32> -> vector<17x8xf32>
    %c0_67 = arith.constant 0 : index
    %c1_68 = arith.constant 1 : index
    %c0_69 = arith.constant 0 : index
    %c0_70 = arith.constant 0 : index
    %93 = vector.load %arg8[%c0_67, %c1_68, %c0_69, %c0_70] : memref<2x4x1x8xf32, #tpu.memory_space<vmem>>, vector<1x1x1x8xf32>
    %94 = vector.shape_cast %93 : vector<1x1x1x8xf32> to vector<1x8xf32>
    %95 = vector.broadcast %94 : vector<1x8xf32> to vector<17x8xf32>
    %96 = arith.addf %92, %95 : vector<17x8xf32>
    %c0_71 = arith.constant 0 : index
    %c1_72 = arith.constant 1 : index
    %c0_73 = arith.constant 0 : index
    %c0_74 = arith.constant 0 : index
    %97 = vector.load %arg6[%c0_71, %c1_72, %c0_73, %c0_74] : memref<2x4x32x8xbf16, #tpu.memory_space<vmem>>, vector<1x1x32x8xbf16>
    %98 = vector.shape_cast %97 : vector<1x1x32x8xbf16> to vector<32x8xbf16>
    %cst_75 = arith.constant dense<0.000000e+00> : vector<17x8xf32>
    %99 = tpu.matmul %39, %98, %cst_75 {dimension_numbers = #tpu.dot_dimension_numbers<[1], [0], [0], [1], [0, 0, 1, 1], [], []>} : vector<17x32xbf16>, vector<32x8xbf16>, vector<17x8xf32> -> vector<17x8xf32>
    %c0_76 = arith.constant 0 : index
    %c1_77 = arith.constant 1 : index
    %c0_78 = arith.constant 0 : index
    %c0_79 = arith.constant 0 : index
    %100 = vector.load %arg9[%c0_76, %c1_77, %c0_78, %c0_79] : memref<2x4x1x8xf32, #tpu.memory_space<vmem>>, vector<1x1x1x8xf32>
    %101 = vector.shape_cast %100 : vector<1x1x1x8xf32> to vector<1x8xf32>
    %102 = vector.broadcast %101 : vector<1x8xf32> to vector<17x8xf32>
    %103 = arith.addf %99, %102 : vector<17x8xf32>
    %104 = arith.truncf %89 : vector<17x8xf32> to vector<17x8xbf16>
    %105 = arith.truncf %96 : vector<17x8xf32> to vector<17x8xbf16>
    %cst_80 = arith.constant dense<0.000000e+00> : vector<17x17xf32>
    %106 = tpu.matmul %104, %105, %cst_80 {dimension_numbers = #tpu.dot_dimension_numbers<[1], [1], [0], [0], [0, 0, 1, 0], [], []>} : vector<17x8xbf16>, vector<17x8xbf16>, vector<17x17xf32> -> vector<17x17xf32>
    %cst_81 = arith.constant dense<0xFF800000> : vector<17xf32>
    %107 = vector.multi_reduction <maximumf>, %106, %cst_81 [1] : vector<17x17xf32> to vector<17xf32>
    %108 = vector.shape_cast %107 : vector<17xf32> to vector<17x1xf32>
    %109 = vector.broadcast %108 : vector<17x1xf32> to vector<17x17xf32>
    %110 = arith.subf %106, %109 : vector<17x17xf32>
    %111 = math.exp %110 : vector<17x17xf32>
    %cst_82 = arith.constant dense<0.000000e+00> : vector<17xf32>
    %112 = vector.multi_reduction <add>, %111, %cst_82 [1] : vector<17x17xf32> to vector<17xf32>
    %113 = vector.shape_cast %112 : vector<17xf32> to vector<17x1xf32>
    %114 = tpu.reciprocal %113 {approx = true} : vector<17x1xf32> -> vector<17x1xf32>
    %115 = arith.truncf %111 : vector<17x17xf32> to vector<17x17xbf16>
    %116 = arith.truncf %103 : vector<17x8xf32> to vector<17x8xbf16>
    %cst_83 = arith.constant dense<0.000000e+00> : vector<17x8xf32>
    %117 = tpu.matmul %115, %116, %cst_83 {dimension_numbers = #tpu.dot_dimension_numbers<[1], [0], [0], [1], [0, 0, 1, 1], [], []>} : vector<17x17xbf16>, vector<17x8xbf16>, vector<17x8xf32> -> vector<17x8xf32>
    %118 = vector.broadcast %114 : vector<17x1xf32> to vector<17x8xf32>
    %119 = arith.mulf %117, %118 : vector<17x8xf32>
    %120 = arith.truncf %119 : vector<17x8xf32> to vector<17x8xbf16>
    %c0_84 = arith.constant 0 : index
    %c1_85 = arith.constant 1 : index
    %c0_86 = arith.constant 0 : index
    %c0_87 = arith.constant 0 : index
    %121 = vector.load %arg10[%c0_84, %c1_85, %c0_86, %c0_87] : memref<2x4x8x32xbf16, #tpu.memory_space<vmem>>, vector<1x1x8x32xbf16>
    %122 = vector.shape_cast %121 : vector<1x1x8x32xbf16> to vector<8x32xbf16>
    %cst_88 = arith.constant dense<0.000000e+00> : vector<17x32xf32>
    %123 = tpu.matmul %120, %122, %cst_88 {dimension_numbers = #tpu.dot_dimension_numbers<[1], [0], [0], [1], [0, 0, 1, 1], [], []>} : vector<17x8xbf16>, vector<8x32xbf16>, vector<17x32xf32> -> vector<17x32xf32>
    %124 = arith.addf %82, %123 : vector<17x32xf32>
    %c0_89 = arith.constant 0 : index
    %c2_90 = arith.constant 2 : index
    %c0_91 = arith.constant 0 : index
    %c0_92 = arith.constant 0 : index
    %125 = vector.load %arg4[%c0_89, %c2_90, %c0_91, %c0_92] : memref<2x4x32x8xbf16, #tpu.memory_space<vmem>>, vector<1x1x32x8xbf16>
    %126 = vector.shape_cast %125 : vector<1x1x32x8xbf16> to vector<32x8xbf16>
    %cst_93 = arith.constant dense<0.000000e+00> : vector<17x8xf32>
    %127 = tpu.matmul %39, %126, %cst_93 {dimension_numbers = #tpu.dot_dimension_numbers<[1], [0], [0], [1], [0, 0, 1, 1], [], []>} : vector<17x32xbf16>, vector<32x8xbf16>, vector<17x8xf32> -> vector<17x8xf32>
    %c0_94 = arith.constant 0 : index
    %c2_95 = arith.constant 2 : index
    %c0_96 = arith.constant 0 : index
    %c0_97 = arith.constant 0 : index
    %128 = vector.load %arg7[%c0_94, %c2_95, %c0_96, %c0_97] : memref<2x4x1x8xf32, #tpu.memory_space<vmem>>, vector<1x1x1x8xf32>
    %129 = vector.shape_cast %128 : vector<1x1x1x8xf32> to vector<1x8xf32>
    %130 = vector.broadcast %129 : vector<1x8xf32> to vector<17x8xf32>
    %131 = arith.addf %127, %130 : vector<17x8xf32>
    %c0_98 = arith.constant 0 : index
    %c2_99 = arith.constant 2 : index
    %c0_100 = arith.constant 0 : index
    %c0_101 = arith.constant 0 : index
    %132 = vector.load %arg5[%c0_98, %c2_99, %c0_100, %c0_101] : memref<2x4x32x8xbf16, #tpu.memory_space<vmem>>, vector<1x1x32x8xbf16>
    %133 = vector.shape_cast %132 : vector<1x1x32x8xbf16> to vector<32x8xbf16>
    %cst_102 = arith.constant dense<0.000000e+00> : vector<17x8xf32>
    %134 = tpu.matmul %39, %133, %cst_102 {dimension_numbers = #tpu.dot_dimension_numbers<[1], [0], [0], [1], [0, 0, 1, 1], [], []>} : vector<17x32xbf16>, vector<32x8xbf16>, vector<17x8xf32> -> vector<17x8xf32>
    %c0_103 = arith.constant 0 : index
    %c2_104 = arith.constant 2 : index
    %c0_105 = arith.constant 0 : index
    %c0_106 = arith.constant 0 : index
    %135 = vector.load %arg8[%c0_103, %c2_104, %c0_105, %c0_106] : memref<2x4x1x8xf32, #tpu.memory_space<vmem>>, vector<1x1x1x8xf32>
    %136 = vector.shape_cast %135 : vector<1x1x1x8xf32> to vector<1x8xf32>
    %137 = vector.broadcast %136 : vector<1x8xf32> to vector<17x8xf32>
    %138 = arith.addf %134, %137 : vector<17x8xf32>
    %c0_107 = arith.constant 0 : index
    %c2_108 = arith.constant 2 : index
    %c0_109 = arith.constant 0 : index
    %c0_110 = arith.constant 0 : index
    %139 = vector.load %arg6[%c0_107, %c2_108, %c0_109, %c0_110] : memref<2x4x32x8xbf16, #tpu.memory_space<vmem>>, vector<1x1x32x8xbf16>
    %140 = vector.shape_cast %139 : vector<1x1x32x8xbf16> to vector<32x8xbf16>
    %cst_111 = arith.constant dense<0.000000e+00> : vector<17x8xf32>
    %141 = tpu.matmul %39, %140, %cst_111 {dimension_numbers = #tpu.dot_dimension_numbers<[1], [0], [0], [1], [0, 0, 1, 1], [], []>} : vector<17x32xbf16>, vector<32x8xbf16>, vector<17x8xf32> -> vector<17x8xf32>
    %c0_112 = arith.constant 0 : index
    %c2_113 = arith.constant 2 : index
    %c0_114 = arith.constant 0 : index
    %c0_115 = arith.constant 0 : index
    %142 = vector.load %arg9[%c0_112, %c2_113, %c0_114, %c0_115] : memref<2x4x1x8xf32, #tpu.memory_space<vmem>>, vector<1x1x1x8xf32>
    %143 = vector.shape_cast %142 : vector<1x1x1x8xf32> to vector<1x8xf32>
    %144 = vector.broadcast %143 : vector<1x8xf32> to vector<17x8xf32>
    %145 = arith.addf %141, %144 : vector<17x8xf32>
    %146 = arith.truncf %131 : vector<17x8xf32> to vector<17x8xbf16>
    %147 = arith.truncf %138 : vector<17x8xf32> to vector<17x8xbf16>
    %cst_116 = arith.constant dense<0.000000e+00> : vector<17x17xf32>
    %148 = tpu.matmul %146, %147, %cst_116 {dimension_numbers = #tpu.dot_dimension_numbers<[1], [1], [0], [0], [0, 0, 1, 0], [], []>} : vector<17x8xbf16>, vector<17x8xbf16>, vector<17x17xf32> -> vector<17x17xf32>
    %cst_117 = arith.constant dense<0xFF800000> : vector<17xf32>
    %149 = vector.multi_reduction <maximumf>, %148, %cst_117 [1] : vector<17x17xf32> to vector<17xf32>
    %150 = vector.shape_cast %149 : vector<17xf32> to vector<17x1xf32>
    %151 = vector.broadcast %150 : vector<17x1xf32> to vector<17x17xf32>
    %152 = arith.subf %148, %151 : vector<17x17xf32>
    %153 = math.exp %152 : vector<17x17xf32>
    %cst_118 = arith.constant dense<0.000000e+00> : vector<17xf32>
    %154 = vector.multi_reduction <add>, %153, %cst_118 [1] : vector<17x17xf32> to vector<17xf32>
    %155 = vector.shape_cast %154 : vector<17xf32> to vector<17x1xf32>
    %156 = tpu.reciprocal %155 {approx = true} : vector<17x1xf32> -> vector<17x1xf32>
    %157 = arith.truncf %153 : vector<17x17xf32> to vector<17x17xbf16>
    %158 = arith.truncf %145 : vector<17x8xf32> to vector<17x8xbf16>
    %cst_119 = arith.constant dense<0.000000e+00> : vector<17x8xf32>
    %159 = tpu.matmul %157, %158, %cst_119 {dimension_numbers = #tpu.dot_dimension_numbers<[1], [0], [0], [1], [0, 0, 1, 1], [], []>} : vector<17x17xbf16>, vector<17x8xbf16>, vector<17x8xf32> -> vector<17x8xf32>
    %160 = vector.broadcast %156 : vector<17x1xf32> to vector<17x8xf32>
    %161 = arith.mulf %159, %160 : vector<17x8xf32>
    %162 = arith.truncf %161 : vector<17x8xf32> to vector<17x8xbf16>
    %c0_120 = arith.constant 0 : index
    %c2_121 = arith.constant 2 : index
    %c0_122 = arith.constant 0 : index
    %c0_123 = arith.constant 0 : index
    %163 = vector.load %arg10[%c0_120, %c2_121, %c0_122, %c0_123] : memref<2x4x8x32xbf16, #tpu.memory_space<vmem>>, vector<1x1x8x32xbf16>
    %164 = vector.shape_cast %163 : vector<1x1x8x32xbf16> to vector<8x32xbf16>
    %cst_124 = arith.constant dense<0.000000e+00> : vector<17x32xf32>
    %165 = tpu.matmul %162, %164, %cst_124 {dimension_numbers = #tpu.dot_dimension_numbers<[1], [0], [0], [1], [0, 0, 1, 1], [], []>} : vector<17x8xbf16>, vector<8x32xbf16>, vector<17x32xf32> -> vector<17x32xf32>
    %166 = arith.addf %124, %165 : vector<17x32xf32>
    %c0_125 = arith.constant 0 : index
    %c3 = arith.constant 3 : index
    %c0_126 = arith.constant 0 : index
    %c0_127 = arith.constant 0 : index
    %167 = vector.load %arg4[%c0_125, %c3, %c0_126, %c0_127] : memref<2x4x32x8xbf16, #tpu.memory_space<vmem>>, vector<1x1x32x8xbf16>
    %168 = vector.shape_cast %167 : vector<1x1x32x8xbf16> to vector<32x8xbf16>
    %cst_128 = arith.constant dense<0.000000e+00> : vector<17x8xf32>
    %169 = tpu.matmul %39, %168, %cst_128 {dimension_numbers = #tpu.dot_dimension_numbers<[1], [0], [0], [1], [0, 0, 1, 1], [], []>} : vector<17x32xbf16>, vector<32x8xbf16>, vector<17x8xf32> -> vector<17x8xf32>
    %c0_129 = arith.constant 0 : index
    %c3_130 = arith.constant 3 : index
    %c0_131 = arith.constant 0 : index
    %c0_132 = arith.constant 0 : index
    %170 = vector.load %arg7[%c0_129, %c3_130, %c0_131, %c0_132] : memref<2x4x1x8xf32, #tpu.memory_space<vmem>>, vector<1x1x1x8xf32>
    %171 = vector.shape_cast %170 : vector<1x1x1x8xf32> to vector<1x8xf32>
    %172 = vector.broadcast %171 : vector<1x8xf32> to vector<17x8xf32>
    %173 = arith.addf %169, %172 : vector<17x8xf32>
    %c0_133 = arith.constant 0 : index
    %c3_134 = arith.constant 3 : index
    %c0_135 = arith.constant 0 : index
    %c0_136 = arith.constant 0 : index
    %174 = vector.load %arg5[%c0_133, %c3_134, %c0_135, %c0_136] : memref<2x4x32x8xbf16, #tpu.memory_space<vmem>>, vector<1x1x32x8xbf16>
    %175 = vector.shape_cast %174 : vector<1x1x32x8xbf16> to vector<32x8xbf16>
    %cst_137 = arith.constant dense<0.000000e+00> : vector<17x8xf32>
    %176 = tpu.matmul %39, %175, %cst_137 {dimension_numbers = #tpu.dot_dimension_numbers<[1], [0], [0], [1], [0, 0, 1, 1], [], []>} : vector<17x32xbf16>, vector<32x8xbf16>, vector<17x8xf32> -> vector<17x8xf32>
    %c0_138 = arith.constant 0 : index
    %c3_139 = arith.constant 3 : index
    %c0_140 = arith.constant 0 : index
    %c0_141 = arith.constant 0 : index
    %177 = vector.load %arg8[%c0_138, %c3_139, %c0_140, %c0_141] : memref<2x4x1x8xf32, #tpu.memory_space<vmem>>, vector<1x1x1x8xf32>
    %178 = vector.shape_cast %177 : vector<1x1x1x8xf32> to vector<1x8xf32>
    %179 = vector.broadcast %178 : vector<1x8xf32> to vector<17x8xf32>
    %180 = arith.addf %176, %179 : vector<17x8xf32>
    %c0_142 = arith.constant 0 : index
    %c3_143 = arith.constant 3 : index
    %c0_144 = arith.constant 0 : index
    %c0_145 = arith.constant 0 : index
    %181 = vector.load %arg6[%c0_142, %c3_143, %c0_144, %c0_145] : memref<2x4x32x8xbf16, #tpu.memory_space<vmem>>, vector<1x1x32x8xbf16>
    %182 = vector.shape_cast %181 : vector<1x1x32x8xbf16> to vector<32x8xbf16>
    %cst_146 = arith.constant dense<0.000000e+00> : vector<17x8xf32>
    %183 = tpu.matmul %39, %182, %cst_146 {dimension_numbers = #tpu.dot_dimension_numbers<[1], [0], [0], [1], [0, 0, 1, 1], [], []>} : vector<17x32xbf16>, vector<32x8xbf16>, vector<17x8xf32> -> vector<17x8xf32>
    %c0_147 = arith.constant 0 : index
    %c3_148 = arith.constant 3 : index
    %c0_149 = arith.constant 0 : index
    %c0_150 = arith.constant 0 : index
    %184 = vector.load %arg9[%c0_147, %c3_148, %c0_149, %c0_150] : memref<2x4x1x8xf32, #tpu.memory_space<vmem>>, vector<1x1x1x8xf32>
    %185 = vector.shape_cast %184 : vector<1x1x1x8xf32> to vector<1x8xf32>
    %186 = vector.broadcast %185 : vector<1x8xf32> to vector<17x8xf32>
    %187 = arith.addf %183, %186 : vector<17x8xf32>
    %188 = arith.truncf %173 : vector<17x8xf32> to vector<17x8xbf16>
    %189 = arith.truncf %180 : vector<17x8xf32> to vector<17x8xbf16>
    %cst_151 = arith.constant dense<0.000000e+00> : vector<17x17xf32>
    %190 = tpu.matmul %188, %189, %cst_151 {dimension_numbers = #tpu.dot_dimension_numbers<[1], [1], [0], [0], [0, 0, 1, 0], [], []>} : vector<17x8xbf16>, vector<17x8xbf16>, vector<17x17xf32> -> vector<17x17xf32>
    %cst_152 = arith.constant dense<0xFF800000> : vector<17xf32>
    %191 = vector.multi_reduction <maximumf>, %190, %cst_152 [1] : vector<17x17xf32> to vector<17xf32>
    %192 = vector.shape_cast %191 : vector<17xf32> to vector<17x1xf32>
    %193 = vector.broadcast %192 : vector<17x1xf32> to vector<17x17xf32>
    %194 = arith.subf %190, %193 : vector<17x17xf32>
    %195 = math.exp %194 : vector<17x17xf32>
    %cst_153 = arith.constant dense<0.000000e+00> : vector<17xf32>
    %196 = vector.multi_reduction <add>, %195, %cst_153 [1] : vector<17x17xf32> to vector<17xf32>
    %197 = vector.shape_cast %196 : vector<17xf32> to vector<17x1xf32>
    %198 = tpu.reciprocal %197 {approx = true} : vector<17x1xf32> -> vector<17x1xf32>
    %199 = arith.truncf %195 : vector<17x17xf32> to vector<17x17xbf16>
    %200 = arith.truncf %187 : vector<17x8xf32> to vector<17x8xbf16>
    %cst_154 = arith.constant dense<0.000000e+00> : vector<17x8xf32>
    %201 = tpu.matmul %199, %200, %cst_154 {dimension_numbers = #tpu.dot_dimension_numbers<[1], [0], [0], [1], [0, 0, 1, 1], [], []>} : vector<17x17xbf16>, vector<17x8xbf16>, vector<17x8xf32> -> vector<17x8xf32>
    %202 = vector.broadcast %198 : vector<17x1xf32> to vector<17x8xf32>
    %203 = arith.mulf %201, %202 : vector<17x8xf32>
    %204 = arith.truncf %203 : vector<17x8xf32> to vector<17x8xbf16>
    %c0_155 = arith.constant 0 : index
    %c3_156 = arith.constant 3 : index
    %c0_157 = arith.constant 0 : index
    %c0_158 = arith.constant 0 : index
    %205 = vector.load %arg10[%c0_155, %c3_156, %c0_157, %c0_158] : memref<2x4x8x32xbf16, #tpu.memory_space<vmem>>, vector<1x1x8x32xbf16>
    %206 = vector.shape_cast %205 : vector<1x1x8x32xbf16> to vector<8x32xbf16>
    %cst_159 = arith.constant dense<0.000000e+00> : vector<17x32xf32>
    %207 = tpu.matmul %204, %206, %cst_159 {dimension_numbers = #tpu.dot_dimension_numbers<[1], [0], [0], [1], [0, 0, 1, 1], [], []>} : vector<17x8xbf16>, vector<8x32xbf16>, vector<17x32xf32> -> vector<17x32xf32>
    %208 = arith.addf %166, %207 : vector<17x32xf32>
    %209 = vector.broadcast %13 : vector<1x32xf32> to vector<17x32xf32>
    %210 = arith.addf %208, %209 : vector<17x32xf32>
    %211 = vector.broadcast %14 : vector<1x32xf32> to vector<17x32xf32>
    %212 = arith.mulf %211, %210 : vector<17x32xf32>
    %213 = arith.addf %8, %212 : vector<17x32xf32>
    %cst_160 = arith.constant dense<0.000000e+00> : vector<17xf32>
    %214 = vector.multi_reduction <add>, %213, %cst_160 [1] : vector<17x32xf32> to vector<17xf32>
    %215 = vector.shape_cast %214 : vector<17xf32> to vector<17x1xf32>
    %cst_161 = arith.constant 3.200000e+01 : f32
    %216 = vector.broadcast %cst_161 : f32 to vector<17x1xf32>
    %217 = arith.divf %215, %216 : vector<17x1xf32>
    %218 = vector.broadcast %217 : vector<17x1xf32> to vector<17x32xf32>
    %219 = arith.subf %213, %218 : vector<17x32xf32>
    %220 = arith.mulf %219, %219 : vector<17x32xf32>
    %cst_162 = arith.constant dense<0.000000e+00> : vector<17xf32>
    %221 = vector.multi_reduction <add>, %220, %cst_162 [1] : vector<17x32xf32> to vector<17xf32>
    %222 = vector.shape_cast %221 : vector<17xf32> to vector<17x1xf32>
    %cst_163 = arith.constant 3.200000e+01 : f32
    %223 = vector.broadcast %cst_163 : f32 to vector<17x1xf32>
    %224 = arith.divf %222, %223 : vector<17x1xf32>
    %cst_164 = arith.constant 9.99999997E-7 : f32
    %225 = vector.broadcast %cst_164 : f32 to vector<17x1xf32>
    %226 = arith.addf %224, %225 : vector<17x1xf32>
    %227 = math.rsqrt %226 : vector<17x1xf32>
    %228 = vector.broadcast %227 : vector<17x1xf32> to vector<17x32xf32>
    %229 = arith.mulf %219, %228 : vector<17x32xf32>
    %230 = vector.broadcast %15 : vector<1x32xf32> to vector<17x32xf32>
    %231 = arith.mulf %229, %230 : vector<17x32xf32>
    %232 = vector.broadcast %16 : vector<1x32xf32> to vector<17x32xf32>
    %233 = arith.addf %231, %232 : vector<17x32xf32>
    %234 = arith.truncf %233 : vector<17x32xf32> to vector<17x32xbf16>
    %c0_165 = arith.constant 0 : index
    %c0_166 = arith.constant 0 : index
    %c0_167 = arith.constant 0 : index
    %235 = vector.load %arg11[%c0_165, %c0_166, %c0_167] : memref<2x32x128xbf16, #tpu.memory_space<vmem>>, vector<1x32x128xbf16>
    %236 = vector.shape_cast %235 : vector<1x32x128xbf16> to vector<32x128xbf16>
    %cst_168 = arith.constant dense<0.000000e+00> : vector<17x128xf32>
    %237 = tpu.matmul %234, %236, %cst_168 {dimension_numbers = #tpu.dot_dimension_numbers<[1], [0], [0], [1], [0, 0, 1, 1], [], []>} : vector<17x32xbf16>, vector<32x128xbf16>, vector<17x128xf32> -> vector<17x128xf32>
    %c0_169 = arith.constant 0 : index
    %c0_170 = arith.constant 0 : index
    %c0_171 = arith.constant 0 : index
    %238 = vector.load %arg12[%c0_169, %c0_170, %c0_171] : memref<2x1x128xf32, #tpu.memory_space<vmem>>, vector<1x1x128xf32>
    %239 = vector.shape_cast %238 : vector<1x1x128xf32> to vector<1x128xf32>
    %240 = vector.broadcast %239 : vector<1x128xf32> to vector<17x128xf32>
    %241 = arith.addf %237, %240 : vector<17x128xf32>
    %cst_172 = arith.constant 5.000000e-01 : f32
    %242 = vector.broadcast %cst_172 : f32 to vector<17x128xf32>
    %243 = arith.mulf %242, %241 : vector<17x128xf32>
    %cst_173 = arith.constant 4.471500e-02 : f32
    %244 = vector.broadcast %cst_173 : f32 to vector<17x128xf32>
    %245 = arith.mulf %244, %241 : vector<17x128xf32>
    %246 = arith.mulf %245, %241 : vector<17x128xf32>
    %247 = arith.mulf %246, %241 : vector<17x128xf32>
    %248 = arith.addf %241, %247 : vector<17x128xf32>
    %cst_174 = arith.constant 0.797884583 : f32
    %249 = vector.broadcast %cst_174 : f32 to vector<17x128xf32>
    %250 = arith.mulf %249, %248 : vector<17x128xf32>
    %251 = math.tanh %250 : vector<17x128xf32>
    %cst_175 = arith.constant 1.000000e+00 : f32
    %252 = vector.broadcast %cst_175 : f32 to vector<17x128xf32>
    %253 = arith.addf %252, %251 : vector<17x128xf32>
    %254 = arith.mulf %243, %253 : vector<17x128xf32>
    %255 = arith.truncf %254 : vector<17x128xf32> to vector<17x128xbf16>
    %c0_176 = arith.constant 0 : index
    %c0_177 = arith.constant 0 : index
    %c0_178 = arith.constant 0 : index
    %256 = vector.load %arg13[%c0_176, %c0_177, %c0_178] : memref<2x128x32xbf16, #tpu.memory_space<vmem>>, vector<1x128x32xbf16>
    %257 = vector.shape_cast %256 : vector<1x128x32xbf16> to vector<128x32xbf16>
    %cst_179 = arith.constant dense<0.000000e+00> : vector<17x32xf32>
    %258 = tpu.matmul %255, %257, %cst_179 {dimension_numbers = #tpu.dot_dimension_numbers<[1], [0], [0], [1], [0, 0, 1, 1], [], []>} : vector<17x128xbf16>, vector<128x32xbf16>, vector<17x32xf32> -> vector<17x32xf32>
    %259 = vector.broadcast %17 : vector<1x32xf32> to vector<17x32xf32>
    %260 = arith.addf %258, %259 : vector<17x32xf32>
    %261 = vector.broadcast %18 : vector<1x32xf32> to vector<17x32xf32>
    %262 = arith.mulf %261, %260 : vector<17x32xf32>
    %263 = arith.addf %213, %262 : vector<17x32xf32>
    %c1_180 = arith.constant 1 : index
    %c0_181 = arith.constant 0 : index
    %c0_182 = arith.constant 0 : index
    %264 = vector.load %arg14[%c1_180, %c0_181, %c0_182] : memref<2x8x32xf32, #tpu.memory_space<vmem>>, vector<1x8x32xf32>
    %265 = vector.shape_cast %264 : vector<1x8x32xf32> to vector<8x32xf32>
    %266 = vector.extract_strided_slice %265 {offsets = [0, 0], sizes = [1, 32], strides = [1, 1]} : vector<8x32xf32> to vector<1x32xf32>
    %267 = vector.extract_strided_slice %265 {offsets = [1, 0], sizes = [1, 32], strides = [1, 1]} : vector<8x32xf32> to vector<1x32xf32>
    %268 = vector.extract_strided_slice %265 {offsets = [2, 0], sizes = [1, 32], strides = [1, 1]} : vector<8x32xf32> to vector<1x32xf32>
    %269 = vector.extract_strided_slice %265 {offsets = [3, 0], sizes = [1, 32], strides = [1, 1]} : vector<8x32xf32> to vector<1x32xf32>
    %270 = vector.extract_strided_slice %265 {offsets = [4, 0], sizes = [1, 32], strides = [1, 1]} : vector<8x32xf32> to vector<1x32xf32>
    %271 = vector.extract_strided_slice %265 {offsets = [5, 0], sizes = [1, 32], strides = [1, 1]} : vector<8x32xf32> to vector<1x32xf32>
    %272 = vector.extract_strided_slice %265 {offsets = [6, 0], sizes = [1, 32], strides = [1, 1]} : vector<8x32xf32> to vector<1x32xf32>
    %273 = vector.extract_strided_slice %265 {offsets = [7, 0], sizes = [1, 32], strides = [1, 1]} : vector<8x32xf32> to vector<1x32xf32>
    %cst_183 = arith.constant dense<0.000000e+00> : vector<17xf32>
    %274 = vector.multi_reduction <add>, %263, %cst_183 [1] : vector<17x32xf32> to vector<17xf32>
    %275 = vector.shape_cast %274 : vector<17xf32> to vector<17x1xf32>
    %cst_184 = arith.constant 3.200000e+01 : f32
    %276 = vector.broadcast %cst_184 : f32 to vector<17x1xf32>
    %277 = arith.divf %275, %276 : vector<17x1xf32>
    %278 = vector.broadcast %277 : vector<17x1xf32> to vector<17x32xf32>
    %279 = arith.subf %263, %278 : vector<17x32xf32>
    %280 = arith.mulf %279, %279 : vector<17x32xf32>
    %cst_185 = arith.constant dense<0.000000e+00> : vector<17xf32>
    %281 = vector.multi_reduction <add>, %280, %cst_185 [1] : vector<17x32xf32> to vector<17xf32>
    %282 = vector.shape_cast %281 : vector<17xf32> to vector<17x1xf32>
    %cst_186 = arith.constant 3.200000e+01 : f32
    %283 = vector.broadcast %cst_186 : f32 to vector<17x1xf32>
    %284 = arith.divf %282, %283 : vector<17x1xf32>
    %cst_187 = arith.constant 9.99999997E-7 : f32
    %285 = vector.broadcast %cst_187 : f32 to vector<17x1xf32>
    %286 = arith.addf %284, %285 : vector<17x1xf32>
    %287 = math.rsqrt %286 : vector<17x1xf32>
    %288 = vector.broadcast %287 : vector<17x1xf32> to vector<17x32xf32>
    %289 = arith.mulf %279, %288 : vector<17x32xf32>
    %290 = vector.broadcast %266 : vector<1x32xf32> to vector<17x32xf32>
    %291 = arith.mulf %289, %290 : vector<17x32xf32>
    %292 = vector.broadcast %267 : vector<1x32xf32> to vector<17x32xf32>
    %293 = arith.addf %291, %292 : vector<17x32xf32>
    %294 = arith.truncf %293 : vector<17x32xf32> to vector<17x32xbf16>
    %cst_188 = arith.constant 0.000000e+00 : f32
    %295 = vector.broadcast %cst_188 : f32 to vector<17x32xf32>
    %c1_189 = arith.constant 1 : index
    %c0_190 = arith.constant 0 : index
    %c0_191 = arith.constant 0 : index
    %c0_192 = arith.constant 0 : index
    %296 = vector.load %arg4[%c1_189, %c0_190, %c0_191, %c0_192] : memref<2x4x32x8xbf16, #tpu.memory_space<vmem>>, vector<1x1x32x8xbf16>
    %297 = vector.shape_cast %296 : vector<1x1x32x8xbf16> to vector<32x8xbf16>
    %cst_193 = arith.constant dense<0.000000e+00> : vector<17x8xf32>
    %298 = tpu.matmul %294, %297, %cst_193 {dimension_numbers = #tpu.dot_dimension_numbers<[1], [0], [0], [1], [0, 0, 1, 1], [], []>} : vector<17x32xbf16>, vector<32x8xbf16>, vector<17x8xf32> -> vector<17x8xf32>
    %c1_194 = arith.constant 1 : index
    %c0_195 = arith.constant 0 : index
    %c0_196 = arith.constant 0 : index
    %c0_197 = arith.constant 0 : index
    %299 = vector.load %arg7[%c1_194, %c0_195, %c0_196, %c0_197] : memref<2x4x1x8xf32, #tpu.memory_space<vmem>>, vector<1x1x1x8xf32>
    %300 = vector.shape_cast %299 : vector<1x1x1x8xf32> to vector<1x8xf32>
    %301 = vector.broadcast %300 : vector<1x8xf32> to vector<17x8xf32>
    %302 = arith.addf %298, %301 : vector<17x8xf32>
    %c1_198 = arith.constant 1 : index
    %c0_199 = arith.constant 0 : index
    %c0_200 = arith.constant 0 : index
    %c0_201 = arith.constant 0 : index
    %303 = vector.load %arg5[%c1_198, %c0_199, %c0_200, %c0_201] : memref<2x4x32x8xbf16, #tpu.memory_space<vmem>>, vector<1x1x32x8xbf16>
    %304 = vector.shape_cast %303 : vector<1x1x32x8xbf16> to vector<32x8xbf16>
    %cst_202 = arith.constant dense<0.000000e+00> : vector<17x8xf32>
    %305 = tpu.matmul %294, %304, %cst_202 {dimension_numbers = #tpu.dot_dimension_numbers<[1], [0], [0], [1], [0, 0, 1, 1], [], []>} : vector<17x32xbf16>, vector<32x8xbf16>, vector<17x8xf32> -> vector<17x8xf32>
    %c1_203 = arith.constant 1 : index
    %c0_204 = arith.constant 0 : index
    %c0_205 = arith.constant 0 : index
    %c0_206 = arith.constant 0 : index
    %306 = vector.load %arg8[%c1_203, %c0_204, %c0_205, %c0_206] : memref<2x4x1x8xf32, #tpu.memory_space<vmem>>, vector<1x1x1x8xf32>
    %307 = vector.shape_cast %306 : vector<1x1x1x8xf32> to vector<1x8xf32>
    %308 = vector.broadcast %307 : vector<1x8xf32> to vector<17x8xf32>
    %309 = arith.addf %305, %308 : vector<17x8xf32>
    %c1_207 = arith.constant 1 : index
    %c0_208 = arith.constant 0 : index
    %c0_209 = arith.constant 0 : index
    %c0_210 = arith.constant 0 : index
    %310 = vector.load %arg6[%c1_207, %c0_208, %c0_209, %c0_210] : memref<2x4x32x8xbf16, #tpu.memory_space<vmem>>, vector<1x1x32x8xbf16>
    %311 = vector.shape_cast %310 : vector<1x1x32x8xbf16> to vector<32x8xbf16>
    %cst_211 = arith.constant dense<0.000000e+00> : vector<17x8xf32>
    %312 = tpu.matmul %294, %311, %cst_211 {dimension_numbers = #tpu.dot_dimension_numbers<[1], [0], [0], [1], [0, 0, 1, 1], [], []>} : vector<17x32xbf16>, vector<32x8xbf16>, vector<17x8xf32> -> vector<17x8xf32>
    %c1_212 = arith.constant 1 : index
    %c0_213 = arith.constant 0 : index
    %c0_214 = arith.constant 0 : index
    %c0_215 = arith.constant 0 : index
    %313 = vector.load %arg9[%c1_212, %c0_213, %c0_214, %c0_215] : memref<2x4x1x8xf32, #tpu.memory_space<vmem>>, vector<1x1x1x8xf32>
    %314 = vector.shape_cast %313 : vector<1x1x1x8xf32> to vector<1x8xf32>
    %315 = vector.broadcast %314 : vector<1x8xf32> to vector<17x8xf32>
    %316 = arith.addf %312, %315 : vector<17x8xf32>
    %317 = arith.truncf %302 : vector<17x8xf32> to vector<17x8xbf16>
    %318 = arith.truncf %309 : vector<17x8xf32> to vector<17x8xbf16>
    %cst_216 = arith.constant dense<0.000000e+00> : vector<17x17xf32>
    %319 = tpu.matmul %317, %318, %cst_216 {dimension_numbers = #tpu.dot_dimension_numbers<[1], [1], [0], [0], [0, 0, 1, 0], [], []>} : vector<17x8xbf16>, vector<17x8xbf16>, vector<17x17xf32> -> vector<17x17xf32>
    %cst_217 = arith.constant dense<0xFF800000> : vector<17xf32>
    %320 = vector.multi_reduction <maximumf>, %319, %cst_217 [1] : vector<17x17xf32> to vector<17xf32>
    %321 = vector.shape_cast %320 : vector<17xf32> to vector<17x1xf32>
    %322 = vector.broadcast %321 : vector<17x1xf32> to vector<17x17xf32>
    %323 = arith.subf %319, %322 : vector<17x17xf32>
    %324 = math.exp %323 : vector<17x17xf32>
    %cst_218 = arith.constant dense<0.000000e+00> : vector<17xf32>
    %325 = vector.multi_reduction <add>, %324, %cst_218 [1] : vector<17x17xf32> to vector<17xf32>
    %326 = vector.shape_cast %325 : vector<17xf32> to vector<17x1xf32>
    %327 = tpu.reciprocal %326 {approx = true} : vector<17x1xf32> -> vector<17x1xf32>
    %328 = arith.truncf %324 : vector<17x17xf32> to vector<17x17xbf16>
    %329 = arith.truncf %316 : vector<17x8xf32> to vector<17x8xbf16>
    %cst_219 = arith.constant dense<0.000000e+00> : vector<17x8xf32>
    %330 = tpu.matmul %328, %329, %cst_219 {dimension_numbers = #tpu.dot_dimension_numbers<[1], [0], [0], [1], [0, 0, 1, 1], [], []>} : vector<17x17xbf16>, vector<17x8xbf16>, vector<17x8xf32> -> vector<17x8xf32>
    %331 = vector.broadcast %327 : vector<17x1xf32> to vector<17x8xf32>
    %332 = arith.mulf %330, %331 : vector<17x8xf32>
    %333 = arith.truncf %332 : vector<17x8xf32> to vector<17x8xbf16>
    %c1_220 = arith.constant 1 : index
    %c0_221 = arith.constant 0 : index
    %c0_222 = arith.constant 0 : index
    %c0_223 = arith.constant 0 : index
    %334 = vector.load %arg10[%c1_220, %c0_221, %c0_222, %c0_223] : memref<2x4x8x32xbf16, #tpu.memory_space<vmem>>, vector<1x1x8x32xbf16>
    %335 = vector.shape_cast %334 : vector<1x1x8x32xbf16> to vector<8x32xbf16>
    %cst_224 = arith.constant dense<0.000000e+00> : vector<17x32xf32>
    %336 = tpu.matmul %333, %335, %cst_224 {dimension_numbers = #tpu.dot_dimension_numbers<[1], [0], [0], [1], [0, 0, 1, 1], [], []>} : vector<17x8xbf16>, vector<8x32xbf16>, vector<17x32xf32> -> vector<17x32xf32>
    %337 = arith.addf %295, %336 : vector<17x32xf32>
    %c1_225 = arith.constant 1 : index
    %c1_226 = arith.constant 1 : index
    %c0_227 = arith.constant 0 : index
    %c0_228 = arith.constant 0 : index
    %338 = vector.load %arg4[%c1_225, %c1_226, %c0_227, %c0_228] : memref<2x4x32x8xbf16, #tpu.memory_space<vmem>>, vector<1x1x32x8xbf16>
    %339 = vector.shape_cast %338 : vector<1x1x32x8xbf16> to vector<32x8xbf16>
    %cst_229 = arith.constant dense<0.000000e+00> : vector<17x8xf32>
    %340 = tpu.matmul %294, %339, %cst_229 {dimension_numbers = #tpu.dot_dimension_numbers<[1], [0], [0], [1], [0, 0, 1, 1], [], []>} : vector<17x32xbf16>, vector<32x8xbf16>, vector<17x8xf32> -> vector<17x8xf32>
    %c1_230 = arith.constant 1 : index
    %c1_231 = arith.constant 1 : index
    %c0_232 = arith.constant 0 : index
    %c0_233 = arith.constant 0 : index
    %341 = vector.load %arg7[%c1_230, %c1_231, %c0_232, %c0_233] : memref<2x4x1x8xf32, #tpu.memory_space<vmem>>, vector<1x1x1x8xf32>
    %342 = vector.shape_cast %341 : vector<1x1x1x8xf32> to vector<1x8xf32>
    %343 = vector.broadcast %342 : vector<1x8xf32> to vector<17x8xf32>
    %344 = arith.addf %340, %343 : vector<17x8xf32>
    %c1_234 = arith.constant 1 : index
    %c1_235 = arith.constant 1 : index
    %c0_236 = arith.constant 0 : index
    %c0_237 = arith.constant 0 : index
    %345 = vector.load %arg5[%c1_234, %c1_235, %c0_236, %c0_237] : memref<2x4x32x8xbf16, #tpu.memory_space<vmem>>, vector<1x1x32x8xbf16>
    %346 = vector.shape_cast %345 : vector<1x1x32x8xbf16> to vector<32x8xbf16>
    %cst_238 = arith.constant dense<0.000000e+00> : vector<17x8xf32>
    %347 = tpu.matmul %294, %346, %cst_238 {dimension_numbers = #tpu.dot_dimension_numbers<[1], [0], [0], [1], [0, 0, 1, 1], [], []>} : vector<17x32xbf16>, vector<32x8xbf16>, vector<17x8xf32> -> vector<17x8xf32>
    %c1_239 = arith.constant 1 : index
    %c1_240 = arith.constant 1 : index
    %c0_241 = arith.constant 0 : index
    %c0_242 = arith.constant 0 : index
    %348 = vector.load %arg8[%c1_239, %c1_240, %c0_241, %c0_242] : memref<2x4x1x8xf32, #tpu.memory_space<vmem>>, vector<1x1x1x8xf32>
    %349 = vector.shape_cast %348 : vector<1x1x1x8xf32> to vector<1x8xf32>
    %350 = vector.broadcast %349 : vector<1x8xf32> to vector<17x8xf32>
    %351 = arith.addf %347, %350 : vector<17x8xf32>
    %c1_243 = arith.constant 1 : index
    %c1_244 = arith.constant 1 : index
    %c0_245 = arith.constant 0 : index
    %c0_246 = arith.constant 0 : index
    %352 = vector.load %arg6[%c1_243, %c1_244, %c0_245, %c0_246] : memref<2x4x32x8xbf16, #tpu.memory_space<vmem>>, vector<1x1x32x8xbf16>
    %353 = vector.shape_cast %352 : vector<1x1x32x8xbf16> to vector<32x8xbf16>
    %cst_247 = arith.constant dense<0.000000e+00> : vector<17x8xf32>
    %354 = tpu.matmul %294, %353, %cst_247 {dimension_numbers = #tpu.dot_dimension_numbers<[1], [0], [0], [1], [0, 0, 1, 1], [], []>} : vector<17x32xbf16>, vector<32x8xbf16>, vector<17x8xf32> -> vector<17x8xf32>
    %c1_248 = arith.constant 1 : index
    %c1_249 = arith.constant 1 : index
    %c0_250 = arith.constant 0 : index
    %c0_251 = arith.constant 0 : index
    %355 = vector.load %arg9[%c1_248, %c1_249, %c0_250, %c0_251] : memref<2x4x1x8xf32, #tpu.memory_space<vmem>>, vector<1x1x1x8xf32>
    %356 = vector.shape_cast %355 : vector<1x1x1x8xf32> to vector<1x8xf32>
    %357 = vector.broadcast %356 : vector<1x8xf32> to vector<17x8xf32>
    %358 = arith.addf %354, %357 : vector<17x8xf32>
    %359 = arith.truncf %344 : vector<17x8xf32> to vector<17x8xbf16>
    %360 = arith.truncf %351 : vector<17x8xf32> to vector<17x8xbf16>
    %cst_252 = arith.constant dense<0.000000e+00> : vector<17x17xf32>
    %361 = tpu.matmul %359, %360, %cst_252 {dimension_numbers = #tpu.dot_dimension_numbers<[1], [1], [0], [0], [0, 0, 1, 0], [], []>} : vector<17x8xbf16>, vector<17x8xbf16>, vector<17x17xf32> -> vector<17x17xf32>
    %cst_253 = arith.constant dense<0xFF800000> : vector<17xf32>
    %362 = vector.multi_reduction <maximumf>, %361, %cst_253 [1] : vector<17x17xf32> to vector<17xf32>
    %363 = vector.shape_cast %362 : vector<17xf32> to vector<17x1xf32>
    %364 = vector.broadcast %363 : vector<17x1xf32> to vector<17x17xf32>
    %365 = arith.subf %361, %364 : vector<17x17xf32>
    %366 = math.exp %365 : vector<17x17xf32>
    %cst_254 = arith.constant dense<0.000000e+00> : vector<17xf32>
    %367 = vector.multi_reduction <add>, %366, %cst_254 [1] : vector<17x17xf32> to vector<17xf32>
    %368 = vector.shape_cast %367 : vector<17xf32> to vector<17x1xf32>
    %369 = tpu.reciprocal %368 {approx = true} : vector<17x1xf32> -> vector<17x1xf32>
    %370 = arith.truncf %366 : vector<17x17xf32> to vector<17x17xbf16>
    %371 = arith.truncf %358 : vector<17x8xf32> to vector<17x8xbf16>
    %cst_255 = arith.constant dense<0.000000e+00> : vector<17x8xf32>
    %372 = tpu.matmul %370, %371, %cst_255 {dimension_numbers = #tpu.dot_dimension_numbers<[1], [0], [0], [1], [0, 0, 1, 1], [], []>} : vector<17x17xbf16>, vector<17x8xbf16>, vector<17x8xf32> -> vector<17x8xf32>
    %373 = vector.broadcast %369 : vector<17x1xf32> to vector<17x8xf32>
    %374 = arith.mulf %372, %373 : vector<17x8xf32>
    %375 = arith.truncf %374 : vector<17x8xf32> to vector<17x8xbf16>
    %c1_256 = arith.constant 1 : index
    %c1_257 = arith.constant 1 : index
    %c0_258 = arith.constant 0 : index
    %c0_259 = arith.constant 0 : index
    %376 = vector.load %arg10[%c1_256, %c1_257, %c0_258, %c0_259] : memref<2x4x8x32xbf16, #tpu.memory_space<vmem>>, vector<1x1x8x32xbf16>
    %377 = vector.shape_cast %376 : vector<1x1x8x32xbf16> to vector<8x32xbf16>
    %cst_260 = arith.constant dense<0.000000e+00> : vector<17x32xf32>
    %378 = tpu.matmul %375, %377, %cst_260 {dimension_numbers = #tpu.dot_dimension_numbers<[1], [0], [0], [1], [0, 0, 1, 1], [], []>} : vector<17x8xbf16>, vector<8x32xbf16>, vector<17x32xf32> -> vector<17x32xf32>
    %379 = arith.addf %337, %378 : vector<17x32xf32>
    %c1_261 = arith.constant 1 : index
    %c2_262 = arith.constant 2 : index
    %c0_263 = arith.constant 0 : index
    %c0_264 = arith.constant 0 : index
    %380 = vector.load %arg4[%c1_261, %c2_262, %c0_263, %c0_264] : memref<2x4x32x8xbf16, #tpu.memory_space<vmem>>, vector<1x1x32x8xbf16>
    %381 = vector.shape_cast %380 : vector<1x1x32x8xbf16> to vector<32x8xbf16>
    %cst_265 = arith.constant dense<0.000000e+00> : vector<17x8xf32>
    %382 = tpu.matmul %294, %381, %cst_265 {dimension_numbers = #tpu.dot_dimension_numbers<[1], [0], [0], [1], [0, 0, 1, 1], [], []>} : vector<17x32xbf16>, vector<32x8xbf16>, vector<17x8xf32> -> vector<17x8xf32>
    %c1_266 = arith.constant 1 : index
    %c2_267 = arith.constant 2 : index
    %c0_268 = arith.constant 0 : index
    %c0_269 = arith.constant 0 : index
    %383 = vector.load %arg7[%c1_266, %c2_267, %c0_268, %c0_269] : memref<2x4x1x8xf32, #tpu.memory_space<vmem>>, vector<1x1x1x8xf32>
    %384 = vector.shape_cast %383 : vector<1x1x1x8xf32> to vector<1x8xf32>
    %385 = vector.broadcast %384 : vector<1x8xf32> to vector<17x8xf32>
    %386 = arith.addf %382, %385 : vector<17x8xf32>
    %c1_270 = arith.constant 1 : index
    %c2_271 = arith.constant 2 : index
    %c0_272 = arith.constant 0 : index
    %c0_273 = arith.constant 0 : index
    %387 = vector.load %arg5[%c1_270, %c2_271, %c0_272, %c0_273] : memref<2x4x32x8xbf16, #tpu.memory_space<vmem>>, vector<1x1x32x8xbf16>
    %388 = vector.shape_cast %387 : vector<1x1x32x8xbf16> to vector<32x8xbf16>
    %cst_274 = arith.constant dense<0.000000e+00> : vector<17x8xf32>
    %389 = tpu.matmul %294, %388, %cst_274 {dimension_numbers = #tpu.dot_dimension_numbers<[1], [0], [0], [1], [0, 0, 1, 1], [], []>} : vector<17x32xbf16>, vector<32x8xbf16>, vector<17x8xf32> -> vector<17x8xf32>
    %c1_275 = arith.constant 1 : index
    %c2_276 = arith.constant 2 : index
    %c0_277 = arith.constant 0 : index
    %c0_278 = arith.constant 0 : index
    %390 = vector.load %arg8[%c1_275, %c2_276, %c0_277, %c0_278] : memref<2x4x1x8xf32, #tpu.memory_space<vmem>>, vector<1x1x1x8xf32>
    %391 = vector.shape_cast %390 : vector<1x1x1x8xf32> to vector<1x8xf32>
    %392 = vector.broadcast %391 : vector<1x8xf32> to vector<17x8xf32>
    %393 = arith.addf %389, %392 : vector<17x8xf32>
    %c1_279 = arith.constant 1 : index
    %c2_280 = arith.constant 2 : index
    %c0_281 = arith.constant 0 : index
    %c0_282 = arith.constant 0 : index
    %394 = vector.load %arg6[%c1_279, %c2_280, %c0_281, %c0_282] : memref<2x4x32x8xbf16, #tpu.memory_space<vmem>>, vector<1x1x32x8xbf16>
    %395 = vector.shape_cast %394 : vector<1x1x32x8xbf16> to vector<32x8xbf16>
    %cst_283 = arith.constant dense<0.000000e+00> : vector<17x8xf32>
    %396 = tpu.matmul %294, %395, %cst_283 {dimension_numbers = #tpu.dot_dimension_numbers<[1], [0], [0], [1], [0, 0, 1, 1], [], []>} : vector<17x32xbf16>, vector<32x8xbf16>, vector<17x8xf32> -> vector<17x8xf32>
    %c1_284 = arith.constant 1 : index
    %c2_285 = arith.constant 2 : index
    %c0_286 = arith.constant 0 : index
    %c0_287 = arith.constant 0 : index
    %397 = vector.load %arg9[%c1_284, %c2_285, %c0_286, %c0_287] : memref<2x4x1x8xf32, #tpu.memory_space<vmem>>, vector<1x1x1x8xf32>
    %398 = vector.shape_cast %397 : vector<1x1x1x8xf32> to vector<1x8xf32>
    %399 = vector.broadcast %398 : vector<1x8xf32> to vector<17x8xf32>
    %400 = arith.addf %396, %399 : vector<17x8xf32>
    %401 = arith.truncf %386 : vector<17x8xf32> to vector<17x8xbf16>
    %402 = arith.truncf %393 : vector<17x8xf32> to vector<17x8xbf16>
    %cst_288 = arith.constant dense<0.000000e+00> : vector<17x17xf32>
    %403 = tpu.matmul %401, %402, %cst_288 {dimension_numbers = #tpu.dot_dimension_numbers<[1], [1], [0], [0], [0, 0, 1, 0], [], []>} : vector<17x8xbf16>, vector<17x8xbf16>, vector<17x17xf32> -> vector<17x17xf32>
    %cst_289 = arith.constant dense<0xFF800000> : vector<17xf32>
    %404 = vector.multi_reduction <maximumf>, %403, %cst_289 [1] : vector<17x17xf32> to vector<17xf32>
    %405 = vector.shape_cast %404 : vector<17xf32> to vector<17x1xf32>
    %406 = vector.broadcast %405 : vector<17x1xf32> to vector<17x17xf32>
    %407 = arith.subf %403, %406 : vector<17x17xf32>
    %408 = math.exp %407 : vector<17x17xf32>
    %cst_290 = arith.constant dense<0.000000e+00> : vector<17xf32>
    %409 = vector.multi_reduction <add>, %408, %cst_290 [1] : vector<17x17xf32> to vector<17xf32>
    %410 = vector.shape_cast %409 : vector<17xf32> to vector<17x1xf32>
    %411 = tpu.reciprocal %410 {approx = true} : vector<17x1xf32> -> vector<17x1xf32>
    %412 = arith.truncf %408 : vector<17x17xf32> to vector<17x17xbf16>
    %413 = arith.truncf %400 : vector<17x8xf32> to vector<17x8xbf16>
    %cst_291 = arith.constant dense<0.000000e+00> : vector<17x8xf32>
    %414 = tpu.matmul %412, %413, %cst_291 {dimension_numbers = #tpu.dot_dimension_numbers<[1], [0], [0], [1], [0, 0, 1, 1], [], []>} : vector<17x17xbf16>, vector<17x8xbf16>, vector<17x8xf32> -> vector<17x8xf32>
    %415 = vector.broadcast %411 : vector<17x1xf32> to vector<17x8xf32>
    %416 = arith.mulf %414, %415 : vector<17x8xf32>
    %417 = arith.truncf %416 : vector<17x8xf32> to vector<17x8xbf16>
    %c1_292 = arith.constant 1 : index
    %c2_293 = arith.constant 2 : index
    %c0_294 = arith.constant 0 : index
    %c0_295 = arith.constant 0 : index
    %418 = vector.load %arg10[%c1_292, %c2_293, %c0_294, %c0_295] : memref<2x4x8x32xbf16, #tpu.memory_space<vmem>>, vector<1x1x8x32xbf16>
    %419 = vector.shape_cast %418 : vector<1x1x8x32xbf16> to vector<8x32xbf16>
    %cst_296 = arith.constant dense<0.000000e+00> : vector<17x32xf32>
    %420 = tpu.matmul %417, %419, %cst_296 {dimension_numbers = #tpu.dot_dimension_numbers<[1], [0], [0], [1], [0, 0, 1, 1], [], []>} : vector<17x8xbf16>, vector<8x32xbf16>, vector<17x32xf32> -> vector<17x32xf32>
    %421 = arith.addf %379, %420 : vector<17x32xf32>
    %c1_297 = arith.constant 1 : index
    %c3_298 = arith.constant 3 : index
    %c0_299 = arith.constant 0 : index
    %c0_300 = arith.constant 0 : index
    %422 = vector.load %arg4[%c1_297, %c3_298, %c0_299, %c0_300] : memref<2x4x32x8xbf16, #tpu.memory_space<vmem>>, vector<1x1x32x8xbf16>
    %423 = vector.shape_cast %422 : vector<1x1x32x8xbf16> to vector<32x8xbf16>
    %cst_301 = arith.constant dense<0.000000e+00> : vector<17x8xf32>
    %424 = tpu.matmul %294, %423, %cst_301 {dimension_numbers = #tpu.dot_dimension_numbers<[1], [0], [0], [1], [0, 0, 1, 1], [], []>} : vector<17x32xbf16>, vector<32x8xbf16>, vector<17x8xf32> -> vector<17x8xf32>
    %c1_302 = arith.constant 1 : index
    %c3_303 = arith.constant 3 : index
    %c0_304 = arith.constant 0 : index
    %c0_305 = arith.constant 0 : index
    %425 = vector.load %arg7[%c1_302, %c3_303, %c0_304, %c0_305] : memref<2x4x1x8xf32, #tpu.memory_space<vmem>>, vector<1x1x1x8xf32>
    %426 = vector.shape_cast %425 : vector<1x1x1x8xf32> to vector<1x8xf32>
    %427 = vector.broadcast %426 : vector<1x8xf32> to vector<17x8xf32>
    %428 = arith.addf %424, %427 : vector<17x8xf32>
    %c1_306 = arith.constant 1 : index
    %c3_307 = arith.constant 3 : index
    %c0_308 = arith.constant 0 : index
    %c0_309 = arith.constant 0 : index
    %429 = vector.load %arg5[%c1_306, %c3_307, %c0_308, %c0_309] : memref<2x4x32x8xbf16, #tpu.memory_space<vmem>>, vector<1x1x32x8xbf16>
    %430 = vector.shape_cast %429 : vector<1x1x32x8xbf16> to vector<32x8xbf16>
    %cst_310 = arith.constant dense<0.000000e+00> : vector<17x8xf32>
    %431 = tpu.matmul %294, %430, %cst_310 {dimension_numbers = #tpu.dot_dimension_numbers<[1], [0], [0], [1], [0, 0, 1, 1], [], []>} : vector<17x32xbf16>, vector<32x8xbf16>, vector<17x8xf32> -> vector<17x8xf32>
    %c1_311 = arith.constant 1 : index
    %c3_312 = arith.constant 3 : index
    %c0_313 = arith.constant 0 : index
    %c0_314 = arith.constant 0 : index
    %432 = vector.load %arg8[%c1_311, %c3_312, %c0_313, %c0_314] : memref<2x4x1x8xf32, #tpu.memory_space<vmem>>, vector<1x1x1x8xf32>
    %433 = vector.shape_cast %432 : vector<1x1x1x8xf32> to vector<1x8xf32>
    %434 = vector.broadcast %433 : vector<1x8xf32> to vector<17x8xf32>
    %435 = arith.addf %431, %434 : vector<17x8xf32>
    %c1_315 = arith.constant 1 : index
    %c3_316 = arith.constant 3 : index
    %c0_317 = arith.constant 0 : index
    %c0_318 = arith.constant 0 : index
    %436 = vector.load %arg6[%c1_315, %c3_316, %c0_317, %c0_318] : memref<2x4x32x8xbf16, #tpu.memory_space<vmem>>, vector<1x1x32x8xbf16>
    %437 = vector.shape_cast %436 : vector<1x1x32x8xbf16> to vector<32x8xbf16>
    %cst_319 = arith.constant dense<0.000000e+00> : vector<17x8xf32>
    %438 = tpu.matmul %294, %437, %cst_319 {dimension_numbers = #tpu.dot_dimension_numbers<[1], [0], [0], [1], [0, 0, 1, 1], [], []>} : vector<17x32xbf16>, vector<32x8xbf16>, vector<17x8xf32> -> vector<17x8xf32>
    %c1_320 = arith.constant 1 : index
    %c3_321 = arith.constant 3 : index
    %c0_322 = arith.constant 0 : index
    %c0_323 = arith.constant 0 : index
    %439 = vector.load %arg9[%c1_320, %c3_321, %c0_322, %c0_323] : memref<2x4x1x8xf32, #tpu.memory_space<vmem>>, vector<1x1x1x8xf32>
    %440 = vector.shape_cast %439 : vector<1x1x1x8xf32> to vector<1x8xf32>
    %441 = vector.broadcast %440 : vector<1x8xf32> to vector<17x8xf32>
    %442 = arith.addf %438, %441 : vector<17x8xf32>
    %443 = arith.truncf %428 : vector<17x8xf32> to vector<17x8xbf16>
    %444 = arith.truncf %435 : vector<17x8xf32> to vector<17x8xbf16>
    %cst_324 = arith.constant dense<0.000000e+00> : vector<17x17xf32>
    %445 = tpu.matmul %443, %444, %cst_324 {dimension_numbers = #tpu.dot_dimension_numbers<[1], [1], [0], [0], [0, 0, 1, 0], [], []>} : vector<17x8xbf16>, vector<17x8xbf16>, vector<17x17xf32> -> vector<17x17xf32>
    %cst_325 = arith.constant dense<0xFF800000> : vector<17xf32>
    %446 = vector.multi_reduction <maximumf>, %445, %cst_325 [1] : vector<17x17xf32> to vector<17xf32>
    %447 = vector.shape_cast %446 : vector<17xf32> to vector<17x1xf32>
    %448 = vector.broadcast %447 : vector<17x1xf32> to vector<17x17xf32>
    %449 = arith.subf %445, %448 : vector<17x17xf32>
    %450 = math.exp %449 : vector<17x17xf32>
    %cst_326 = arith.constant dense<0.000000e+00> : vector<17xf32>
    %451 = vector.multi_reduction <add>, %450, %cst_326 [1] : vector<17x17xf32> to vector<17xf32>
    %452 = vector.shape_cast %451 : vector<17xf32> to vector<17x1xf32>
    %453 = tpu.reciprocal %452 {approx = true} : vector<17x1xf32> -> vector<17x1xf32>
    %454 = arith.truncf %450 : vector<17x17xf32> to vector<17x17xbf16>
    %455 = arith.truncf %442 : vector<17x8xf32> to vector<17x8xbf16>
    %cst_327 = arith.constant dense<0.000000e+00> : vector<17x8xf32>
    %456 = tpu.matmul %454, %455, %cst_327 {dimension_numbers = #tpu.dot_dimension_numbers<[1], [0], [0], [1], [0, 0, 1, 1], [], []>} : vector<17x17xbf16>, vector<17x8xbf16>, vector<17x8xf32> -> vector<17x8xf32>
    %457 = vector.broadcast %453 : vector<17x1xf32> to vector<17x8xf32>
    %458 = arith.mulf %456, %457 : vector<17x8xf32>
    %459 = arith.truncf %458 : vector<17x8xf32> to vector<17x8xbf16>
    %c1_328 = arith.constant 1 : index
    %c3_329 = arith.constant 3 : index
    %c0_330 = arith.constant 0 : index
    %c0_331 = arith.constant 0 : index
    %460 = vector.load %arg10[%c1_328, %c3_329, %c0_330, %c0_331] : memref<2x4x8x32xbf16, #tpu.memory_space<vmem>>, vector<1x1x8x32xbf16>
    %461 = vector.shape_cast %460 : vector<1x1x8x32xbf16> to vector<8x32xbf16>
    %cst_332 = arith.constant dense<0.000000e+00> : vector<17x32xf32>
    %462 = tpu.matmul %459, %461, %cst_332 {dimension_numbers = #tpu.dot_dimension_numbers<[1], [0], [0], [1], [0, 0, 1, 1], [], []>} : vector<17x8xbf16>, vector<8x32xbf16>, vector<17x32xf32> -> vector<17x32xf32>
    %463 = arith.addf %421, %462 : vector<17x32xf32>
    %464 = vector.broadcast %268 : vector<1x32xf32> to vector<17x32xf32>
    %465 = arith.addf %463, %464 : vector<17x32xf32>
    %466 = vector.broadcast %269 : vector<1x32xf32> to vector<17x32xf32>
    %467 = arith.mulf %466, %465 : vector<17x32xf32>
    %468 = arith.addf %263, %467 : vector<17x32xf32>
    %cst_333 = arith.constant dense<0.000000e+00> : vector<17xf32>
    %469 = vector.multi_reduction <add>, %468, %cst_333 [1] : vector<17x32xf32> to vector<17xf32>
    %470 = vector.shape_cast %469 : vector<17xf32> to vector<17x1xf32>
    %cst_334 = arith.constant 3.200000e+01 : f32
    %471 = vector.broadcast %cst_334 : f32 to vector<17x1xf32>
    %472 = arith.divf %470, %471 : vector<17x1xf32>
    %473 = vector.broadcast %472 : vector<17x1xf32> to vector<17x32xf32>
    %474 = arith.subf %468, %473 : vector<17x32xf32>
    %475 = arith.mulf %474, %474 : vector<17x32xf32>
    %cst_335 = arith.constant dense<0.000000e+00> : vector<17xf32>
    %476 = vector.multi_reduction <add>, %475, %cst_335 [1] : vector<17x32xf32> to vector<17xf32>
    %477 = vector.shape_cast %476 : vector<17xf32> to vector<17x1xf32>
    %cst_336 = arith.constant 3.200000e+01 : f32
    %478 = vector.broadcast %cst_336 : f32 to vector<17x1xf32>
    %479 = arith.divf %477, %478 : vector<17x1xf32>
    %cst_337 = arith.constant 9.99999997E-7 : f32
    %480 = vector.broadcast %cst_337 : f32 to vector<17x1xf32>
    %481 = arith.addf %479, %480 : vector<17x1xf32>
    %482 = math.rsqrt %481 : vector<17x1xf32>
    %483 = vector.broadcast %482 : vector<17x1xf32> to vector<17x32xf32>
    %484 = arith.mulf %474, %483 : vector<17x32xf32>
    %485 = vector.broadcast %270 : vector<1x32xf32> to vector<17x32xf32>
    %486 = arith.mulf %484, %485 : vector<17x32xf32>
    %487 = vector.broadcast %271 : vector<1x32xf32> to vector<17x32xf32>
    %488 = arith.addf %486, %487 : vector<17x32xf32>
    %489 = arith.truncf %488 : vector<17x32xf32> to vector<17x32xbf16>
    %c1_338 = arith.constant 1 : index
    %c0_339 = arith.constant 0 : index
    %c0_340 = arith.constant 0 : index
    %490 = vector.load %arg11[%c1_338, %c0_339, %c0_340] : memref<2x32x128xbf16, #tpu.memory_space<vmem>>, vector<1x32x128xbf16>
    %491 = vector.shape_cast %490 : vector<1x32x128xbf16> to vector<32x128xbf16>
    %cst_341 = arith.constant dense<0.000000e+00> : vector<17x128xf32>
    %492 = tpu.matmul %489, %491, %cst_341 {dimension_numbers = #tpu.dot_dimension_numbers<[1], [0], [0], [1], [0, 0, 1, 1], [], []>} : vector<17x32xbf16>, vector<32x128xbf16>, vector<17x128xf32> -> vector<17x128xf32>
    %c1_342 = arith.constant 1 : index
    %c0_343 = arith.constant 0 : index
    %c0_344 = arith.constant 0 : index
    %493 = vector.load %arg12[%c1_342, %c0_343, %c0_344] : memref<2x1x128xf32, #tpu.memory_space<vmem>>, vector<1x1x128xf32>
    %494 = vector.shape_cast %493 : vector<1x1x128xf32> to vector<1x128xf32>
    %495 = vector.broadcast %494 : vector<1x128xf32> to vector<17x128xf32>
    %496 = arith.addf %492, %495 : vector<17x128xf32>
    %cst_345 = arith.constant 5.000000e-01 : f32
    %497 = vector.broadcast %cst_345 : f32 to vector<17x128xf32>
    %498 = arith.mulf %497, %496 : vector<17x128xf32>
    %cst_346 = arith.constant 4.471500e-02 : f32
    %499 = vector.broadcast %cst_346 : f32 to vector<17x128xf32>
    %500 = arith.mulf %499, %496 : vector<17x128xf32>
    %501 = arith.mulf %500, %496 : vector<17x128xf32>
    %502 = arith.mulf %501, %496 : vector<17x128xf32>
    %503 = arith.addf %496, %502 : vector<17x128xf32>
    %cst_347 = arith.constant 0.797884583 : f32
    %504 = vector.broadcast %cst_347 : f32 to vector<17x128xf32>
    %505 = arith.mulf %504, %503 : vector<17x128xf32>
    %506 = math.tanh %505 : vector<17x128xf32>
    %cst_348 = arith.constant 1.000000e+00 : f32
    %507 = vector.broadcast %cst_348 : f32 to vector<17x128xf32>
    %508 = arith.addf %507, %506 : vector<17x128xf32>
    %509 = arith.mulf %498, %508 : vector<17x128xf32>
    %510 = arith.truncf %509 : vector<17x128xf32> to vector<17x128xbf16>
    %c1_349 = arith.constant 1 : index
    %c0_350 = arith.constant 0 : index
    %c0_351 = arith.constant 0 : index
    %511 = vector.load %arg13[%c1_349, %c0_350, %c0_351] : memref<2x128x32xbf16, #tpu.memory_space<vmem>>, vector<1x128x32xbf16>
    %512 = vector.shape_cast %511 : vector<1x128x32xbf16> to vector<128x32xbf16>
    %cst_352 = arith.constant dense<0.000000e+00> : vector<17x32xf32>
    %513 = tpu.matmul %510, %512, %cst_352 {dimension_numbers = #tpu.dot_dimension_numbers<[1], [0], [0], [1], [0, 0, 1, 1], [], []>} : vector<17x128xbf16>, vector<128x32xbf16>, vector<17x32xf32> -> vector<17x32xf32>
    %514 = vector.broadcast %272 : vector<1x32xf32> to vector<17x32xf32>
    %515 = arith.addf %513, %514 : vector<17x32xf32>
    %516 = vector.broadcast %273 : vector<1x32xf32> to vector<17x32xf32>
    %517 = arith.mulf %516, %515 : vector<17x32xf32>
    %518 = arith.addf %468, %517 : vector<17x32xf32>
    %cst_353 = arith.constant dense<0.000000e+00> : vector<17xf32>
    %519 = vector.multi_reduction <add>, %518, %cst_353 [1] : vector<17x32xf32> to vector<17xf32>
    %520 = vector.shape_cast %519 : vector<17xf32> to vector<17x1xf32>
    %cst_354 = arith.constant 3.200000e+01 : f32
    %521 = vector.broadcast %cst_354 : f32 to vector<17x1xf32>
    %522 = arith.divf %520, %521 : vector<17x1xf32>
    %523 = vector.broadcast %522 : vector<17x1xf32> to vector<17x32xf32>
    %524 = arith.subf %518, %523 : vector<17x32xf32>
    %525 = arith.mulf %524, %524 : vector<17x32xf32>
    %cst_355 = arith.constant dense<0.000000e+00> : vector<17xf32>
    %526 = vector.multi_reduction <add>, %525, %cst_355 [1] : vector<17x32xf32> to vector<17xf32>
    %527 = vector.shape_cast %526 : vector<17xf32> to vector<17x1xf32>
    %cst_356 = arith.constant 3.200000e+01 : f32
    %528 = vector.broadcast %cst_356 : f32 to vector<17x1xf32>
    %529 = arith.divf %527, %528 : vector<17x1xf32>
    %cst_357 = arith.constant 9.99999997E-7 : f32
    %530 = vector.broadcast %cst_357 : f32 to vector<17x1xf32>
    %531 = arith.addf %529, %530 : vector<17x1xf32>
    %532 = math.rsqrt %531 : vector<17x1xf32>
    %533 = vector.broadcast %532 : vector<17x1xf32> to vector<17x32xf32>
    %534 = arith.mulf %524, %533 : vector<17x32xf32>
    %535 = vector.broadcast %0 : vector<1x32xf32> to vector<17x32xf32>
    %536 = arith.mulf %534, %535 : vector<17x32xf32>
    %537 = vector.broadcast %1 : vector<1x32xf32> to vector<17x32xf32>
    %538 = arith.addf %536, %537 : vector<17x32xf32>
    %539 = vector.extract_strided_slice %538 {offsets = [0, 0], sizes = [16, 32], strides = [1, 1]} : vector<17x32xf32> to vector<16x32xf32>
    %c0_358 = arith.constant 0 : index
    %c0_359 = arith.constant 0 : index
    %540 = vector.load %arg15[%c0_358, %c0_359] : memref<16x32xf32, #tpu.memory_space<vmem>>, vector<16x32xf32>
    tpu.vector_store %arg15[%c0_358, %c0_359], %539 {strides = array<i32>} : memref<16x32xf32, #tpu.memory_space<vmem>>, vector<16x32xf32>,
    return
  }
  func.func @transform_0(%arg0: i32) -> (i32, i32) {
    %c0_i32 = arith.constant 0 : i32
    %c0_i32_0 = arith.constant 0 : i32
    return %arg0, %c0_i32 : i32, i32
  }
  func.func @transform_1(%arg0: i32) -> (i32, i32) {
    %c0_i32 = arith.constant 0 : i32
    %c0_i32_0 = arith.constant 0 : i32
    %c0_i32_1 = arith.constant 0 : i32
    return %c0_i32, %c0_i32_0 : i32, i32
  }
  func.func @transform_2(%arg0: i32) -> (i32, i32) {
    %c0_i32 = arith.constant 0 : i32
    %c0_i32_0 = arith.constant 0 : i32
    %c0_i32_1 = arith.constant 0 : i32
    return %c0_i32, %c0_i32_0 : i32, i32
  }
  func.func @transform_3(%arg0: i32) -> (i32, i32, i32, i32) {
    %c0_i32 = arith.constant 0 : i32
    %c0_i32_0 = arith.constant 0 : i32
    %c0_i32_1 = arith.constant 0 : i32
    %c0_i32_2 = arith.constant 0 : i32
    %c0_i32_3 = arith.constant 0 : i32
    return %c0_i32, %c0_i32_0, %c0_i32_1, %c0_i32_2 : i32, i32, i32, i32
  }
  func.func @transform_4(%arg0: i32) -> (i32, i32, i32, i32) {
    %c0_i32 = arith.constant 0 : i32
    %c0_i32_0 = arith.constant 0 : i32
    %c0_i32_1 = arith.constant 0 : i32
    %c0_i32_2 = arith.constant 0 : i32
    %c0_i32_3 = arith.constant 0 : i32
    return %c0_i32, %c0_i32_0, %c0_i32_1, %c0_i32_2 : i32, i32, i32, i32
  }
  func.func @transform_5(%arg0: i32) -> (i32, i32, i32, i32) {
    %c0_i32 = arith.constant 0 : i32
    %c0_i32_0 = arith.constant 0 : i32
    %c0_i32_1 = arith.constant 0 : i32
    %c0_i32_2 = arith.constant 0 : i32
    %c0_i32_3 = arith.constant 0 : i32
    return %c0_i32, %c0_i32_0, %c0_i32_1, %c0_i32_2 : i32, i32, i32, i32
  }
  func.func @transform_6(%arg0: i32) -> (i32, i32, i32, i32) {
    %c0_i32 = arith.constant 0 : i32
    %c0_i32_0 = arith.constant 0 : i32
    %c0_i32_1 = arith.constant 0 : i32
    %c0_i32_2 = arith.constant 0 : i32
    %c0_i32_3 = arith.constant 0 : i32
    return %c0_i32, %c0_i32_0, %c0_i32_1, %c0_i32_2 : i32, i32, i32, i32
  }
  func.func @transform_7(%arg0: i32) -> (i32, i32, i32, i32) {
    %c0_i32 = arith.constant 0 : i32
    %c0_i32_0 = arith.constant 0 : i32
    %c0_i32_1 = arith.constant 0 : i32
    %c0_i32_2 = arith.constant 0 : i32
    %c0_i32_3 = arith.constant 0 : i32
    return %c0_i32, %c0_i32_0, %c0_i32_1, %c0_i32_2 : i32, i32, i32, i32
  }
  func.func @transform_8(%arg0: i32) -> (i32, i32, i32, i32) {
    %c0_i32 = arith.constant 0 : i32
    %c0_i32_0 = arith.constant 0 : i32
    %c0_i32_1 = arith.constant 0 : i32
    %c0_i32_2 = arith.constant 0 : i32
    %c0_i32_3 = arith.constant 0 : i32
    return %c0_i32, %c0_i32_0, %c0_i32_1, %c0_i32_2 : i32, i32, i32, i32
  }
  func.func @transform_9(%arg0: i32) -> (i32, i32, i32, i32) {
    %c0_i32 = arith.constant 0 : i32
    %c0_i32_0 = arith.constant 0 : i32
    %c0_i32_1 = arith.constant 0 : i32
    %c0_i32_2 = arith.constant 0 : i32
    %c0_i32_3 = arith.constant 0 : i32
    return %c0_i32, %c0_i32_0, %c0_i32_1, %c0_i32_2 : i32, i32, i32, i32
  }
  func.func @transform_10(%arg0: i32) -> (i32, i32, i32) {
    %c0_i32 = arith.constant 0 : i32
    %c0_i32_0 = arith.constant 0 : i32
    %c0_i32_1 = arith.constant 0 : i32
    %c0_i32_2 = arith.constant 0 : i32
    return %c0_i32, %c0_i32_0, %c0_i32_1 : i32, i32, i32
  }
  func.func @transform_11(%arg0: i32) -> (i32, i32, i32) {
    %c0_i32 = arith.constant 0 : i32
    %c0_i32_0 = arith.constant 0 : i32
    %c0_i32_1 = arith.constant 0 : i32
    %c0_i32_2 = arith.constant 0 : i32
    return %c0_i32, %c0_i32_0, %c0_i32_1 : i32, i32, i32
  }
  func.func @transform_12(%arg0: i32) -> (i32, i32, i32) {
    %c0_i32 = arith.constant 0 : i32
    %c0_i32_0 = arith.constant 0 : i32
    %c0_i32_1 = arith.constant 0 : i32
    %c0_i32_2 = arith.constant 0 : i32
    return %c0_i32, %c0_i32_0, %c0_i32_1 : i32, i32, i32
  }
  func.func @transform_13(%arg0: i32) -> (i32, i32, i32) {
    %c0_i32 = arith.constant 0 : i32
    %c0_i32_0 = arith.constant 0 : i32
    %c0_i32_1 = arith.constant 0 : i32
    %c0_i32_2 = arith.constant 0 : i32
    return %c0_i32, %c0_i32_0, %c0_i32_1 : i32, i32, i32
  }
  func.func @transform_14(%arg0: i32) -> (i32, i32) {
    %c0_i32 = arith.constant 0 : i32
    %c0_i32_0 = arith.constant 0 : i32
    return %arg0, %c0_i32 : i32, i32
  }
}

</mosaic_0001>

<llo_original>
// kernel: tpu_custom_call.1
$region0: #{tpu_custom_call.1}
  #allocation0 [shape = 'u32[]', space=smem, size = 0x4, offset = 0x4, fixed_abs, tag = 'smem constant byte address 0x4 - core index']
  #allocation1 [shape = 'u32[144,128]{1,0:T(1,128)}', space=vmem, size = 0x12000, scoped, tag = 'internal scratch']
  %s0 = inlined_call_operand.vmem [shape: bf16[32,48], index: 0, kind: input, shape index: {}]
  %s1 = inlined_call_operand.vmem [shape: bf16[48,32], index: 1, kind: input, shape index: {}]
  %s2 = inlined_call_operand.vmem [shape: f32[24,32], index: 2, kind: input, shape index: {}]
  %s3 = inlined_call_operand.vmem [shape: bf16[2,4,32,8], index: 3, kind: input, shape index: {}]
  %s4 = inlined_call_operand.vmem [shape: bf16[2,4,32,8], index: 4, kind: input, shape index: {}]
  %s5 = inlined_call_operand.vmem [shape: bf16[2,4,32,8], index: 5, kind: input, shape index: {}]
  %s6 = inlined_call_operand.vmem [shape: f32[2,4,1,8], index: 6, kind: input, shape index: {}]
  %s7 = inlined_call_operand.vmem [shape: f32[2,4,1,8], index: 7, kind: input, shape index: {}]
  %s8 = inlined_call_operand.vmem [shape: f32[2,4,1,8], index: 8, kind: input, shape index: {}]
  %s9 = inlined_call_operand.vmem [shape: bf16[2,4,8,32], index: 9, kind: input, shape index: {}]
  %s10 = inlined_call_operand.vmem [shape: bf16[2,32,128], index: 10, kind: input, shape index: {}]
  %s11 = inlined_call_operand.vmem [shape: f32[2,1,128], index: 11, kind: input, shape index: {}]
  %s12 = inlined_call_operand.vmem [shape: bf16[2,128,32], index: 12, kind: input, shape index: {}]
  %s13 = inlined_call_operand.vmem [shape: f32[2,8,32], index: 13, kind: input, shape index: {}]
  %s14 = inlined_call_operand.hbm [shape: f32[32,32], index: 14, kind: output, shape index: {}]
  %s15 = sld [smem:[#allocation0]]
  $region89: #{tpu_custom_call.1} parent=0
    _
  %s17 = ssub.s32 1, %s15
  %s18 = scalar_select 0, %s17, %s15
  $region1: #{tpu_custom_call.1} parent=0
    #allocation2 [shape = 'u8[16384]{0}', space=vmem, size = 0x4000, scoped, tag = 'output window, operand 0']
    #allocation3 [shape = 's32[2]{0}', space=sflag, size = 0x8, scoped, tag = 'scoped memory for tpu_custom_call.1']
    %19 = vsyncpa [#allocation3], 0
    %s20 = scalar_lea.sflag [#allocation3], 1
    %21 = vsyncpa %s20, 0
    loop: start=0, step=1, limit=4
    $region2: #{tpu_custom_call.1} parent=1 // loop_pre_header
      _
    $region3: #{tpu_custom_call.1} parent=1 // loop_header
      %s23 = sphi 0, %s27
      %p24 = scmp.ge.s32.totalorder %s23, 4
      %s33 = sphi 0, %s35
      %s36 = sphi 0, %s33
      %s37 = sphi 0, %s36
      %s53 = sphi 0, %s37
      %s57 = sphi 0, %s57
      %s59 = sphi 0, %s57
      %s60 = sphi 0, %s59
      %s74 = sphi 0, %s60
      %s78 = sphi 0, %s78
      %s80 = sphi 0, %s78
      %s81 = sphi 0, %s80
      %s95 = sphi 0, %s81
      %s99 = sphi 0, %s99
      %s101 = sphi 0, %s99
      %s102 = sphi 0, %s101
      %s116 = sphi 0, %s102
      %s120 = sphi 0, %s120
      %s122 = sphi 0, %s120
      %s123 = sphi 0, %s122
      %s137 = sphi 0, %s123
      %s141 = sphi 0, %s141
      %s143 = sphi 0, %s141
      %s144 = sphi 0, %s143
      %s158 = sphi 0, %s144
      %s162 = sphi 0, %s162
      %s164 = sphi 0, %s162
      %s165 = sphi 0, %s164
      %s179 = sphi 0, %s165
      %s183 = sphi 0, %s183
      %s185 = sphi 0, %s183
      %s186 = sphi 0, %s185
      %s200 = sphi 0, %s186
      %s204 = sphi 0, %s204
      %s206 = sphi 0, %s204
      %s207 = sphi 0, %s206
      %s221 = sphi 0, %s207
      %s225 = sphi 0, %s225
      %s227 = sphi 0, %s225
      %s228 = sphi 0, %s227
      %s242 = sphi 0, %s228
      %s246 = sphi 0, %s246
      %s248 = sphi 0, %s246
      %s249 = sphi 0, %s248
      %s263 = sphi 0, %s249
      %s267 = sphi 0, %s267
      %s269 = sphi 0, %s267
      %s270 = sphi 0, %s269
      %s284 = sphi 0, %s270
      %s288 = sphi 0, %s288
      %s290 = sphi 0, %s288
      %s291 = sphi 0, %s290
      %s305 = sphi 0, %s291
      %s309 = sphi 0, %s309
      %s311 = sphi 0, %s309
      %s312 = sphi 0, %s311
      %s326 = sphi 0, %s312
      %s332 = sphi 0, %s334
      %s335 = sphi 0, %s332
      %s336 = sphi 0, %s335
      %s352 = sphi 0, %s336
    $region4: #{tpu_custom_call.1} parent=1 // loop_header_branch
      %26 = sbr.rel (%p24) target = $region8
    $region5: #{tpu_custom_call.1} parent=1 // loop_body
      %s28 = ssub.s32 %s23, 1
      %s29 = ssub.s32 %s23, 2
      %s30 = sadd.s32 %s23, 1
      %s31 = ssub.s32 %s23, %s30
      %p32 = scmp.eq.s32.totalorder %s31, 0
      %s34 = sadd.s32 %s33, 1
      %s35 = scalar_select %p32, %s33, %s34
      %p38 = pneg %p32
      %p39 = scmp.eq.s32.totalorder %s23, 1
      %p40 = por %p38, %p39
      %p41 = scmp.ne.s32.totalorder %s33, %s36
      %p42 = scmp.eq.s32.totalorder %s23, 0
      %p43 = por %p41, %p42
      %p44 = scmp.ne.s32.totalorder %s33, %s36
      %p45 = scmp.eq.s32.totalorder %s28, 1
      %p46 = por %p44, %p45
      %p47 = scmp.ne.s32.totalorder %s36, %s37
      %p48 = scmp.eq.s32.totalorder %s28, 0
      %p49 = por %p47, %p48
      %p50 = scmp.ne.s32.totalorder %s36, %s37
      %p51 = scmp.eq.s32.totalorder %s29, 1
      %p52 = por %p50, %p51
      %p54 = scmp.ne.s32.totalorder %s37, %s53
      %p55 = scmp.eq.s32.totalorder %s29, 0
      %p56 = por %p54, %p55
      %s58 = sadd.s32 %s57, 1
      %p61 = scmp.eq.s32.totalorder %s23, 1
      %p62 = scmp.ne.s32.totalorder %s57, %s59
      %p63 = scmp.eq.s32.totalorder %s23, 0
      %p64 = por %p62, %p63
      %p65 = scmp.ne.s32.totalorder %s57, %s59
      %p66 = scmp.eq.s32.totalorder %s28, 1
      %p67 = por %p65, %p66
      %p68 = scmp.ne.s32.totalorder %s59, %s60
      %p69 = scmp.eq.s32.totalorder %s28, 0
      %p70 = por %p68, %p69
      %p71 = scmp.ne.s32.totalorder %s59, %s60
      %p72 = scmp.eq.s32.totalorder %s29, 1
      %p73 = por %p71, %p72
      %p75 = scmp.ne.s32.totalorder %s60, %s74
      %p76 = scmp.eq.s32.totalorder %s29, 0
      %p77 = por %p75, %p76
      %s79 = sadd.s32 %s78, 1
      %p82 = scmp.eq.s32.totalorder %s23, 1
      %p83 = scmp.ne.s32.totalorder %s78, %s80
      %p84 = scmp.eq.s32.totalorder %s23, 0
      %p85 = por %p83, %p84
      %p86 = scmp.ne.s32.totalorder %s78, %s80
      %p87 = scmp.eq.s32.totalorder %s28, 1
      %p88 = por %p86, %p87
      %p89 = scmp.ne.s32.totalorder %s80, %s81
      %p90 = scmp.eq.s32.totalorder %s28, 0
      %p91 = por %p89, %p90
      %p92 = scmp.ne.s32.totalorder %s80, %s81
      %p93 = scmp.eq.s32.totalorder %s29, 1
      %p94 = por %p92, %p93
      %p96 = scmp.ne.s32.totalorder %s81, %s95
      %p97 = scmp.eq.s32.totalorder %s29, 0
      %p98 = por %p96, %p97
      %s100 = sadd.s32 %s99, 1
      %p103 = scmp.eq.s32.totalorder %s23, 1
      %p104 = scmp.ne.s32.totalorder %s99, %s101
      %p105 = scmp.eq.s32.totalorder %s23, 0
      %p106 = por %p104, %p105
      %p107 = scmp.ne.s32.totalorder %s99, %s101
      %p108 = scmp.eq.s32.totalorder %s28, 1
      %p109 = por %p107, %p108
      %p110 = scmp.ne.s32.totalorder %s101, %s102
      %p111 = scmp.eq.s32.totalorder %s28, 0
      %p112 = por %p110, %p111
      %p113 = scmp.ne.s32.totalorder %s101, %s102
      %p114 = scmp.eq.s32.totalorder %s29, 1
      %p115 = por %p113, %p114
      %p117 = scmp.ne.s32.totalorder %s102, %s116
      %p118 = scmp.eq.s32.totalorder %s29, 0
      %p119 = por %p117, %p118
      %s121 = sadd.s32 %s120, 1
      %p124 = scmp.eq.s32.totalorder %s23, 1
      %p125 = scmp.ne.s32.totalorder %s120, %s122
      %p126 = scmp.eq.s32.totalorder %s23, 0
      %p127 = por %p125, %p126
      %p128 = scmp.ne.s32.totalorder %s120, %s122
      %p129 = scmp.eq.s32.totalorder %s28, 1
      %p130 = por %p128, %p129
      %p131 = scmp.ne.s32.totalorder %s122, %s123
      %p132 = scmp.eq.s32.totalorder %s28, 0
      %p133 = por %p131, %p132
      %p134 = scmp.ne.s32.totalorder %s122, %s123
      %p135 = scmp.eq.s32.totalorder %s29, 1
      %p136 = por %p134, %p135
      %p138 = scmp.ne.s32.totalorder %s123, %s137
      %p139 = scmp.eq.s32.totalorder %s29, 0
      %p140 = por %p138, %p139
      %s142 = sadd.s32 %s141, 1
      %p145 = scmp.eq.s32.totalorder %s23, 1
      %p146 = scmp.ne.s32.totalorder %s141, %s143
      %p147 = scmp.eq.s32.totalorder %s23, 0
      %p148 = por %p146, %p147
      %p149 = scmp.ne.s32.totalorder %s141, %s143
      %p150 = scmp.eq.s32.totalorder %s28, 1
      %p151 = por %p149, %p150
      %p152 = scmp.ne.s32.totalorder %s143, %s144
      %p153 = scmp.eq.s32.totalorder %s28, 0
      %p154 = por %p152, %p153
      %p155 = scmp.ne.s32.totalorder %s143, %s144
      %p156 = scmp.eq.s32.totalorder %s29, 1
      %p157 = por %p155, %p156
      %p159 = scmp.ne.s32.totalorder %s144, %s158
      %p160 = scmp.eq.s32.totalorder %s29, 0
      %p161 = por %p159, %p160
      %s163 = sadd.s32 %s162, 1
      %p166 = scmp.eq.s32.totalorder %s23, 1
      %p167 = scmp.ne.s32.totalorder %s162, %s164
      %p168 = scmp.eq.s32.totalorder %s23, 0
      %p169 = por %p167, %p168
      %p170 = scmp.ne.s32.totalorder %s162, %s164
      %p171 = scmp.eq.s32.totalorder %s28, 1
      %p172 = por %p170, %p171
      %p173 = scmp.ne.s32.totalorder %s164, %s165
      %p174 = scmp.eq.s32.totalorder %s28, 0
      %p175 = por %p173, %p174
      %p176 = scmp.ne.s32.totalorder %s164, %s165
      %p177 = scmp.eq.s32.totalorder %s29, 1
      %p178 = por %p176, %p177
      %p180 = scmp.ne.s32.totalorder %s165, %s179
      %p181 = scmp.eq.s32.totalorder %s29, 0
      %p182 = por %p180, %p181
      %s184 = sadd.s32 %s183, 1
      %p187 = scmp.eq.s32.totalorder %s23, 1
      %p188 = scmp.ne.s32.totalorder %s183, %s185
      %p189 = scmp.eq.s32.totalorder %s23, 0
      %p190 = por %p188, %p189
      %p191 = scmp.ne.s32.totalorder %s183, %s185
      %p192 = scmp.eq.s32.totalorder %s28, 1
      %p193 = por %p191, %p192
      %p194 = scmp.ne.s32.totalorder %s185, %s186
      %p195 = scmp.eq.s32.totalorder %s28, 0
      %p196 = por %p194, %p195
      %p197 = scmp.ne.s32.totalorder %s185, %s186
      %p198 = scmp.eq.s32.totalorder %s29, 1
      %p199 = por %p197, %p198
      %p201 = scmp.ne.s32.totalorder %s186, %s200
      %p202 = scmp.eq.s32.totalorder %s29, 0
      %p203 = por %p201, %p202
      %s205 = sadd.s32 %s204, 1
      %p208 = scmp.eq.s32.totalorder %s23, 1
      %p209 = scmp.ne.s32.totalorder %s204, %s206
      %p210 = scmp.eq.s32.totalorder %s23, 0
      %p211 = por %p209, %p210
      %p212 = scmp.ne.s32.totalorder %s204, %s206
      %p213 = scmp.eq.s32.totalorder %s28, 1
      %p214 = por %p212, %p213
      %p215 = scmp.ne.s32.totalorder %s206, %s207
      %p216 = scmp.eq.s32.totalorder %s28, 0
      %p217 = por %p215, %p216
      %p218 = scmp.ne.s32.totalorder %s206, %s207
      %p219 = scmp.eq.s32.totalorder %s29, 1
      %p220 = por %p218, %p219
      %p222 = scmp.ne.s32.totalorder %s207, %s221
      %p223 = scmp.eq.s32.totalorder %s29, 0
      %p224 = por %p222, %p223
      %s226 = sadd.s32 %s225, 1
      %p229 = scmp.eq.s32.totalorder %s23, 1
      %p230 = scmp.ne.s32.totalorder %s225, %s227
      %p231 = scmp.eq.s32.totalorder %s23, 0
      %p232 = por %p230, %p231
      %p233 = scmp.ne.s32.totalorder %s225, %s227
      %p234 = scmp.eq.s32.totalorder %s28, 1
      %p235 = por %p233, %p234
      %p236 = scmp.ne.s32.totalorder %s227, %s228
      %p237 = scmp.eq.s32.totalorder %s28, 0
      %p238 = por %p236, %p237
      %p239 = scmp.ne.s32.totalorder %s227, %s228
      %p240 = scmp.eq.s32.totalorder %s29, 1
      %p241 = por %p239, %p240
      %p243 = scmp.ne.s32.totalorder %s228, %s242
      %p244 = scmp.eq.s32.totalorder %s29, 0
      %p245 = por %p243, %p244
      %s247 = sadd.s32 %s246, 1
      %p250 = scmp.eq.s32.totalorder %s23, 1
      %p251 = scmp.ne.s32.totalorder %s246, %s248
      %p252 = scmp.eq.s32.totalorder %s23, 0
      %p253 = por %p251, %p252
      %p254 = scmp.ne.s32.totalorder %s246, %s248
      %p255 = scmp.eq.s32.totalorder %s28, 1
      %p256 = por %p254, %p255
      %p257 = scmp.ne.s32.totalorder %s248, %s249
      %p258 = scmp.eq.s32.totalorder %s28, 0
      %p259 = por %p257, %p258
      %p260 = scmp.ne.s32.totalorder %s248, %s249
      %p261 = scmp.eq.s32.totalorder %s29, 1
      %p262 = por %p260, %p261
      %p264 = scmp.ne.s32.totalorder %s249, %s263
      %p265 = scmp.eq.s32.totalorder %s29, 0
      %p266 = por %p264, %p265
      %s268 = sadd.s32 %s267, 1
      %p271 = scmp.eq.s32.totalorder %s23, 1
      %p272 = scmp.ne.s32.totalorder %s267, %s269
      %p273 = scmp.eq.s32.totalorder %s23, 0
      %p274 = por %p272, %p273
      %p275 = scmp.ne.s32.totalorder %s267, %s269
      %p276 = scmp.eq.s32.totalorder %s28, 1
      %p277 = por %p275, %p276
      %p278 = scmp.ne.s32.totalorder %s269, %s270
      %p279 = scmp.eq.s32.totalorder %s28, 0
      %p280 = por %p278, %p279
      %p281 = scmp.ne.s32.totalorder %s269, %s270
      %p282 = scmp.eq.s32.totalorder %s29, 1
      %p283 = por %p281, %p282
      %p285 = scmp.ne.s32.totalorder %s270, %s284
      %p286 = scmp.eq.s32.totalorder %s29, 0
      %p287 = por %p285, %p286
      %s289 = sadd.s32 %s288, 1
      %p292 = scmp.eq.s32.totalorder %s23, 1
      %p293 = scmp.ne.s32.totalorder %s288, %s290
      %p294 = scmp.eq.s32.totalorder %s23, 0
      %p295 = por %p293, %p294
      %p296 = scmp.ne.s32.totalorder %s288, %s290
      %p297 = scmp.eq.s32.totalorder %s28, 1
      %p298 = por %p296, %p297
      %p299 = scmp.ne.s32.totalorder %s290, %s291
      %p300 = scmp.eq.s32.totalorder %s28, 0
      %p301 = por %p299, %p300
      %p302 = scmp.ne.s32.totalorder %s290, %s291
      %p303 = scmp.eq.s32.totalorder %s29, 1
      %p304 = por %p302, %p303
      %p306 = scmp.ne.s32.totalorder %s291, %s305
      %p307 = scmp.eq.s32.totalorder %s29, 0
      %p308 = por %p306, %p307
      %s310 = sadd.s32 %s309, 1
      %p313 = scmp.eq.s32.totalorder %s23, 1
      %p314 = scmp.ne.s32.totalorder %s309, %s311
      %p315 = scmp.eq.s32.totalorder %s23, 0
      %p316 = por %p314, %p315
      %p317 = scmp.ne.s32.totalorder %s309, %s311
      %p318 = scmp.eq.s32.totalorder %s28, 1
      %p319 = por %p317, %p318
      %p320 = scmp.ne.s32.totalorder %s311, %s312
      %p321 = scmp.eq.s32.totalorder %s28, 0
      %p322 = por %p320, %p321
      %p323 = scmp.ne.s32.totalorder %s311, %s312
      %p324 = scmp.eq.s32.totalorder %s29, 1
      %p325 = por %p323, %p324
      %p327 = scmp.ne.s32.totalorder %s312, %s326
      %p328 = scmp.eq.s32.totalorder %s29, 0
      %p329 = por %p327, %p328
      %s330 = ssub.s32 %s23, %s30
      %p331 = scmp.eq.s32.totalorder %s330, 0
      %s333 = sadd.s32 %s332, 1
      %s334 = scalar_select %p331, %s332, %s333
      %p337 = pneg %p331
      %p338 = scmp.eq.s32.totalorder %s23, 1
      %p339 = por %p337, %p338
      %p340 = scmp.ne.s32.totalorder %s332, %s335
      %p341 = scmp.eq.s32.totalorder %s23, 0
      %p342 = por %p340, %p341
      %p343 = scmp.ne.s32.totalorder %s332, %s335
      %p344 = scmp.eq.s32.totalorder %s28, 1
      %p345 = por %p343, %p344
      %p346 = scmp.ne.s32.totalorder %s335, %s336
      %p347 = scmp.eq.s32.totalorder %s28, 0
      %p348 = por %p346, %p347
      %p349 = scmp.ne.s32.totalorder %s335, %s336
      %p350 = scmp.eq.s32.totalorder %s29, 1
      %p351 = por %p349, %p350
      %p353 = scmp.ne.s32.totalorder %s336, %s352
      %p354 = scmp.eq.s32.totalorder %s29, 0
      %p355 = por %p353, %p354
      %p356 = scmp.le.s32.totalorder 1, %s23
      %p357 = scmp.lt.s32.totalorder %s23, 3
      %p358 = pnand %p356, %p357
      %p359 = pneg %p358
      // Predicated region
      $region9: #{tpu_custom_call.1} parent=5 // pred_check
        _
      $region10: #{tpu_custom_call.1} parent=5 // pred_check_branch
        %361 = sbr.rel (%p358) target = $region12
      $region11: #{tpu_custom_call.1} parent=5 // pred_region
        %s362 = ssub.s32 %s23, 1
        // Predicated region
        $region13: #{tpu_custom_call.1} parent=11 // pred_check
          %p363 = pneg %p70
        $region14: #{tpu_custom_call.1} parent=11 // pred_check_branch
          %365 = sbr.rel (%p363) target = $region16
        $region15: #{tpu_custom_call.1} parent=11 // pred_region
          _
        $region16: #{tpu_custom_call.1} parent=11 // pred_fallthru
          _
        // Predicated region
        $region17: #{tpu_custom_call.1} parent=11 // pred_check
          %p366 = pneg %p91
        $region18: #{tpu_custom_call.1} parent=11 // pred_check_branch
          %368 = sbr.rel (%p366) target = $region20
        $region19: #{tpu_custom_call.1} parent=11 // pred_region
          _
        $region20: #{tpu_custom_call.1} parent=11 // pred_fallthru
          _
        // Predicated region
        $region21: #{tpu_custom_call.1} parent=11 // pred_check
          %p369 = pneg %p112
        $region22: #{tpu_custom_call.1} parent=11 // pred_check_branch
          %371 = sbr.rel (%p369) target = $region24
        $region23: #{tpu_custom_call.1} parent=11 // pred_region
          _
        $region24: #{tpu_custom_call.1} parent=11 // pred_fallthru
          _
        // Predicated region
        $region25: #{tpu_custom_call.1} parent=11 // pred_check
          %p372 = pneg %p133
        $region26: #{tpu_custom_call.1} parent=11 // pred_check_branch
          %374 = sbr.rel (%p372) target = $region28
        $region27: #{tpu_custom_call.1} parent=11 // pred_region
          _
        $region28: #{tpu_custom_call.1} parent=11 // pred_fallthru
          _
        // Predicated region
        $region29: #{tpu_custom_call.1} parent=11 // pred_check
          %p375 = pneg %p154
        $region30: #{tpu_custom_call.1} parent=11 // pred_check_branch
          %377 = sbr.rel (%p375) target = $region32
        $region31: #{tpu_custom_call.1} parent=11 // pred_region
          _
        $region32: #{tpu_custom_call.1} parent=11 // pred_fallthru
          _
        // Predicated region
        $region33: #{tpu_custom_call.1} parent=11 // pred_check
          %p378 = pneg %p175
        $region34: #{tpu_custom_call.1} parent=11 // pred_check_branch
          %380 = sbr.rel (%p378) target = $region36
        $region35: #{tpu_custom_call.1} parent=11 // pred_region
          _
        $region36: #{tpu_custom_call.1} parent=11 // pred_fallthru
          _
        // Predicated region
        $region37: #{tpu_custom_call.1} parent=11 // pred_check
          %p381 = pneg %p196
        $region38: #{tpu_custom_call.1} parent=11 // pred_check_branch
          %383 = sbr.rel (%p381) target = $region40
        $region39: #{tpu_custom_call.1} parent=11 // pred_region
          _
        $region40: #{tpu_custom_call.1} parent=11 // pred_fallthru
          _
        // Predicated region
        $region41: #{tpu_custom_call.1} parent=11 // pred_check
          %p384 = pneg %p217
        $region42: #{tpu_custom_call.1} parent=11 // pred_check_branch
          %386 = sbr.rel (%p384) target = $region44
        $region43: #{tpu_custom_call.1} parent=11 // pred_region
          _
        $region44: #{tpu_custom_call.1} parent=11 // pred_fallthru
          _
        // Predicated region
        $region45: #{tpu_custom_call.1} parent=11 // pred_check
          %p387 = pneg %p238
        $region46: #{tpu_custom_call.1} parent=11 // pred_check_branch
          %389 = sbr.rel (%p387) target = $region48
        $region47: #{tpu_custom_call.1} parent=11 // pred_region
          _
        $region48: #{tpu_custom_call.1} parent=11 // pred_fallthru
          _
        // Predicated region
        $region49: #{tpu_custom_call.1} parent=11 // pred_check
          %p390 = pneg %p259
        $region50: #{tpu_custom_call.1} parent=11 // pred_check_branch
          %392 = sbr.rel (%p390) target = $region52
        $region51: #{tpu_custom_call.1} parent=11 // pred_region
          _
        $region52: #{tpu_custom_call.1} parent=11 // pred_fallthru
          _
        // Predicated region
        $region53: #{tpu_custom_call.1} parent=11 // pred_check
          %p393 = pneg %p280
        $region54: #{tpu_custom_call.1} parent=11 // pred_check_branch
          %395 = sbr.rel (%p393) target = $region56
        $region55: #{tpu_custom_call.1} parent=11 // pred_region
          _
        $region56: #{tpu_custom_call.1} parent=11 // pred_fallthru
          _
        // Predicated region
        $region57: #{tpu_custom_call.1} parent=11 // pred_check
          %p396 = pneg %p301
        $region58: #{tpu_custom_call.1} parent=11 // pred_check_branch
          %398 = sbr.rel (%p396) target = $region60
        $region59: #{tpu_custom_call.1} parent=11 // pred_region
          _
        $region60: #{tpu_custom_call.1} parent=11 // pred_fallthru
          _
        // Predicated region
        $region61: #{tpu_custom_call.1} parent=11 // pred_check
          %p399 = pneg %p322
        $region62: #{tpu_custom_call.1} parent=11 // pred_check_branch
          %401 = sbr.rel (%p399) target = $region64
        $region63: #{tpu_custom_call.1} parent=11 // pred_region
          _
        $region64: #{tpu_custom_call.1} parent=11 // pred_fallthru
          _
      $region12: #{tpu_custom_call.1} parent=5 // pred_fallthru
        _
      %p402 = scmp.lt.s32.totalorder %s23, 2
      // Predicated region
      $region65: #{tpu_custom_call.1} parent=5 // pred_check
        %p403 = pneg %p402
      $region66: #{tpu_custom_call.1} parent=5 // pred_check_branch
        %405 = sbr.rel (%p403) target = $region68
      $region67: #{tpu_custom_call.1} parent=5 // pred_region
        // Predicated region
        $region69: #{tpu_custom_call.1} parent=67 // pred_check
          %p406 = pneg %p43
        $region70: #{tpu_custom_call.1} parent=67 // pred_check_branch
          %408 = sbr.rel (%p406) target = $region72
        $region71: #{tpu_custom_call.1} parent=67 // pred_region
          %s409 = smul.u32 2, %s23
          %p410 = scmp.lt.s32.totalorder %s409, 3
          %s411 = scalar_select %p410, %s409, 3
          %s412 = smul.addr %s411, 4
          %s413 = scalar_lea.vmem %s0, %s412
          %s414 = smul.u32 2, %s23
        $region72: #{tpu_custom_call.1} parent=67 // pred_fallthru
          _
      $region68: #{tpu_custom_call.1} parent=5 // pred_fallthru
        _
      %p415 = scmp.le.s32.totalorder 1, %s23
      %p416 = scmp.lt.s32.totalorder %s23, 3
      %p417 = pnand %p415, %p416
      %p418 = pneg %p417
      // Predicated region
      $region73: #{tpu_custom_call.1} parent=5 // pred_check
        _
      $region74: #{tpu_custom_call.1} parent=5 // pred_check_branch
        %420 = sbr.rel (%p417) target = $region76
      $region75: #{tpu_custom_call.1} parent=5 // pred_region
        %s421 = ssub.s32 %s23, 1
        %s422 = smul.u32 2, %s28
        %p423 = scmp.lt.s32.totalorder %s422, 3
        %s424 = scalar_select %p423, %s422, 3
        %s425 = smul.addr %s424, 4
        %s426 = scalar_lea.vmem %s0, %s425
        %p427 = pneg %p49
        %p428 = pneg %p46
        %p429 = pneg %p70
        %p430 = pneg %p67
        %p431 = pneg %p91
        %p432 = pneg %p88
        %p433 = pneg %p112
        %p434 = pneg %p109
        %p435 = pneg %p133
        %p436 = pneg %p130
        %p437 = pneg %p154
        %p438 = pneg %p151
        %p439 = pneg %p175
        %p440 = pneg %p172
        %p441 = pneg %p196
        %p442 = pneg %p193
        %p443 = pneg %p217
        %p444 = pneg %p214
        %p445 = pneg %p238
        %p446 = pneg %p235
        %p447 = pneg %p259
        %p448 = pneg %p256
        %p449 = pneg %p280
        %p450 = pneg %p277
        %p451 = pneg %p301
        %p452 = pneg %p298
        %p453 = pneg %p322
        %p454 = pneg %p319
        %p455 = pneg %p348
        %p456 = pneg %p345
        %s457 = sand.u32 %s335, 1
        %s458 = scalar_lea.sflag [#allocation3], %s457
        %s459 = sand.u32 %s335, 1
        %s460 = smul.addr %s459, 16
        %s461 = scalar_lea.vmem [#allocation2], %s460
        %s462 = smul.u32 2, %s28
        %p463 = scmp.lt.s32.totalorder %s462, 3
        %s464 = scalar_select %p463, %s462, 3
        %s465 = smul.addr %s464, 4
        %s466 = scalar_lea.vmem %s0, %s465
        %s467 = smul.u32 2, %s28
        %s468 = smul.u32 2, %s28
        %v470 = vld [vmem:[%s2] sm:$0x1]
        %v471 = vld [vmem:[%s2 + $0x1] sm:$0x1]
        %v472 = vld [vmem:[%s2 + $0x2] sm:$0x1]
        %v473 = vld [vmem:[%s2 + $0x8] sm:$0xff]
        %v474 = vld [vmem:[%s2 + $0x10] sm:$0xff]
        %v475 = vld [vmem:[%s466] sm:$0xf]
        %v476 = vld [vmem:[%s466 + $0x4] sm:$0xf]
        %v477 = vld [vmem:[%s1] sm:$0xf]
        %v478 = vld [vmem:[%s1 + $0x4] sm:$0xf]
        %v479 = vld [vmem:[%s1 + $0x8] sm:$0xf]
        %v480 = vld [vmem:[%s1 + $0xc] sm:$0xf]
        %v481 = vld [vmem:[%s1 + $0x10] sm:$0xf]
        %v482 = vld [vmem:[%s1 + $0x14] sm:$0xf]
        %v485 = vunpack.c.l.b16 %v475
        %v486 = vunpack.c.l.b16 %v476
        %v487 = vpack.c.b16 %v486, %v485
        %v494 = vunpack.c.l.b16 %v477
        %v495 = vunpack.c.l.b16 %v478
        %v496 = vunpack.c.l.b16 %v479
        %v497 = vunpack.c.l.b16 %v480
        %v498 = vunpack.c.l.b16 %v481
        %v499 = vunpack.c.l.b16 %v482
        %v500 = vpack.c.b16 %v495, %v494
        %v501 = vpack.c.b16 %v497, %v496
        %v502 = vpack.c.b16 %v499, %v498
        %vm506 = vcmask 392192
        %v508 = vsel %vm506, %v487, 0
        %510 = vmatprep.subr.bf16.mxu0 0
        %511 = vmatpush1.bf16.msra.mxu0 %v500
        %512 = vmatprep.subr.bf16.mxu0 0
        %513 = vmatpush1.bf16.msra.mxu0 %v501
        %514 = vmatprep.subr.bf16.mxu0 0
        %515 = vmatpush1.bf16.msra.mxu0 %v502
        %516 = vmatprep.subr.bf16.mxu0 0
        %517 = vmatpush1.bf16.msra.mxu0 0
        %518 = vmatprep.subr.bf16.mxu0 0
        %519 = vmatpush1.bf16.msra.mxu0 0
        %520 = vmatprep.subr.bf16.mxu0 0
        %521 = vmatpush1.bf16.msra.mxu0 0
        %522 = vmatprep.subr.bf16.mxu0 0
        %523 = vmatpush1.bf16.msra.mxu0 0
        %524 = vmatprep.subr.bf16.mxu0 0
        %525 = vmatpush1.bf16.msra.mxu0 0
        %526 = vmatprep.subr.bf16.mxu0 0
        %527 = vmatpush1.bf16.msra.mxu0 0
        %528 = vmatprep.subr.bf16.mxu0 0
        %529 = vmatpush1.bf16.msra.mxu0 0
        %530 = vmatprep.subr.bf16.mxu0 0
        %531 = vmatpush1.bf16.msra.mxu0 0
        %532 = vmatprep.subr.bf16.mxu0 0
        %533 = vmatpush1.bf16.msra.mxu0 0
        %534 = vmatprep.subr.bf16.mxu0 0
        %535 = vmatpush1.bf16.msra.mxu0 0
        %536 = vmatprep.subr.bf16.mxu0 0
        %537 = vmatpush1.bf16.msra.mxu0 0
        %538 = vmatprep.subr.bf16.mxu0 0
        %539 = vmatpush1.bf16.msra.mxu0 0
        %540 = vmatprep.subr.bf16.mxu0 0
        %541 = vmatpush1.bf16.msra.mxu0 0
        %542 = vmatprep.mubr.bf16.mxu0 0
        %543 = vmatmul.mubr.bf16.gmra.mrb[0].mxu0 %v508
        %v544 = vpop.f32.mrb[0].mxu0
        %v545 = vadd.f32 %v473, %v544
        %v546 = vpop.f32.mrb[0].mxu0
        %v547 = vpop.f32.mrb[0].mxu0
        %v548 = vadd.f32 %v474, %v547
        %v549 = vpop.f32.mrb[0].mxu0
        %550 = vdwg.mxu0
        %v551 = vld [vmem:[%s13] sm:$0xff]
        %vm552 = vcmask 261120
        %v553 = vsel %vm552, %v545, 0.0
        %554 = vadd.xlane.f32.xlu0 %v553
        %v555 = vpop.xlane.xlu0 %554
        %v556 = vsel %vm552, %v548, 0.0
        %557 = vadd.xlane.f32.xlu0 %v556
        %v558 = vpop.xlane.xlu0 %557
        %vm559 = vcmask 253952
        %v560 = vsel %vm559, %v472, 0.0
        %561 = vadd.xlane.f32.xlu0 %v560
        %v562 = vpop.xlane.xlu0 %561
        %v563 = vrcp.pop 32.0
        %v564 = vmul.f32 %v555, %v563
        %v565 = vmul.f32 %v558, %v563
        %v566 = vmul.f32 %v562, %v563
        %v567 = vsub.f32 %v545, %v564
        %v568 = vsub.f32 %v548, %v565
        %v569 = vsub.f32 %v472, %v566
        %v570 = vmul.f32 %v567, %v567
        %v571 = vmul.f32 %v568, %v568
        %v572 = vmul.f32 %v569, %v569
        %v573 = vsel %vm552, %v570, 0.0
        %574 = vadd.xlane.f32.xlu0 %v573
        %v575 = vpop.xlane.xlu0 %574
        %v576 = vsel %vm552, %v571, 0.0
        %577 = vadd.xlane.f32.xlu0 %v576
        %v578 = vpop.xlane.xlu0 %577
        %v579 = vsel %vm559, %v572, 0.0
        %580 = vadd.xlane.f32.xlu0 %v579
        %v581 = vpop.xlane.xlu0 %580
        %v582 = vmul.f32 %v575, %v563
        %v583 = vmul.f32 %v578, %v563
        %v584 = vmul.f32 %v581, %v563
        %v585 = vadd.f32 %v582, 1e-06
        %v586 = vadd.f32 %v583, 1e-06
        %v587 = vadd.f32 %v584, 1e-06
        %v588 = vrsqrt.pop %v585
        %v589 = vrsqrt.pop %v586
        %v590 = vrsqrt.pop %v587
        %v591 = vmul.f32 %v567, %v588
        %v592 = vmul.f32 %v568, %v589
        %v593 = vmul.f32 %v569, %v590
        %v594 = vlaneseq
        %v595 = vshrl.u32 %v594, 7
        %v596 = vsub.s32 0, %v595
        %v597 = vrot.slane %v551, %v596
        %v598 = vmul.f32 %v591, %v597
        %v599 = vmul.f32 %v592, %v597
        %v600 = vmul.f32 %v593, %v597
        %v601 = vlaneseq
        %v602 = vshrl.u32 %v601, 7
        %v603 = vsub.s32 1, %v602
        %v604 = vrot.slane %v551, %v603
        %v605 = vadd.f32 %v598, %v604
        %v606 = vadd.f32 %v599, %v604
        %v607 = vadd.f32 %v600, %v604
        %v608 = vpack.c.bf16 %v606, %v605
        %v609 = vpack.c.bf16 %v607, %v607
        %v610 = vld [vmem:[%s3] sm:$0xf]
        %v611 = vld [vmem:[%s3 + $0x4] sm:$0xf]
        %v612 = vld [vmem:[%s3 + $0x8] sm:$0xf]
        %v613 = vld [vmem:[%s3 + $0xc] sm:$0xf]
        %v614 = vld [vmem:[%s6] sm:$0x1]
        %v616 = vlaneseq
        %v617 = vshrl.u32 %v616, 7
        %v618 = vsub.s32 0, %v617
        %v619 = vrot.slane %v614, %v618
        %v625 = vunpack.c.l.b16 %v610
        %v626 = vunpack.c.l.b16 %v611
        %v627 = vunpack.c.l.b16 %v612
        %v628 = vunpack.c.l.b16 %v613
        %v629 = vpack.c.b16 %v626, %v625
        %v630 = vpack.c.b16 %v628, %v627
        %v634 = vsel %vm552, %v608, 0
        %v637 = vsel %vm552, %v609, 0
        %639 = vmatprep.subr.bf16.mxu0 0
        %640 = vmatpush1.bf16.msra.mxu0 %v629
        %641 = vmatprep.subr.bf16.mxu0 0
        %642 = vmatpush1.bf16.msra.mxu0 %v630
        %643 = vmatprep.subr.bf16.mxu0 0
        %644 = vmatpush1.bf16.msra.mxu0 0
        %645 = vmatprep.subr.bf16.mxu0 0
        %646 = vmatpush1.bf16.msra.mxu0 0
        %647 = vmatprep.subr.bf16.mxu0 0
        %648 = vmatpush1.bf16.msra.mxu0 0
        %649 = vmatprep.subr.bf16.mxu0 0
        %650 = vmatpush1.bf16.msra.mxu0 0
        %651 = vmatprep.subr.bf16.mxu0 0
        %652 = vmatpush1.bf16.msra.mxu0 0
        %653 = vmatprep.subr.bf16.mxu0 0
        %654 = vmatpush1.bf16.msra.mxu0 0
        %655 = vmatprep.subr.bf16.mxu0 0
        %656 = vmatpush1.bf16.msra.mxu0 0
        %657 = vmatprep.subr.bf16.mxu0 0
        %658 = vmatpush1.bf16.msra.mxu0 0
        %659 = vmatprep.subr.bf16.mxu0 0
        %660 = vmatpush1.bf16.msra.mxu0 0
        %661 = vmatprep.subr.bf16.mxu0 0
        %662 = vmatpush1.bf16.msra.mxu0 0
        %663 = vmatprep.subr.bf16.mxu0 0
        %664 = vmatpush1.bf16.msra.mxu0 0
        %665 = vmatprep.subr.bf16.mxu0 0
        %666 = vmatpush1.bf16.msra.mxu0 0
        %667 = vmatprep.subr.bf16.mxu0 0
        %668 = vmatpush1.bf16.msra.mxu0 0
        %669 = vmatprep.subr.bf16.mxu0 0
        %670 = vmatpush1.bf16.msra.mxu0 0
        %671 = vmatprep.mubr.bf16.mxu0 0
        %672 = vmatmul.mubr.bf16.gmra.mrb[0].mxu0 %v634
        %v673 = vpop.f32.mrb[0].mxu0
        %v674 = vadd.f32 %v619, %v673
        %v675 = vpop.f32.mrb[0].mxu0
        %v676 = vpop.f32.mrb[0].mxu0
        %v677 = vadd.f32 %v619, %v676
        %v678 = vpop.f32.mrb[0].mxu0
        %679 = vmatprep.mubr.bf16.mxu0 0
        %680 = vmatmul.mubr.bf16.gmra.mrb[0].mxu0 %v637
        %v681 = vpop.f32.mrb[0].mxu0
        %v682 = vadd.f32 %v619, %v681
        %v683 = vpop.f32.mrb[0].mxu0
        %v684 = vpop.f32.mrb[0].mxu0
        %v685 = vpop.f32.mrb[0].mxu0
        %686 = vdwg.mxu0
        %v687 = vld [vmem:[%s4] sm:$0xf]
        %v688 = vld [vmem:[%s4 + $0x4] sm:$0xf]
        %v689 = vld [vmem:[%s4 + $0x8] sm:$0xf]
        %v690 = vld [vmem:[%s4 + $0xc] sm:$0xf]
        %v691 = vld [vmem:[%s7] sm:$0x1]
        %v693 = vlaneseq
        %v694 = vshrl.u32 %v693, 7
        %v695 = vsub.s32 0, %v694
        %v696 = vrot.slane %v691, %v695
        %v702 = vunpack.c.l.b16 %v687
        %v703 = vunpack.c.l.b16 %v688
        %v704 = vunpack.c.l.b16 %v689
        %v705 = vunpack.c.l.b16 %v690
        %v706 = vpack.c.b16 %v703, %v702
        %v707 = vpack.c.b16 %v705, %v704
        %710 = vmatprep.subr.bf16.mxu0 0
        %711 = vmatpush1.bf16.msra.mxu0 %v706
        %712 = vmatprep.subr.bf16.mxu0 0
        %713 = vmatpush1.bf16.msra.mxu0 %v707
        %714 = vmatprep.subr.bf16.mxu0 0
        %715 = vmatpush1.bf16.msra.mxu0 0
        %716 = vmatprep.subr.bf16.mxu0 0
        %717 = vmatpush1.bf16.msra.mxu0 0
        %718 = vmatprep.subr.bf16.mxu0 0
        %719 = vmatpush1.bf16.msra.mxu0 0
        %720 = vmatprep.subr.bf16.mxu0 0
        %721 = vmatpush1.bf16.msra.mxu0 0
        %722 = vmatprep.subr.bf16.mxu0 0
        %723 = vmatpush1.bf16.msra.mxu0 0
        %724 = vmatprep.subr.bf16.mxu0 0
        %725 = vmatpush1.bf16.msra.mxu0 0
        %726 = vmatprep.subr.bf16.mxu0 0
        %727 = vmatpush1.bf16.msra.mxu0 0
        %728 = vmatprep.subr.bf16.mxu0 0
        %729 = vmatpush1.bf16.msra.mxu0 0
        %730 = vmatprep.subr.bf16.mxu0 0
        %731 = vmatpush1.bf16.msra.mxu0 0
        %732 = vmatprep.subr.bf16.mxu0 0
        %733 = vmatpush1.bf16.msra.mxu0 0
        %734 = vmatprep.subr.bf16.mxu0 0
        %735 = vmatpush1.bf16.msra.mxu0 0
        %736 = vmatprep.subr.bf16.mxu0 0
        %737 = vmatpush1.bf16.msra.mxu0 0
        %738 = vmatprep.subr.bf16.mxu0 0
        %739 = vmatpush1.bf16.msra.mxu0 0
        %740 = vmatprep.subr.bf16.mxu0 0
        %741 = vmatpush1.bf16.msra.mxu0 0
        %742 = vmatprep.mubr.bf16.mxu0 0
        %743 = vmatmul.mubr.bf16.gmra.mrb[0].mxu0 %v634
        %v744 = vpop.f32.mrb[0].mxu0
        %v745 = vadd.f32 %v696, %v744
        %v746 = vpop.f32.mrb[0].mxu0
        %v747 = vpop.f32.mrb[0].mxu0
        %v748 = vadd.f32 %v696, %v747
        %v749 = vpop.f32.mrb[0].mxu0
        %750 = vmatprep.mubr.bf16.mxu0 0
        %751 = vmatmul.mubr.bf16.gmra.mrb[0].mxu0 %v637
        %v752 = vpop.f32.mrb[0].mxu0
        %v753 = vadd.f32 %v696, %v752
        %v754 = vpop.f32.mrb[0].mxu0
        %v755 = vpop.f32.mrb[0].mxu0
        %v756 = vpop.f32.mrb[0].mxu0
        %757 = vdwg.mxu0
        %v758 = vld [vmem:[%s5] sm:$0xf]
        %v759 = vld [vmem:[%s5 + $0x4] sm:$0xf]
        %v760 = vld [vmem:[%s5 + $0x8] sm:$0xf]
        %v761 = vld [vmem:[%s5 + $0xc] sm:$0xf]
        %v762 = vld [vmem:[%s8] sm:$0x1]
        %v764 = vlaneseq
        %v765 = vshrl.u32 %v764, 7
        %v766 = vsub.s32 0, %v765
        %v767 = vrot.slane %v762, %v766
        %v773 = vunpack.c.l.b16 %v758
        %v774 = vunpack.c.l.b16 %v759
        %v775 = vunpack.c.l.b16 %v760
        %v776 = vunpack.c.l.b16 %v761
        %v777 = vpack.c.b16 %v774, %v773
        %v778 = vpack.c.b16 %v776, %v775
        %781 = vmatprep.subr.bf16.mxu0 0
        %782 = vmatpush1.bf16.msra.mxu0 %v777
        %783 = vmatprep.subr.bf16.mxu0 0
        %784 = vmatpush1.bf16.msra.mxu0 %v778
        %785 = vmatprep.subr.bf16.mxu0 0
        %786 = vmatpush1.bf16.msra.mxu0 0
        %787 = vmatprep.subr.bf16.mxu0 0
        %788 = vmatpush1.bf16.msra.mxu0 0
        %789 = vmatprep.subr.bf16.mxu0 0
        %790 = vmatpush1.bf16.msra.mxu0 0
        %791 = vmatprep.subr.bf16.mxu0 0
        %792 = vmatpush1.bf16.msra.mxu0 0
        %793 = vmatprep.subr.bf16.mxu0 0
        %794 = vmatpush1.bf16.msra.mxu0 0
        %795 = vmatprep.subr.bf16.mxu0 0
        %796 = vmatpush1.bf16.msra.mxu0 0
        %797 = vmatprep.subr.bf16.mxu0 0
        %798 = vmatpush1.bf16.msra.mxu0 0
        %799 = vmatprep.subr.bf16.mxu0 0
        %800 = vmatpush1.bf16.msra.mxu0 0
        %801 = vmatprep.subr.bf16.mxu0 0
        %802 = vmatpush1.bf16.msra.mxu0 0
        %803 = vmatprep.subr.bf16.mxu0 0
        %804 = vmatpush1.bf16.msra.mxu0 0
        %805 = vmatprep.subr.bf16.mxu0 0
        %806 = vmatpush1.bf16.msra.mxu0 0
        %807 = vmatprep.subr.bf16.mxu0 0
        %808 = vmatpush1.bf16.msra.mxu0 0
        %809 = vmatprep.subr.bf16.mxu0 0
        %810 = vmatpush1.bf16.msra.mxu0 0
        %811 = vmatprep.subr.bf16.mxu0 0
        %812 = vmatpush1.bf16.msra.mxu0 0
        %813 = vmatprep.mubr.bf16.mxu0 0
        %814 = vmatmul.mubr.bf16.gmra.mrb[0].mxu0 %v634
        %v815 = vpop.f32.mrb[0].mxu0
        %v816 = vadd.f32 %v767, %v815
        %v817 = vpop.f32.mrb[0].mxu0
        %v818 = vpop.f32.mrb[0].mxu0
        %v819 = vadd.f32 %v767, %v818
        %v820 = vpop.f32.mrb[0].mxu0
        %821 = vmatprep.mubr.bf16.mxu0 0
        %822 = vmatmul.mubr.bf16.gmra.mrb[0].mxu0 %v637
        %v823 = vpop.f32.mrb[0].mxu0
        %v824 = vadd.f32 %v767, %v823
        %v825 = vpop.f32.mrb[0].mxu0
        %v826 = vpop.f32.mrb[0].mxu0
        %v827 = vpop.f32.mrb[0].mxu0
        %828 = vdwg.mxu0
        %v829 = vpack.c.bf16 %v677, %v674
        %v830 = vpack.c.bf16 %v682, %v682
        %v831 = vpack.c.bf16 %v748, %v745
        %v832 = vpack.c.bf16 %v753, %v753
        %vm833 = vcmask 64512
        %v835 = vsel %vm833, %v829, 0
        %v838 = vsel %vm833, %v830, 0
        %v841 = vsel %vm833, %v831, 0
        %v844 = vsel %vm833, %v832, 0
        %846 = vmatprep.subr.bf16.mxu0 0
        %847 = vmatpush1.bf16.xpose.msra.mxu0 %v841
        %848 = vmatprep.subr.bf16.mxu0 0
        %849 = vmatpush1.bf16.xpose.msra.mxu0 %v844
        %850 = vmatprep.subr.bf16.mxu0 0
        %851 = vmatpush1.bf16.xpose.msra.mxu0 0
        %852 = vmatprep.subr.bf16.mxu0 0
        %853 = vmatpush1.bf16.xpose.msra.mxu0 0
        %854 = vmatprep.subr.bf16.mxu0 0
        %855 = vmatpush1.bf16.xpose.msra.mxu0 0
        %856 = vmatprep.subr.bf16.mxu0 0
        %857 = vmatpush1.bf16.xpose.msra.mxu0 0
        %858 = vmatprep.subr.bf16.mxu0 0
        %859 = vmatpush1.bf16.xpose.msra.mxu0 0
        %860 = vmatprep.subr.bf16.mxu0 0
        %861 = vmatpush1.bf16.xpose.msra.mxu0 0
        %862 = vmatprep.subr.bf16.mxu0 0
        %863 = vmatpush1.bf16.xpose.msra.mxu0 0
        %864 = vmatprep.subr.bf16.mxu0 0
        %865 = vmatpush1.bf16.xpose.msra.mxu0 0
        %866 = vmatprep.subr.bf16.mxu0 0
        %867 = vmatpush1.bf16.xpose.msra.mxu0 0
        %868 = vmatprep.subr.bf16.mxu0 0
        %869 = vmatpush1.bf16.xpose.msra.mxu0 0
        %870 = vmatprep.subr.bf16.mxu0 0
        %871 = vmatpush1.bf16.xpose.msra.mxu0 0
        %872 = vmatprep.subr.bf16.mxu0 0
        %873 = vmatpush1.bf16.xpose.msra.mxu0 0
        %874 = vmatprep.subr.bf16.mxu0 0
        %875 = vmatpush1.bf16.xpose.msra.mxu0 0
        %876 = vmatprep.subr.bf16.mxu0 0
        %877 = vmatpush1.bf16.xpose.msra.mxu0 0
        %878 = vmatprep.mubr.bf16.mxu0 0
        %879 = vmatmul.mubr.bf16.gmra.mrb[0].mxu0 %v835
        %v880 = vpop.f32.mrb[0].mxu0
        %v881 = vadd.f32 0.0, %v880
        %v882 = vpop.f32.mrb[0].mxu0
        %v883 = vpop.f32.mrb[0].mxu0
        %v884 = vadd.f32 0.0, %v883
        %v885 = vpop.f32.mrb[0].mxu0
        %886 = vmatprep.mubr.bf16.mxu0 0
        %887 = vmatmul.mubr.bf16.gmra.mrb[0].mxu0 %v838
        %v888 = vpop.f32.mrb[0].mxu0
        %v889 = vadd.f32 0.0, %v888
        %v890 = vpop.f32.mrb[0].mxu0
        %v891 = vpop.f32.mrb[0].mxu0
        %v892 = vpop.f32.mrb[0].mxu0
        %893 = vdwg.mxu0
        %vm894 = vcmask 138240
        %v895 = vsel %vm894, %v881, -inf
        %896 = vmax.xlane.f32.xlu0 %v895
        %v897 = vpop.xlane.xlu0 %896
        %v898 = vsel %vm894, %v884, -inf
        %899 = vmax.xlane.f32.xlu0 %v898
        %v900 = vpop.xlane.xlu0 %899
        %vm901 = vcmask 131072
        %v902 = vsel %vm901, %v889, -inf
        %903 = vmax.xlane.f32.xlu0 %v902
        %v904 = vpop.xlane.xlu0 %903
        %v905 = vsub.f32 %v881, %v897
        %v906 = vsub.f32 %v884, %v900
        %v907 = vsub.f32 %v889, %v904
        %v908 = vmul.f32 %v905, 1.442695
        %v909 = vpow.pop %v908
        %v910 = vmul.f32 %v906, 1.442695
        %v911 = vpow.pop %v910
        %v912 = vmul.f32 %v907, 1.442695
        %v913 = vpow.pop %v912
        %v914 = vsel %vm894, %v909, 0.0
        %915 = vadd.xlane.f32.xlu0 %v914
        %v916 = vpop.xlane.xlu0 %915
        %v917 = vsel %vm894, %v911, 0.0
        %918 = vadd.xlane.f32.xlu0 %v917
        %v919 = vpop.xlane.xlu0 %918
        %v920 = vsel %vm901, %v913, 0.0
        %921 = vadd.xlane.f32.xlu0 %v920
        %v922 = vpop.xlane.xlu0 %921
        %v923 = vrcp.pop %v916
        %v924 = vrcp.pop %v919
        %v925 = vrcp.pop %v922
        %v926 = vpack.c.bf16 %v911, %v909
        %v927 = vpack.c.bf16 %v913, %v913
        %v928 = vpack.c.bf16 %v819, %v816
        %v929 = vpack.c.bf16 %v824, %v824
        %v931 = vsel %vm894, %v926, 0
        %v934 = vsel %vm894, %v927, 0
        %vm936 = vcmask 1040384
        %v937 = vsel 0, 4294967295, 65535
        %v938 = vsel %vm936, %v937, 0
        %v940 = vand.u32 %v929, %v938
        %942 = vmatprep.subr.bf16.mxu0 0
        %943 = vmatpush1.bf16.msra.mxu0 %v928
        %944 = vmatprep.subr.bf16.mxu0 0
        %945 = vmatpush1.bf16.msra.mxu0 %v940
        %946 = vmatprep.subr.bf16.mxu0 0
        %947 = vmatpush1.bf16.msra.mxu0 0
        %948 = vmatprep.subr.bf16.mxu0 0
        %949 = vmatpush1.bf16.msra.mxu0 0
        %950 = vmatprep.subr.bf16.mxu0 0
        %951 = vmatpush1.bf16.msra.mxu0 0
        %952 = vmatprep.subr.bf16.mxu0 0
        %953 = vmatpush1.bf16.msra.mxu0 0
        %954 = vmatprep.subr.bf16.mxu0 0
        %955 = vmatpush1.bf16.msra.mxu0 0
        %956 = vmatprep.subr.bf16.mxu0 0
        %957 = vmatpush1.bf16.msra.mxu0 0
        %958 = vmatprep.subr.bf16.mxu0 0
        %959 = vmatpush1.bf16.msra.mxu0 0
        %960 = vmatprep.subr.bf16.mxu0 0
        %961 = vmatpush1.bf16.msra.mxu0 0
        %962 = vmatprep.subr.bf16.mxu0 0
        %963 = vmatpush1.bf16.msra.mxu0 0
        %964 = vmatprep.subr.bf16.mxu0 0
        %965 = vmatpush1.bf16.msra.mxu0 0
        %966 = vmatprep.subr.bf16.mxu0 0
        %967 = vmatpush1.bf16.msra.mxu0 0
        %968 = vmatprep.subr.bf16.mxu0 0
        %969 = vmatpush1.bf16.msra.mxu0 0
        %970 = vmatprep.subr.bf16.mxu0 0
        %971 = vmatpush1.bf16.msra.mxu0 0
        %972 = vmatprep.subr.bf16.mxu0 0
        %973 = vmatpush1.bf16.msra.mxu0 0
        %974 = vmatprep.mubr.bf16.mxu0 0
        %975 = vmatmul.mubr.bf16.gmra.mrb[0].mxu0 %v931
        %v976 = vpop.f32.mrb[0].mxu0
        %v977 = vadd.f32 0.0, %v976
        %v978 = vpop.f32.mrb[0].mxu0
        %v979 = vpop.f32.mrb[0].mxu0
        %v980 = vadd.f32 0.0, %v979
        %v981 = vpop.f32.mrb[0].mxu0
        %982 = vmatprep.mubr.bf16.mxu0 0
        %983 = vmatmul.mubr.bf16.gmra.mrb[0].mxu0 %v934
        %v984 = vpop.f32.mrb[0].mxu0
        %v985 = vadd.f32 0.0, %v984
        %v986 = vpop.f32.mrb[0].mxu0
        %v987 = vpop.f32.mrb[0].mxu0
        %v988 = vpop.f32.mrb[0].mxu0
        %989 = vdwg.mxu0
        %v990 = vmul.f32 %v977, %v923
        %v991 = vmul.f32 %v980, %v924
        %v992 = vmul.f32 %v985, %v925
        %v993 = vpack.c.bf16 %v991, %v990
        %v994 = vpack.c.bf16 %v992, %v992
        %v995 = vld [vmem:[%s9] sm:$0xf]
        %s996 = scalar_lea.vmem %s3, 16
        %v997 = vld [vmem:[%s996] sm:$0xf]
        %v998 = vld [vmem:[%s996 + $0x4] sm:$0xf]
        %v999 = vld [vmem:[%s996 + $0x8] sm:$0xf]
        %v1000 = vld [vmem:[%s996 + $0xc] sm:$0xf]
        %s1001 = scalar_lea.vmem %s6, 1
        %v1002 = vld [vmem:[%s1001] sm:$0x1]
        %v1004 = vlaneseq
        %v1005 = vshrl.u32 %v1004, 7
        %v1006 = vsub.s32 0, %v1005
        %v1007 = vrot.slane %v1002, %v1006
        %v1013 = vunpack.c.l.b16 %v997
        %v1014 = vunpack.c.l.b16 %v998
        %v1015 = vunpack.c.l.b16 %v999
        %v1016 = vunpack.c.l.b16 %v1000
        %v1017 = vpack.c.b16 %v1014, %v1013
        %v1018 = vpack.c.b16 %v1016, %v1015
        %1021 = vmatprep.subr.bf16.mxu0 0
        %1022 = vmatpush1.bf16.msra.mxu0 %v1017
        %1023 = vmatprep.subr.bf16.mxu0 0
        %1024 = vmatpush1.bf16.msra.mxu0 %v1018
        %1025 = vmatprep.subr.bf16.mxu0 0
        %1026 = vmatpush1.bf16.msra.mxu0 0
        %1027 = vmatprep.subr.bf16.mxu0 0
        %1028 = vmatpush1.bf16.msra.mxu0 0
        %1029 = vmatprep.subr.bf16.mxu0 0
        %1030 = vmatpush1.bf16.msra.mxu0 0
        %1031 = vmatprep.subr.bf16.mxu0 0
        %1032 = vmatpush1.bf16.msra.mxu0 0
        %1033 = vmatprep.subr.bf16.mxu0 0
        %1034 = vmatpush1.bf16.msra.mxu0 0
        %1035 = vmatprep.subr.bf16.mxu0 0
        %1036 = vmatpush1.bf16.msra.mxu0 0
        %1037 = vmatprep.subr.bf16.mxu0 0
        %1038 = vmatpush1.bf16.msra.mxu0 0
        %1039 = vmatprep.subr.bf16.mxu0 0
        %1040 = vmatpush1.bf16.msra.mxu0 0
        %1041 = vmatprep.subr.bf16.mxu0 0
        %1042 = vmatpush1.bf16.msra.mxu0 0
        %1043 = vmatprep.subr.bf16.mxu0 0
        %1044 = vmatpush1.bf16.msra.mxu0 0
        %1045 = vmatprep.subr.bf16.mxu0 0
        %1046 = vmatpush1.bf16.msra.mxu0 0
        %1047 = vmatprep.subr.bf16.mxu0 0
        %1048 = vmatpush1.bf16.msra.mxu0 0
        %1049 = vmatprep.subr.bf16.mxu0 0
        %1050 = vmatpush1.bf16.msra.mxu0 0
        %1051 = vmatprep.subr.bf16.mxu0 0
        %1052 = vmatpush1.bf16.msra.mxu0 0
        %1053 = vmatprep.mubr.bf16.mxu0 0
        %1054 = vmatmul.mubr.bf16.gmra.mrb[0].mxu0 %v634
        %v1055 = vpop.f32.mrb[0].mxu0
        %v1056 = vadd.f32 %v1007, %v1055
        %v1057 = vpop.f32.mrb[0].mxu0
        %v1058 = vpop.f32.mrb[0].mxu0
        %v1059 = vadd.f32 %v1007, %v1058
        %v1060 = vpop.f32.mrb[0].mxu0
        %1061 = vmatprep.mubr.bf16.mxu0 0
        %1062 = vmatmul.mubr.bf16.gmra.mrb[0].mxu0 %v637
        %v1063 = vpop.f32.mrb[0].mxu0
        %v1064 = vadd.f32 %v1007, %v1063
        %v1065 = vpop.f32.mrb[0].mxu0
        %v1066 = vpop.f32.mrb[0].mxu0
        %v1067 = vpop.f32.mrb[0].mxu0
        %1068 = vdwg.mxu0
        %s1069 = scalar_lea.vmem %s4, 16
        %v1070 = vld [vmem:[%s1069] sm:$0xf]
        %v1071 = vld [vmem:[%s1069 + $0x4] sm:$0xf]
        %v1072 = vld [vmem:[%s1069 + $0x8] sm:$0xf]
        %v1073 = vld [vmem:[%s1069 + $0xc] sm:$0xf]
        %s1074 = scalar_lea.vmem %s7, 1
        %v1075 = vld [vmem:[%s1074] sm:$0x1]
        %v1077 = vlaneseq
        %v1078 = vshrl.u32 %v1077, 7
        %v1079 = vsub.s32 0, %v1078
        %v1080 = vrot.slane %v1075, %v1079
        %v1086 = vunpack.c.l.b16 %v1070
        %v1087 = vunpack.c.l.b16 %v1071
        %v1088 = vunpack.c.l.b16 %v1072
        %v1089 = vunpack.c.l.b16 %v1073
        %v1090 = vpack.c.b16 %v1087, %v1086
        %v1091 = vpack.c.b16 %v1089, %v1088
        %1094 = vmatprep.subr.bf16.mxu0 0
        %1095 = vmatpush1.bf16.msra.mxu0 %v1090
        %1096 = vmatprep.subr.bf16.mxu0 0
        %1097 = vmatpush1.bf16.msra.mxu0 %v1091
        %1098 = vmatprep.subr.bf16.mxu0 0
        %1099 = vmatpush1.bf16.msra.mxu0 0
        %1100 = vmatprep.subr.bf16.mxu0 0
        %1101 = vmatpush1.bf16.msra.mxu0 0
        %1102 = vmatprep.subr.bf16.mxu0 0
        %1103 = vmatpush1.bf16.msra.mxu0 0
        %1104 = vmatprep.subr.bf16.mxu0 0
        %1105 = vmatpush1.bf16.msra.mxu0 0
        %1106 = vmatprep.subr.bf16.mxu0 0
        %1107 = vmatpush1.bf16.msra.mxu0 0
        %1108 = vmatprep.subr.bf16.mxu0 0
        %1109 = vmatpush1.bf16.msra.mxu0 0
        %1110 = vmatprep.subr.bf16.mxu0 0
        %1111 = vmatpush1.bf16.msra.mxu0 0
        %1112 = vmatprep.subr.bf16.mxu0 0
        %1113 = vmatpush1.bf16.msra.mxu0 0
        %1114 = vmatprep.subr.bf16.mxu0 0
        %1115 = vmatpush1.bf16.msra.mxu0 0
        %1116 = vmatprep.subr.bf16.mxu0 0
        %1117 = vmatpush1.bf16.msra.mxu0 0
        %1118 = vmatprep.subr.bf16.mxu0 0
        %1119 = vmatpush1.bf16.msra.mxu0 0
        %1120 = vmatprep.subr.bf16.mxu0 0
        %1121 = vmatpush1.bf16.msra.mxu0 0
        %1122 = vmatprep.subr.bf16.mxu0 0
        %1123 = vmatpush1.bf16.msra.mxu0 0
        %1124 = vmatprep.subr.bf16.mxu0 0
        %1125 = vmatpush1.bf16.msra.mxu0 0
        %1126 = vmatprep.mubr.bf16.mxu0 0
        %1127 = vmatmul.mubr.bf16.gmra.mrb[0].mxu0 %v634
        %v1128 = vpop.f32.mrb[0].mxu0
        %v1129 = vadd.f32 %v1080, %v1128
        %v1130 = vpop.f32.mrb[0].mxu0
        %v1131 = vpop.f32.mrb[0].mxu0
        %v1132 = vadd.f32 %v1080, %v1131
        %v1133 = vpop.f32.mrb[0].mxu0
        %1134 = vmatprep.mubr.bf16.mxu0 0
        %1135 = vmatmul.mubr.bf16.gmra.mrb[0].mxu0 %v637
        %v1136 = vpop.f32.mrb[0].mxu0
        %v1137 = vadd.f32 %v1080, %v1136
        %v1138 = vpop.f32.mrb[0].mxu0
        %v1139 = vpop.f32.mrb[0].mxu0
        %v1140 = vpop.f32.mrb[0].mxu0
        %1141 = vdwg.mxu0
        %s1142 = scalar_lea.vmem %s5, 16
        %v1143 = vld [vmem:[%s1142] sm:$0xf]
        %v1144 = vld [vmem:[%s1142 + $0x4] sm:$0xf]
        %v1145 = vld [vmem:[%s1142 + $0x8] sm:$0xf]
        %v1146 = vld [vmem:[%s1142 + $0xc] sm:$0xf]
        %s1147 = scalar_lea.vmem %s8, 1
        %v1148 = vld [vmem:[%s1147] sm:$0x1]
        %v1150 = vlaneseq
        %v1151 = vshrl.u32 %v1150, 7
        %v1152 = vsub.s32 0, %v1151
        %v1153 = vrot.slane %v1148, %v1152
        %v1159 = vunpack.c.l.b16 %v1143
        %v1160 = vunpack.c.l.b16 %v1144
        %v1161 = vunpack.c.l.b16 %v1145
        %v1162 = vunpack.c.l.b16 %v1146
        %v1163 = vpack.c.b16 %v1160, %v1159
        %v1164 = vpack.c.b16 %v1162, %v1161
        %1167 = vmatprep.subr.bf16.mxu0 0
        %1168 = vmatpush1.bf16.msra.mxu0 %v1163
        %1169 = vmatprep.subr.bf16.mxu0 0
        %1170 = vmatpush1.bf16.msra.mxu0 %v1164
        %1171 = vmatprep.subr.bf16.mxu0 0
        %1172 = vmatpush1.bf16.msra.mxu0 0
        %1173 = vmatprep.subr.bf16.mxu0 0
        %1174 = vmatpush1.bf16.msra.mxu0 0
        %1175 = vmatprep.subr.bf16.mxu0 0
        %1176 = vmatpush1.bf16.msra.mxu0 0
        %1177 = vmatprep.subr.bf16.mxu0 0
        %1178 = vmatpush1.bf16.msra.mxu0 0
        %1179 = vmatprep.subr.bf16.mxu0 0
        %1180 = vmatpush1.bf16.msra.mxu0 0
        %1181 = vmatprep.subr.bf16.mxu0 0
        %1182 = vmatpush1.bf16.msra.mxu0 0
        %1183 = vmatprep.subr.bf16.mxu0 0
        %1184 = vmatpush1.bf16.msra.mxu0 0
        %1185 = vmatprep.subr.bf16.mxu0 0
        %1186 = vmatpush1.bf16.msra.mxu0 0
        %1187 = vmatprep.subr.bf16.mxu0 0
        %1188 = vmatpush1.bf16.msra.mxu0 0
        %1189 = vmatprep.subr.bf16.mxu0 0
        %1190 = vmatpush1.bf16.msra.mxu0 0
        %1191 = vmatprep.subr.bf16.mxu0 0
        %1192 = vmatpush1.bf16.msra.mxu0 0
        %1193 = vmatprep.subr.bf16.mxu0 0
        %1194 = vmatpush1.bf16.msra.mxu0 0
        %1195 = vmatprep.subr.bf16.mxu0 0
        %1196 = vmatpush1.bf16.msra.mxu0 0
        %1197 = vmatprep.subr.bf16.mxu0 0
        %1198 = vmatpush1.bf16.msra.mxu0 0
        %1199 = vmatprep.mubr.bf16.mxu0 0
        %1200 = vmatmul.mubr.bf16.gmra.mrb[0].mxu0 %v634
        %v1201 = vpop.f32.mrb[0].mxu0
        %v1202 = vadd.f32 %v1153, %v1201
        %v1203 = vpop.f32.mrb[0].mxu0
        %v1204 = vpop.f32.mrb[0].mxu0
        %v1205 = vadd.f32 %v1153, %v1204
        %v1206 = vpop.f32.mrb[0].mxu0
        %1207 = vmatprep.mubr.bf16.mxu0 0
        %1208 = vmatmul.mubr.bf16.gmra.mrb[0].mxu0 %v637
        %v1209 = vpop.f32.mrb[0].mxu0
        %v1210 = vadd.f32 %v1153, %v1209
        %v1211 = vpop.f32.mrb[0].mxu0
        %v1212 = vpop.f32.mrb[0].mxu0
        %v1213 = vpop.f32.mrb[0].mxu0
        %1214 = vdwg.mxu0
        %v1215 = vpack.c.bf16 %v1059, %v1056
        %v1216 = vpack.c.bf16 %v1064, %v1064
        %v1217 = vpack.c.bf16 %v1132, %v1129
        %v1218 = vpack.c.bf16 %v1137, %v1137
        %v1220 = vsel %vm833, %v1215, 0
        %v1223 = vsel %vm833, %v1216, 0
        %v1226 = vsel %vm833, %v1217, 0
        %v1229 = vsel %vm833, %v1218, 0
        %1231 = vmatprep.subr.bf16.mxu0 0
        %1232 = vmatpush1.bf16.xpose.msra.mxu0 %v1226
        %1233 = vmatprep.subr.bf16.mxu0 0
        %1234 = vmatpush1.bf16.xpose.msra.mxu0 %v1229
        %1235 = vmatprep.subr.bf16.mxu0 0
        %1236 = vmatpush1.bf16.xpose.msra.mxu0 0
        %1237 = vmatprep.subr.bf16.mxu0 0
        %1238 = vmatpush1.bf16.xpose.msra.mxu0 0
        %1239 = vmatprep.subr.bf16.mxu0 0
        %1240 = vmatpush1.bf16.xpose.msra.mxu0 0
        %1241 = vmatprep.subr.bf16.mxu0 0
        %1242 = vmatpush1.bf16.xpose.msra.mxu0 0
        %1243 = vmatprep.subr.bf16.mxu0 0
        %1244 = vmatpush1.bf16.xpose.msra.mxu0 0
        %1245 = vmatprep.subr.bf16.mxu0 0
        %1246 = vmatpush1.bf16.xpose.msra.mxu0 0
        %1247 = vmatprep.subr.bf16.mxu0 0
        %1248 = vmatpush1.bf16.xpose.msra.mxu0 0
        %1249 = vmatprep.subr.bf16.mxu0 0
        %1250 = vmatpush1.bf16.xpose.msra.mxu0 0
        %1251 = vmatprep.subr.bf16.mxu0 0
        %1252 = vmatpush1.bf16.xpose.msra.mxu0 0
        %1253 = vmatprep.subr.bf16.mxu0 0
        %1254 = vmatpush1.bf16.xpose.msra.mxu0 0
        %1255 = vmatprep.subr.bf16.mxu0 0
        %1256 = vmatpush1.bf16.xpose.msra.mxu0 0
        %1257 = vmatprep.subr.bf16.mxu0 0
        %1258 = vmatpush1.bf16.xpose.msra.mxu0 0
        %1259 = vmatprep.subr.bf16.mxu0 0
        %1260 = vmatpush1.bf16.xpose.msra.mxu0 0
        %1261 = vmatprep.subr.bf16.mxu0 0
        %1262 = vmatpush1.bf16.xpose.msra.mxu0 0
        %1263 = vmatprep.mubr.bf16.mxu0 0
        %1264 = vmatmul.mubr.bf16.gmra.mrb[0].mxu0 %v1220
        %v1265 = vpop.f32.mrb[0].mxu0
        %v1266 = vadd.f32 0.0, %v1265
        %v1267 = vpop.f32.mrb[0].mxu0
        %v1268 = vpop.f32.mrb[0].mxu0
        %v1269 = vadd.f32 0.0, %v1268
        %v1270 = vpop.f32.mrb[0].mxu0
        %1271 = vmatprep.mubr.bf16.mxu0 0
        %1272 = vmatmul.mubr.bf16.gmra.mrb[0].mxu0 %v1223
        %v1273 = vpop.f32.mrb[0].mxu0
        %v1274 = vadd.f32 0.0, %v1273
        %v1275 = vpop.f32.mrb[0].mxu0
        %v1276 = vpop.f32.mrb[0].mxu0
        %v1277 = vpop.f32.mrb[0].mxu0
        %1278 = vdwg.mxu0
        %v1279 = vsel %vm894, %v1266, -inf
        %1280 = vmax.xlane.f32.xlu0 %v1279
        %v1281 = vpop.xlane.xlu0 %1280
        %v1282 = vsel %vm894, %v1269, -inf
        %1283 = vmax.xlane.f32.xlu0 %v1282
        %v1284 = vpop.xlane.xlu0 %1283
        %v1285 = vsel %vm901, %v1274, -inf
        %1286 = vmax.xlane.f32.xlu0 %v1285
        %v1287 = vpop.xlane.xlu0 %1286
        %v1288 = vsub.f32 %v1266, %v1281
        %v1289 = vsub.f32 %v1269, %v1284
        %v1290 = vsub.f32 %v1274, %v1287
        %v1291 = vmul.f32 %v1288, 1.442695
        %v1292 = vpow.pop %v1291
        %v1293 = vmul.f32 %v1289, 1.442695
        %v1294 = vpow.pop %v1293
        %v1295 = vmul.f32 %v1290, 1.442695
        %v1296 = vpow.pop %v1295
        %v1297 = vsel %vm894, %v1292, 0.0
        %1298 = vadd.xlane.f32.xlu0 %v1297
        %v1299 = vpop.xlane.xlu0 %1298
        %v1300 = vsel %vm894, %v1294, 0.0
        %1301 = vadd.xlane.f32.xlu0 %v1300
        %v1302 = vpop.xlane.xlu0 %1301
        %v1303 = vsel %vm901, %v1296, 0.0
        %1304 = vadd.xlane.f32.xlu0 %v1303
        %v1305 = vpop.xlane.xlu0 %1304
        %v1306 = vrcp.pop %v1299
        %v1307 = vrcp.pop %v1302
        %v1308 = vrcp.pop %v1305
        %v1309 = vpack.c.bf16 %v1294, %v1292
        %v1310 = vpack.c.bf16 %v1296, %v1296
        %v1311 = vpack.c.bf16 %v1205, %v1202
        %v1312 = vpack.c.bf16 %v1210, %v1210
        %v1314 = vsel %vm894, %v1309, 0
        %v1317 = vsel %vm894, %v1310, 0
        %v1320 = vand.u32 %v1312, %v938
        %1322 = vmatprep.subr.bf16.mxu0 0
        %1323 = vmatpush1.bf16.msra.mxu0 %v1311
        %1324 = vmatprep.subr.bf16.mxu0 0
        %1325 = vmatpush1.bf16.msra.mxu0 %v1320
        %1326 = vmatprep.subr.bf16.mxu0 0
        %1327 = vmatpush1.bf16.msra.mxu0 0
        %1328 = vmatprep.subr.bf16.mxu0 0
        %1329 = vmatpush1.bf16.msra.mxu0 0
        %1330 = vmatprep.subr.bf16.mxu0 0
        %1331 = vmatpush1.bf16.msra.mxu0 0
        %1332 = vmatprep.subr.bf16.mxu0 0
        %1333 = vmatpush1.bf16.msra.mxu0 0
        %1334 = vmatprep.subr.bf16.mxu0 0
        %1335 = vmatpush1.bf16.msra.mxu0 0
        %1336 = vmatprep.subr.bf16.mxu0 0
        %1337 = vmatpush1.bf16.msra.mxu0 0
        %1338 = vmatprep.subr.bf16.mxu0 0
        %1339 = vmatpush1.bf16.msra.mxu0 0
        %1340 = vmatprep.subr.bf16.mxu0 0
        %1341 = vmatpush1.bf16.msra.mxu0 0
        %1342 = vmatprep.subr.bf16.mxu0 0
        %1343 = vmatpush1.bf16.msra.mxu0 0
        %1344 = vmatprep.subr.bf16.mxu0 0
        %1345 = vmatpush1.bf16.msra.mxu0 0
        %1346 = vmatprep.subr.bf16.mxu0 0
        %1347 = vmatpush1.bf16.msra.mxu0 0
        %1348 = vmatprep.subr.bf16.mxu0 0
        %1349 = vmatpush1.bf16.msra.mxu0 0
        %1350 = vmatprep.subr.bf16.mxu0 0
        %1351 = vmatpush1.bf16.msra.mxu0 0
        %1352 = vmatprep.subr.bf16.mxu0 0
        %1353 = vmatpush1.bf16.msra.mxu0 0
        %1354 = vmatprep.mubr.bf16.mxu0 0
        %1355 = vmatmul.mubr.bf16.gmra.mrb[0].mxu0 %v1314
        %v1356 = vpop.f32.mrb[0].mxu0
        %v1357 = vadd.f32 0.0, %v1356
        %v1358 = vpop.f32.mrb[0].mxu0
        %v1359 = vpop.f32.mrb[0].mxu0
        %v1360 = vadd.f32 0.0, %v1359
        %v1361 = vpop.f32.mrb[0].mxu0
        %1362 = vmatprep.mubr.bf16.mxu0 0
        %1363 = vmatmul.mubr.bf16.gmra.mrb[0].mxu0 %v1317
        %v1364 = vpop.f32.mrb[0].mxu0
        %v1365 = vadd.f32 0.0, %v1364
        %v1366 = vpop.f32.mrb[0].mxu0
        %v1367 = vpop.f32.mrb[0].mxu0
        %v1368 = vpop.f32.mrb[0].mxu0
        %1369 = vdwg.mxu0
        %v1370 = vmul.f32 %v1357, %v1306
        %v1371 = vmul.f32 %v1360, %v1307
        %v1372 = vmul.f32 %v1365, %v1308
        %v1373 = vpack.c.bf16 %v1371, %v1370
        %v1374 = vpack.c.bf16 %v1372, %v1372
        %s1375 = scalar_lea.vmem %s9, 4
        %v1376 = vld [vmem:[%s1375] sm:$0xf]
        %v1378 = vsel %vm833, %v1373, 0
        %v1381 = vsel %vm833, %v1374, 0
        %vm1383 = vcmask 1043456
        %v1385 = vsel %vm1383, %v1376, 0
        %1387 = vmatprep.subr.bf16.mxu0 0
        %1388 = vmatpush1.bf16.msra.mxu0 %v1385
        %1389 = vmatprep.subr.bf16.mxu0 0
        %1390 = vmatpush1.bf16.msra.mxu0 0
        %1391 = vmatprep.subr.bf16.mxu0 0
        %1392 = vmatpush1.bf16.msra.mxu0 0
        %1393 = vmatprep.subr.bf16.mxu0 0
        %1394 = vmatpush1.bf16.msra.mxu0 0
        %1395 = vmatprep.subr.bf16.mxu0 0
        %1396 = vmatpush1.bf16.msra.mxu0 0
        %1397 = vmatprep.subr.bf16.mxu0 0
        %1398 = vmatpush1.bf16.msra.mxu0 0
        %1399 = vmatprep.subr.bf16.mxu0 0
        %1400 = vmatpush1.bf16.msra.mxu0 0
        %1401 = vmatprep.subr.bf16.mxu0 0
        %1402 = vmatpush1.bf16.msra.mxu0 0
        %1403 = vmatprep.subr.bf16.mxu0 0
        %1404 = vmatpush1.bf16.msra.mxu0 0
        %1405 = vmatprep.subr.bf16.mxu0 0
        %1406 = vmatpush1.bf16.msra.mxu0 0
        %1407 = vmatprep.subr.bf16.mxu0 0
        %1408 = vmatpush1.bf16.msra.mxu0 0
        %1409 = vmatprep.subr.bf16.mxu0 0
        %1410 = vmatpush1.bf16.msra.mxu0 0
        %1411 = vmatprep.subr.bf16.mxu0 0
        %1412 = vmatpush1.bf16.msra.mxu0 0
        %1413 = vmatprep.subr.bf16.mxu0 0
        %1414 = vmatpush1.bf16.msra.mxu0 0
        %1415 = vmatprep.subr.bf16.mxu0 0
        %1416 = vmatpush1.bf16.msra.mxu0 0
        %1417 = vmatprep.subr.bf16.mxu0 0
        %1418 = vmatpush1.bf16.msra.mxu0 0
        %1419 = vmatprep.mubr.bf16.mxu0 0
        %1420 = vmatmul.mubr.bf16.gmra.mrb[0].mxu0 %v1378
        %v1421 = vpop.f32.mrb[0].mxu0
        %v1422 = vadd.f32 0.0, %v1421
        %v1423 = vpop.f32.mrb[0].mxu0
        %v1424 = vpop.f32.mrb[0].mxu0
        %v1425 = vadd.f32 0.0, %v1424
        %v1426 = vpop.f32.mrb[0].mxu0
        %1427 = vmatprep.mubr.bf16.mxu0 0
        %1428 = vmatmul.mubr.bf16.gmra.mrb[0].mxu0 %v1381
        %v1429 = vpop.f32.mrb[0].mxu0
        %v1430 = vadd.f32 0.0, %v1429
        %v1431 = vpop.f32.mrb[0].mxu0
        %v1432 = vpop.f32.mrb[0].mxu0
        %v1433 = vpop.f32.mrb[0].mxu0
        %1434 = vdwg.mxu0
        %v1436 = vsel %vm833, %v993, 0
        %v1439 = vsel %vm833, %v994, 0
        %v1442 = vsel %vm1383, %v995, 0
        %1444 = vmatprep.subr.bf16.mxu0 0
        %1445 = vmatpush1.bf16.msra.mxu0 %v1442
        %1446 = vmatprep.subr.bf16.mxu0 0
        %1447 = vmatpush1.bf16.msra.mxu0 0
        %1448 = vmatprep.subr.bf16.mxu0 0
        %1449 = vmatpush1.bf16.msra.mxu0 0
        %1450 = vmatprep.subr.bf16.mxu0 0
        %1451 = vmatpush1.bf16.msra.mxu0 0
        %1452 = vmatprep.subr.bf16.mxu0 0
        %1453 = vmatpush1.bf16.msra.mxu0 0
        %1454 = vmatprep.subr.bf16.mxu0 0
        %1455 = vmatpush1.bf16.msra.mxu0 0
        %1456 = vmatprep.subr.bf16.mxu0 0
        %1457 = vmatpush1.bf16.msra.mxu0 0
        %1458 = vmatprep.subr.bf16.mxu0 0
        %1459 = vmatpush1.bf16.msra.mxu0 0
        %1460 = vmatprep.subr.bf16.mxu0 0
        %1461 = vmatpush1.bf16.msra.mxu0 0
        %1462 = vmatprep.subr.bf16.mxu0 0
        %1463 = vmatpush1.bf16.msra.mxu0 0
        %1464 = vmatprep.subr.bf16.mxu0 0
        %1465 = vmatpush1.bf16.msra.mxu0 0
        %1466 = vmatprep.subr.bf16.mxu0 0
        %1467 = vmatpush1.bf16.msra.mxu0 0
        %1468 = vmatprep.subr.bf16.mxu0 0
        %1469 = vmatpush1.bf16.msra.mxu0 0
        %1470 = vmatprep.subr.bf16.mxu0 0
        %1471 = vmatpush1.bf16.msra.mxu0 0
        %1472 = vmatprep.subr.bf16.mxu0 0
        %1473 = vmatpush1.bf16.msra.mxu0 0
        %1474 = vmatprep.subr.bf16.mxu0 0
        %1475 = vmatpush1.bf16.msra.mxu0 0
        %1476 = vmatprep.mubr.bf16.mxu0 0
        %1477 = vmatmul.mubr.bf16.gmra.mrb[0].mxu0 %v1436
        %v1478 = vpop.f32.mrb[0].mxu0
        %v1479 = vadd.f32 %v1422, %v1478
        %v1480 = vpop.f32.mrb[0].mxu0
        %v1481 = vpop.f32.mrb[0].mxu0
        %v1482 = vadd.f32 %v1425, %v1481
        %v1483 = vpop.f32.mrb[0].mxu0
        %1484 = vmatprep.mubr.bf16.mxu0 0
        %1485 = vmatmul.mubr.bf16.gmra.mrb[0].mxu0 %v1439
        %v1486 = vpop.f32.mrb[0].mxu0
        %v1487 = vadd.f32 %v1430, %v1486
        %v1488 = vpop.f32.mrb[0].mxu0
        %v1489 = vpop.f32.mrb[0].mxu0
        %v1490 = vpop.f32.mrb[0].mxu0
        %1491 = vdwg.mxu0
        %s1492 = scalar_lea.vmem %s3, 32
        %v1493 = vld [vmem:[%s1492] sm:$0xf]
        %v1494 = vld [vmem:[%s1492 + $0x4] sm:$0xf]
        %v1495 = vld [vmem:[%s1492 + $0x8] sm:$0xf]
        %v1496 = vld [vmem:[%s1492 + $0xc] sm:$0xf]
        %s1497 = scalar_lea.vmem %s6, 2
        %v1498 = vld [vmem:[%s1497] sm:$0x1]
        %v1500 = vlaneseq
        %v1501 = vshrl.u32 %v1500, 7
        %v1502 = vsub.s32 0, %v1501
        %v1503 = vrot.slane %v1498, %v1502
        %v1509 = vunpack.c.l.b16 %v1493
        %v1510 = vunpack.c.l.b16 %v1494
        %v1511 = vunpack.c.l.b16 %v1495
        %v1512 = vunpack.c.l.b16 %v1496
        %v1513 = vpack.c.b16 %v1510, %v1509
        %v1514 = vpack.c.b16 %v1512, %v1511
        %1517 = vmatprep.subr.bf16.mxu0 0
        %1518 = vmatpush1.bf16.msra.mxu0 %v1513
        %1519 = vmatprep.subr.bf16.mxu0 0
        %1520 = vmatpush1.bf16.msra.mxu0 %v1514
        %1521 = vmatprep.subr.bf16.mxu0 0
        %1522 = vmatpush1.bf16.msra.mxu0 0
        %1523 = vmatprep.subr.bf16.mxu0 0
        %1524 = vmatpush1.bf16.msra.mxu0 0
        %1525 = vmatprep.subr.bf16.mxu0 0
        %1526 = vmatpush1.bf16.msra.mxu0 0
        %1527 = vmatprep.subr.bf16.mxu0 0
        %1528 = vmatpush1.bf16.msra.mxu0 0
        %1529 = vmatprep.subr.bf16.mxu0 0
        %1530 = vmatpush1.bf16.msra.mxu0 0
        %1531 = vmatprep.subr.bf16.mxu0 0
        %1532 = vmatpush1.bf16.msra.mxu0 0
        %1533 = vmatprep.subr.bf16.mxu0 0
        %1534 = vmatpush1.bf16.msra.mxu0 0
        %1535 = vmatprep.subr.bf16.mxu0 0
        %1536 = vmatpush1.bf16.msra.mxu0 0
        %1537 = vmatprep.subr.bf16.mxu0 0
        %1538 = vmatpush1.bf16.msra.mxu0 0
        %1539 = vmatprep.subr.bf16.mxu0 0
        %1540 = vmatpush1.bf16.msra.mxu0 0
        %1541 = vmatprep.subr.bf16.mxu0 0
        %1542 = vmatpush1.bf16.msra.mxu0 0
        %1543 = vmatprep.subr.bf16.mxu0 0
        %1544 = vmatpush1.bf16.msra.mxu0 0
        %1545 = vmatprep.subr.bf16.mxu0 0
        %1546 = vmatpush1.bf16.msra.mxu0 0
        %1547 = vmatprep.subr.bf16.mxu0 0
        %1548 = vmatpush1.bf16.msra.mxu0 0
        %1549 = vmatprep.mubr.bf16.mxu0 0
        %1550 = vmatmul.mubr.bf16.gmra.mrb[0].mxu0 %v634
        %v1551 = vpop.f32.mrb[0].mxu0
        %v1552 = vadd.f32 %v1503, %v1551
        %v1553 = vpop.f32.mrb[0].mxu0
        %v1554 = vpop.f32.mrb[0].mxu0
        %v1555 = vadd.f32 %v1503, %v1554
        %v1556 = vpop.f32.mrb[0].mxu0
        %1557 = vmatprep.mubr.bf16.mxu0 0
        %1558 = vmatmul.mubr.bf16.gmra.mrb[0].mxu0 %v637
        %v1559 = vpop.f32.mrb[0].mxu0
        %v1560 = vadd.f32 %v1503, %v1559
        %v1561 = vpop.f32.mrb[0].mxu0
        %v1562 = vpop.f32.mrb[0].mxu0
        %v1563 = vpop.f32.mrb[0].mxu0
        %1564 = vdwg.mxu0
        %s1565 = scalar_lea.vmem %s4, 32
        %v1566 = vld [vmem:[%s1565] sm:$0xf]
        %v1567 = vld [vmem:[%s1565 + $0x4] sm:$0xf]
        %v1568 = vld [vmem:[%s1565 + $0x8] sm:$0xf]
        %v1569 = vld [vmem:[%s1565 + $0xc] sm:$0xf]
        %s1570 = scalar_lea.vmem %s7, 2
        %v1571 = vld [vmem:[%s1570] sm:$0x1]
        %v1573 = vlaneseq
        %v1574 = vshrl.u32 %v1573, 7
        %v1575 = vsub.s32 0, %v1574
        %v1576 = vrot.slane %v1571, %v1575
        %v1582 = vunpack.c.l.b16 %v1566
        %v1583 = vunpack.c.l.b16 %v1567
        %v1584 = vunpack.c.l.b16 %v1568
        %v1585 = vunpack.c.l.b16 %v1569
        %v1586 = vpack.c.b16 %v1583, %v1582
        %v1587 = vpack.c.b16 %v1585, %v1584
        %1590 = vmatprep.subr.bf16.mxu0 0
        %1591 = vmatpush1.bf16.msra.mxu0 %v1586
        %1592 = vmatprep.subr.bf16.mxu0 0
        %1593 = vmatpush1.bf16.msra.mxu0 %v1587
        %1594 = vmatprep.subr.bf16.mxu0 0
        %1595 = vmatpush1.bf16.msra.mxu0 0
        %1596 = vmatprep.subr.bf16.mxu0 0
        %1597 = vmatpush1.bf16.msra.mxu0 0
        %1598 = vmatprep.subr.bf16.mxu0 0
        %1599 = vmatpush1.bf16.msra.mxu0 0
        %1600 = vmatprep.subr.bf16.mxu0 0
        %1601 = vmatpush1.bf16.msra.mxu0 0
        %1602 = vmatprep.subr.bf16.mxu0 0
        %1603 = vmatpush1.bf16.msra.mxu0 0
        %1604 = vmatprep.subr.bf16.mxu0 0
        %1605 = vmatpush1.bf16.msra.mxu0 0
        %1606 = vmatprep.subr.bf16.mxu0 0
        %1607 = vmatpush1.bf16.msra.mxu0 0
        %1608 = vmatprep.subr.bf16.mxu0 0
        %1609 = vmatpush1.bf16.msra.mxu0 0
        %1610 = vmatprep.subr.bf16.mxu0 0
        %1611 = vmatpush1.bf16.msra.mxu0 0
        %1612 = vmatprep.subr.bf16.mxu0 0
        %1613 = vmatpush1.bf16.msra.mxu0 0
        %1614 = vmatprep.subr.bf16.mxu0 0
        %1615 = vmatpush1.bf16.msra.mxu0 0
        %1616 = vmatprep.subr.bf16.mxu0 0
        %1617 = vmatpush1.bf16.msra.mxu0 0
        %1618 = vmatprep.subr.bf16.mxu0 0
        %1619 = vmatpush1.bf16.msra.mxu0 0
        %1620 = vmatprep.subr.bf16.mxu0 0
        %1621 = vmatpush1.bf16.msra.mxu0 0
        %1622 = vmatprep.mubr.bf16.mxu0 0
        %1623 = vmatmul.mubr.bf16.gmra.mrb[0].mxu0 %v634
        %v1624 = vpop.f32.mrb[0].mxu0
        %v1625 = vadd.f32 %v1576, %v1624
        %v1626 = vpop.f32.mrb[0].mxu0
        %v1627 = vpop.f32.mrb[0].mxu0
        %v1628 = vadd.f32 %v1576, %v1627
        %v1629 = vpop.f32.mrb[0].mxu0
        %1630 = vmatprep.mubr.bf16.mxu0 0
        %1631 = vmatmul.mubr.bf16.gmra.mrb[0].mxu0 %v637
        %v1632 = vpop.f32.mrb[0].mxu0
        %v1633 = vadd.f32 %v1576, %v1632
        %v1634 = vpop.f32.mrb[0].mxu0
        %v1635 = vpop.f32.mrb[0].mxu0
        %v1636 = vpop.f32.mrb[0].mxu0
        %1637 = vdwg.mxu0
        %s1638 = scalar_lea.vmem %s5, 32
        %v1639 = vld [vmem:[%s1638] sm:$0xf]
        %v1640 = vld [vmem:[%s1638 + $0x4] sm:$0xf]
        %v1641 = vld [vmem:[%s1638 + $0x8] sm:$0xf]
        %v1642 = vld [vmem:[%s1638 + $0xc] sm:$0xf]
        %s1643 = scalar_lea.vmem %s8, 2
        %v1644 = vld [vmem:[%s1643] sm:$0x1]
        %v1646 = vlaneseq
        %v1647 = vshrl.u32 %v1646, 7
        %v1648 = vsub.s32 0, %v1647
        %v1649 = vrot.slane %v1644, %v1648
        %v1655 = vunpack.c.l.b16 %v1639
        %v1656 = vunpack.c.l.b16 %v1640
        %v1657 = vunpack.c.l.b16 %v1641
        %v1658 = vunpack.c.l.b16 %v1642
        %v1659 = vpack.c.b16 %v1656, %v1655
        %v1660 = vpack.c.b16 %v1658, %v1657
        %1663 = vmatprep.subr.bf16.mxu0 0
        %1664 = vmatpush1.bf16.msra.mxu0 %v1659
        %1665 = vmatprep.subr.bf16.mxu0 0
        %1666 = vmatpush1.bf16.msra.mxu0 %v1660
        %1667 = vmatprep.subr.bf16.mxu0 0
        %1668 = vmatpush1.bf16.msra.mxu0 0
        %1669 = vmatprep.subr.bf16.mxu0 0
        %1670 = vmatpush1.bf16.msra.mxu0 0
        %1671 = vmatprep.subr.bf16.mxu0 0
        %1672 = vmatpush1.bf16.msra.mxu0 0
        %1673 = vmatprep.subr.bf16.mxu0 0
        %1674 = vmatpush1.bf16.msra.mxu0 0
        %1675 = vmatprep.subr.bf16.mxu0 0
        %1676 = vmatpush1.bf16.msra.mxu0 0
        %1677 = vmatprep.subr.bf16.mxu0 0
        %1678 = vmatpush1.bf16.msra.mxu0 0
        %1679 = vmatprep.subr.bf16.mxu0 0
        %1680 = vmatpush1.bf16.msra.mxu0 0
        %1681 = vmatprep.subr.bf16.mxu0 0
        %1682 = vmatpush1.bf16.msra.mxu0 0
        %1683 = vmatprep.subr.bf16.mxu0 0
        %1684 = vmatpush1.bf16.msra.mxu0 0
        %1685 = vmatprep.subr.bf16.mxu0 0
        %1686 = vmatpush1.bf16.msra.mxu0 0
        %1687 = vmatprep.subr.bf16.mxu0 0
        %1688 = vmatpush1.bf16.msra.mxu0 0
        %1689 = vmatprep.subr.bf16.mxu0 0
        %1690 = vmatpush1.bf16.msra.mxu0 0
        %1691 = vmatprep.subr.bf16.mxu0 0
        %1692 = vmatpush1.bf16.msra.mxu0 0
        %1693 = vmatprep.subr.bf16.mxu0 0
        %1694 = vmatpush1.bf16.msra.mxu0 0
        %1695 = vmatprep.mubr.bf16.mxu0 0
        %1696 = vmatmul.mubr.bf16.gmra.mrb[0].mxu0 %v634
        %v1697 = vpop.f32.mrb[0].mxu0
        %v1698 = vadd.f32 %v1649, %v1697
        %v1699 = vpop.f32.mrb[0].mxu0
        %v1700 = vpop.f32.mrb[0].mxu0
        %v1701 = vadd.f32 %v1649, %v1700
        %v1702 = vpop.f32.mrb[0].mxu0
        %1703 = vmatprep.mubr.bf16.mxu0 0
        %1704 = vmatmul.mubr.bf16.gmra.mrb[0].mxu0 %v637
        %v1705 = vpop.f32.mrb[0].mxu0
        %v1706 = vadd.f32 %v1649, %v1705
        %v1707 = vpop.f32.mrb[0].mxu0
        %v1708 = vpop.f32.mrb[0].mxu0
        %v1709 = vpop.f32.mrb[0].mxu0
        %1710 = vdwg.mxu0
        %v1711 = vpack.c.bf16 %v1555, %v1552
        %v1712 = vpack.c.bf16 %v1560, %v1560
        %v1713 = vpack.c.bf16 %v1628, %v1625
        %v1714 = vpack.c.bf16 %v1633, %v1633
        %v1716 = vsel %vm833, %v1711, 0
        %v1719 = vsel %vm833, %v1712, 0
        %v1722 = vsel %vm833, %v1713, 0
        %v1725 = vsel %vm833, %v1714, 0
        %1727 = vmatprep.subr.bf16.mxu0 0
        %1728 = vmatpush1.bf16.xpose.msra.mxu0 %v1722
        %1729 = vmatprep.subr.bf16.mxu0 0
        %1730 = vmatpush1.bf16.xpose.msra.mxu0 %v1725
        %1731 = vmatprep.subr.bf16.mxu0 0
        %1732 = vmatpush1.bf16.xpose.msra.mxu0 0
        %1733 = vmatprep.subr.bf16.mxu0 0
        %1734 = vmatpush1.bf16.xpose.msra.mxu0 0
        %1735 = vmatprep.subr.bf16.mxu0 0
        %1736 = vmatpush1.bf16.xpose.msra.mxu0 0
        %1737 = vmatprep.subr.bf16.mxu0 0
        %1738 = vmatpush1.bf16.xpose.msra.mxu0 0
        %1739 = vmatprep.subr.bf16.mxu0 0
        %1740 = vmatpush1.bf16.xpose.msra.mxu0 0
        %1741 = vmatprep.subr.bf16.mxu0 0
        %1742 = vmatpush1.bf16.xpose.msra.mxu0 0
        %1743 = vmatprep.subr.bf16.mxu0 0
        %1744 = vmatpush1.bf16.xpose.msra.mxu0 0
        %1745 = vmatprep.subr.bf16.mxu0 0
        %1746 = vmatpush1.bf16.xpose.msra.mxu0 0
        %1747 = vmatprep.subr.bf16.mxu0 0
        %1748 = vmatpush1.bf16.xpose.msra.mxu0 0
        %1749 = vmatprep.subr.bf16.mxu0 0
        %1750 = vmatpush1.bf16.xpose.msra.mxu0 0
        %1751 = vmatprep.subr.bf16.mxu0 0
        %1752 = vmatpush1.bf16.xpose.msra.mxu0 0
        %1753 = vmatprep.subr.bf16.mxu0 0
        %1754 = vmatpush1.bf16.xpose.msra.mxu0 0
        %1755 = vmatprep.subr.bf16.mxu0 0
        %1756 = vmatpush1.bf16.xpose.msra.mxu0 0
        %1757 = vmatprep.subr.bf16.mxu0 0
        %1758 = vmatpush1.bf16.xpose.msra.mxu0 0
        %1759 = vmatprep.mubr.bf16.mxu0 0
        %1760 = vmatmul.mubr.bf16.gmra.mrb[0].mxu0 %v1716
        %v1761 = vpop.f32.mrb[0].mxu0
        %v1762 = vadd.f32 0.0, %v1761
        %v1763 = vpop.f32.mrb[0].mxu0
        %v1764 = vpop.f32.mrb[0].mxu0
        %v1765 = vadd.f32 0.0, %v1764
        %v1766 = vpop.f32.mrb[0].mxu0
        %1767 = vmatprep.mubr.bf16.mxu0 0
        %1768 = vmatmul.mubr.bf16.gmra.mrb[0].mxu0 %v1719
        %v1769 = vpop.f32.mrb[0].mxu0
        %v1770 = vadd.f32 0.0, %v1769
        %v1771 = vpop.f32.mrb[0].mxu0
        %v1772 = vpop.f32.mrb[0].mxu0
        %v1773 = vpop.f32.mrb[0].mxu0
        %1774 = vdwg.mxu0
        %v1775 = vsel %vm894, %v1762, -inf
        %1776 = vmax.xlane.f32.xlu0 %v1775
        %v1777 = vpop.xlane.xlu0 %1776
        %v1778 = vsel %vm894, %v1765, -inf
        %1779 = vmax.xlane.f32.xlu0 %v1778
        %v1780 = vpop.xlane.xlu0 %1779
        %v1781 = vsel %vm901, %v1770, -inf
        %1782 = vmax.xlane.f32.xlu0 %v1781
        %v1783 = vpop.xlane.xlu0 %1782
        %v1784 = vsub.f32 %v1762, %v1777
        %v1785 = vsub.f32 %v1765, %v1780
        %v1786 = vsub.f32 %v1770, %v1783
        %v1787 = vmul.f32 %v1784, 1.442695
        %v1788 = vpow.pop %v1787
        %v1789 = vmul.f32 %v1785, 1.442695
        %v1790 = vpow.pop %v1789
        %v1791 = vmul.f32 %v1786, 1.442695
        %v1792 = vpow.pop %v1791
        %v1793 = vsel %vm894, %v1788, 0.0
        %1794 = vadd.xlane.f32.xlu0 %v1793
        %v1795 = vpop.xlane.xlu0 %1794
        %v1796 = vsel %vm894, %v1790, 0.0
        %1797 = vadd.xlane.f32.xlu0 %v1796
        %v1798 = vpop.xlane.xlu0 %1797
        %v1799 = vsel %vm901, %v1792, 0.0
        %1800 = vadd.xlane.f32.xlu0 %v1799
        %v1801 = vpop.xlane.xlu0 %1800
        %v1802 = vrcp.pop %v1795
        %v1803 = vrcp.pop %v1798
        %v1804 = vrcp.pop %v1801
        %v1805 = vpack.c.bf16 %v1790, %v1788
        %v1806 = vpack.c.bf16 %v1792, %v1792
        %v1807 = vpack.c.bf16 %v1701, %v1698
        %v1808 = vpack.c.bf16 %v1706, %v1706
        %v1810 = vsel %vm894, %v1805, 0
        %v1813 = vsel %vm894, %v1806, 0
        %v1816 = vand.u32 %v1808, %v938
        %1818 = vmatprep.subr.bf16.mxu0 0
        %1819 = vmatpush1.bf16.msra.mxu0 %v1807
        %1820 = vmatprep.subr.bf16.mxu0 0
        %1821 = vmatpush1.bf16.msra.mxu0 %v1816
        %1822 = vmatprep.subr.bf16.mxu0 0
        %1823 = vmatpush1.bf16.msra.mxu0 0
        %1824 = vmatprep.subr.bf16.mxu0 0
        %1825 = vmatpush1.bf16.msra.mxu0 0
        %1826 = vmatprep.subr.bf16.mxu0 0
        %1827 = vmatpush1.bf16.msra.mxu0 0
        %1828 = vmatprep.subr.bf16.mxu0 0
        %1829 = vmatpush1.bf16.msra.mxu0 0
        %1830 = vmatprep.subr.bf16.mxu0 0
        %1831 = vmatpush1.bf16.msra.mxu0 0
        %1832 = vmatprep.subr.bf16.mxu0 0
        %1833 = vmatpush1.bf16.msra.mxu0 0
        %1834 = vmatprep.subr.bf16.mxu0 0
        %1835 = vmatpush1.bf16.msra.mxu0 0
        %1836 = vmatprep.subr.bf16.mxu0 0
        %1837 = vmatpush1.bf16.msra.mxu0 0
        %1838 = vmatprep.subr.bf16.mxu0 0
        %1839 = vmatpush1.bf16.msra.mxu0 0
        %1840 = vmatprep.subr.bf16.mxu0 0
        %1841 = vmatpush1.bf16.msra.mxu0 0
        %1842 = vmatprep.subr.bf16.mxu0 0
        %1843 = vmatpush1.bf16.msra.mxu0 0
        %1844 = vmatprep.subr.bf16.mxu0 0
        %1845 = vmatpush1.bf16.msra.mxu0 0
        %1846 = vmatprep.subr.bf16.mxu0 0
        %1847 = vmatpush1.bf16.msra.mxu0 0
        %1848 = vmatprep.subr.bf16.mxu0 0
        %1849 = vmatpush1.bf16.msra.mxu0 0
        %1850 = vmatprep.mubr.bf16.mxu0 0
        %1851 = vmatmul.mubr.bf16.gmra.mrb[0].mxu0 %v1810
        %v1852 = vpop.f32.mrb[0].mxu0
        %v1853 = vadd.f32 0.0, %v1852
        %v1854 = vpop.f32.mrb[0].mxu0
        %v1855 = vpop.f32.mrb[0].mxu0
        %v1856 = vadd.f32 0.0, %v1855
        %v1857 = vpop.f32.mrb[0].mxu0
        %1858 = vmatprep.mubr.bf16.mxu0 0
        %1859 = vmatmul.mubr.bf16.gmra.mrb[0].mxu0 %v1813
        %v1860 = vpop.f32.mrb[0].mxu0
        %v1861 = vadd.f32 0.0, %v1860
        %v1862 = vpop.f32.mrb[0].mxu0
        %v1863 = vpop.f32.mrb[0].mxu0
        %v1864 = vpop.f32.mrb[0].mxu0
        %1865 = vdwg.mxu0
        %v1866 = vmul.f32 %v1853, %v1802
        %v1867 = vmul.f32 %v1856, %v1803
        %v1868 = vmul.f32 %v1861, %v1804
        %v1869 = vpack.c.bf16 %v1867, %v1866
        %v1870 = vpack.c.bf16 %v1868, %v1868
        %s1871 = scalar_lea.vmem %s9, 8
        %v1872 = vld [vmem:[%s1871] sm:$0xf]
        %v1874 = vsel %vm833, %v1869, 0
        %v1877 = vsel %vm833, %v1870, 0
        %v1880 = vsel %vm1383, %v1872, 0
        %1882 = vmatprep.subr.bf16.mxu0 0
        %1883 = vmatpush1.bf16.msra.mxu0 %v1880
        %1884 = vmatprep.subr.bf16.mxu0 0
        %1885 = vmatpush1.bf16.msra.mxu0 0
        %1886 = vmatprep.subr.bf16.mxu0 0
        %1887 = vmatpush1.bf16.msra.mxu0 0
        %1888 = vmatprep.subr.bf16.mxu0 0
        %1889 = vmatpush1.bf16.msra.mxu0 0
        %1890 = vmatprep.subr.bf16.mxu0 0
        %1891 = vmatpush1.bf16.msra.mxu0 0
        %1892 = vmatprep.subr.bf16.mxu0 0
        %1893 = vmatpush1.bf16.msra.mxu0 0
        %1894 = vmatprep.subr.bf16.mxu0 0
        %1895 = vmatpush1.bf16.msra.mxu0 0
        %1896 = vmatprep.subr.bf16.mxu0 0
        %1897 = vmatpush1.bf16.msra.mxu0 0
        %1898 = vmatprep.subr.bf16.mxu0 0
        %1899 = vmatpush1.bf16.msra.mxu0 0
        %1900 = vmatprep.subr.bf16.mxu0 0
        %1901 = vmatpush1.bf16.msra.mxu0 0
        %1902 = vmatprep.subr.bf16.mxu0 0
        %1903 = vmatpush1.bf16.msra.mxu0 0
        %1904 = vmatprep.subr.bf16.mxu0 0
        %1905 = vmatpush1.bf16.msra.mxu0 0
        %1906 = vmatprep.subr.bf16.mxu0 0
        %1907 = vmatpush1.bf16.msra.mxu0 0
        %1908 = vmatprep.subr.bf16.mxu0 0
        %1909 = vmatpush1.bf16.msra.mxu0 0
        %1910 = vmatprep.subr.bf16.mxu0 0
        %1911 = vmatpush1.bf16.msra.mxu0 0
        %1912 = vmatprep.subr.bf16.mxu0 0
        %1913 = vmatpush1.bf16.msra.mxu0 0
        %1914 = vmatprep.mubr.bf16.mxu0 0
        %1915 = vmatmul.mubr.bf16.gmra.mrb[0].mxu0 %v1874
        %v1916 = vpop.f32.mrb[0].mxu0
        %v1917 = vadd.f32 0.0, %v1916
        %v1918 = vpop.f32.mrb[0].mxu0
        %v1919 = vpop.f32.mrb[0].mxu0
        %v1920 = vadd.f32 0.0, %v1919
        %v1921 = vpop.f32.mrb[0].mxu0
        %1922 = vmatprep.mubr.bf16.mxu0 0
        %1923 = vmatmul.mubr.bf16.gmra.mrb[0].mxu0 %v1877
        %v1924 = vpop.f32.mrb[0].mxu0
        %v1925 = vadd.f32 0.0, %v1924
        %v1926 = vpop.f32.mrb[0].mxu0
        %v1927 = vpop.f32.mrb[0].mxu0
        %v1928 = vpop.f32.mrb[0].mxu0
        %1929 = vdwg.mxu0
        %v1930 = vadd.f32 %v1479, %v1917
        %v1931 = vadd.f32 %v1482, %v1920
        %v1932 = vadd.f32 %v1487, %v1925
        %s1933 = scalar_lea.vmem %s3, 48
        %v1934 = vld [vmem:[%s1933] sm:$0xf]
        %v1935 = vld [vmem:[%s1933 + $0x4] sm:$0xf]
        %v1936 = vld [vmem:[%s1933 + $0x8] sm:$0xf]
        %v1937 = vld [vmem:[%s1933 + $0xc] sm:$0xf]
        %s1938 = scalar_lea.vmem %s6, 3
        %v1939 = vld [vmem:[%s1938] sm:$0x1]
        %v1941 = vlaneseq
        %v1942 = vshrl.u32 %v1941, 7
        %v1943 = vsub.s32 0, %v1942
        %v1944 = vrot.slane %v1939, %v1943
        %v1950 = vunpack.c.l.b16 %v1934
        %v1951 = vunpack.c.l.b16 %v1935
        %v1952 = vunpack.c.l.b16 %v1936
        %v1953 = vunpack.c.l.b16 %v1937
        %v1954 = vpack.c.b16 %v1951, %v1950
        %v1955 = vpack.c.b16 %v1953, %v1952
        %1958 = vmatprep.subr.bf16.mxu0 0
        %1959 = vmatpush1.bf16.msra.mxu0 %v1954
        %1960 = vmatprep.subr.bf16.mxu0 0
        %1961 = vmatpush1.bf16.msra.mxu0 %v1955
        %1962 = vmatprep.subr.bf16.mxu0 0
        %1963 = vmatpush1.bf16.msra.mxu0 0
        %1964 = vmatprep.subr.bf16.mxu0 0
        %1965 = vmatpush1.bf16.msra.mxu0 0
        %1966 = vmatprep.subr.bf16.mxu0 0
        %1967 = vmatpush1.bf16.msra.mxu0 0
        %1968 = vmatprep.subr.bf16.mxu0 0
        %1969 = vmatpush1.bf16.msra.mxu0 0
        %1970 = vmatprep.subr.bf16.mxu0 0
        %1971 = vmatpush1.bf16.msra.mxu0 0
        %1972 = vmatprep.subr.bf16.mxu0 0
        %1973 = vmatpush1.bf16.msra.mxu0 0
        %1974 = vmatprep.subr.bf16.mxu0 0
        %1975 = vmatpush1.bf16.msra.mxu0 0
        %1976 = vmatprep.subr.bf16.mxu0 0
        %1977 = vmatpush1.bf16.msra.mxu0 0
        %1978 = vmatprep.subr.bf16.mxu0 0
        %1979 = vmatpush1.bf16.msra.mxu0 0
        %1980 = vmatprep.subr.bf16.mxu0 0
        %1981 = vmatpush1.bf16.msra.mxu0 0
        %1982 = vmatprep.subr.bf16.mxu0 0
        %1983 = vmatpush1.bf16.msra.mxu0 0
        %1984 = vmatprep.subr.bf16.mxu0 0
        %1985 = vmatpush1.bf16.msra.mxu0 0
        %1986 = vmatprep.subr.bf16.mxu0 0
        %1987 = vmatpush1.bf16.msra.mxu0 0
        %1988 = vmatprep.subr.bf16.mxu0 0
        %1989 = vmatpush1.bf16.msra.mxu0 0
        %1990 = vmatprep.mubr.bf16.mxu0 0
        %1991 = vmatmul.mubr.bf16.gmra.mrb[0].mxu0 %v634
        %v1992 = vpop.f32.mrb[0].mxu0
        %v1993 = vadd.f32 %v1944, %v1992
        %v1994 = vpop.f32.mrb[0].mxu0
        %v1995 = vpop.f32.mrb[0].mxu0
        %v1996 = vadd.f32 %v1944, %v1995
        %v1997 = vpop.f32.mrb[0].mxu0
        %1998 = vmatprep.mubr.bf16.mxu0 0
        %1999 = vmatmul.mubr.bf16.gmra.mrb[0].mxu0 %v637
        %v2000 = vpop.f32.mrb[0].mxu0
        %v2001 = vadd.f32 %v1944, %v2000
        %v2002 = vpop.f32.mrb[0].mxu0
        %v2003 = vpop.f32.mrb[0].mxu0
        %v2004 = vpop.f32.mrb[0].mxu0
        %2005 = vdwg.mxu0
        %s2006 = scalar_lea.vmem %s4, 48
        %v2007 = vld [vmem:[%s2006] sm:$0xf]
        %v2008 = vld [vmem:[%s2006 + $0x4] sm:$0xf]
        %v2009 = vld [vmem:[%s2006 + $0x8] sm:$0xf]
        %v2010 = vld [vmem:[%s2006 + $0xc] sm:$0xf]
        %s2011 = scalar_lea.vmem %s7, 3
        %v2012 = vld [vmem:[%s2011] sm:$0x1]
        %v2014 = vlaneseq
        %v2015 = vshrl.u32 %v2014, 7
        %v2016 = vsub.s32 0, %v2015
        %v2017 = vrot.slane %v2012, %v2016
        %v2023 = vunpack.c.l.b16 %v2007
        %v2024 = vunpack.c.l.b16 %v2008
        %v2025 = vunpack.c.l.b16 %v2009
        %v2026 = vunpack.c.l.b16 %v2010
        %v2027 = vpack.c.b16 %v2024, %v2023
        %v2028 = vpack.c.b16 %v2026, %v2025
        %2031 = vmatprep.subr.bf16.mxu0 0
        %2032 = vmatpush1.bf16.msra.mxu0 %v2027
        %2033 = vmatprep.subr.bf16.mxu0 0
        %2034 = vmatpush1.bf16.msra.mxu0 %v2028
        %2035 = vmatprep.subr.bf16.mxu0 0
        %2036 = vmatpush1.bf16.msra.mxu0 0
        %2037 = vmatprep.subr.bf16.mxu0 0
        %2038 = vmatpush1.bf16.msra.mxu0 0
        %2039 = vmatprep.subr.bf16.mxu0 0
        %2040 = vmatpush1.bf16.msra.mxu0 0
        %2041 = vmatprep.subr.bf16.mxu0 0
        %2042 = vmatpush1.bf16.msra.mxu0 0
        %2043 = vmatprep.subr.bf16.mxu0 0
        %2044 = vmatpush1.bf16.msra.mxu0 0
        %2045 = vmatprep.subr.bf16.mxu0 0
        %2046 = vmatpush1.bf16.msra.mxu0 0
        %2047 = vmatprep.subr.bf16.mxu0 0
        %2048 = vmatpush1.bf16.msra.mxu0 0
        %2049 = vmatprep.subr.bf16.mxu0 0
        %2050 = vmatpush1.bf16.msra.mxu0 0
        %2051 = vmatprep.subr.bf16.mxu0 0
        %2052 = vmatpush1.bf16.msra.mxu0 0
        %2053 = vmatprep.subr.bf16.mxu0 0
        %2054 = vmatpush1.bf16.msra.mxu0 0
        %2055 = vmatprep.subr.bf16.mxu0 0
        %2056 = vmatpush1.bf16.msra.mxu0 0
        %2057 = vmatprep.subr.bf16.mxu0 0
        %2058 = vmatpush1.bf16.msra.mxu0 0
        %2059 = vmatprep.subr.bf16.mxu0 0
        %2060 = vmatpush1.bf16.msra.mxu0 0
        %2061 = vmatprep.subr.bf16.mxu0 0
        %2062 = vmatpush1.bf16.msra.mxu0 0
        %2063 = vmatprep.mubr.bf16.mxu0 0
        %2064 = vmatmul.mubr.bf16.gmra.mrb[0].mxu0 %v634
        %v2065 = vpop.f32.mrb[0].mxu0
        %v2066 = vadd.f32 %v2017, %v2065
        %v2067 = vpop.f32.mrb[0].mxu0
        %v2068 = vpop.f32.mrb[0].mxu0
        %v2069 = vadd.f32 %v2017, %v2068
        %v2070 = vpop.f32.mrb[0].mxu0
        %2071 = vmatprep.mubr.bf16.mxu0 0
        %2072 = vmatmul.mubr.bf16.gmra.mrb[0].mxu0 %v637
        %v2073 = vpop.f32.mrb[0].mxu0
        %v2074 = vadd.f32 %v2017, %v2073
        %v2075 = vpop.f32.mrb[0].mxu0
        %v2076 = vpop.f32.mrb[0].mxu0
        %v2077 = vpop.f32.mrb[0].mxu0
        %2078 = vdwg.mxu0
        %s2079 = scalar_lea.vmem %s5, 48
        %v2080 = vld [vmem:[%s2079] sm:$0xf]
        %v2081 = vld [vmem:[%s2079 + $0x4] sm:$0xf]
        %v2082 = vld [vmem:[%s2079 + $0x8] sm:$0xf]
        %v2083 = vld [vmem:[%s2079 + $0xc] sm:$0xf]
        %s2084 = scalar_lea.vmem %s8, 3
        %v2085 = vld [vmem:[%s2084] sm:$0x1]
        %v2087 = vlaneseq
        %v2088 = vshrl.u32 %v2087, 7
        %v2089 = vsub.s32 0, %v2088
        %v2090 = vrot.slane %v2085, %v2089
        %v2096 = vunpack.c.l.b16 %v2080
        %v2097 = vunpack.c.l.b16 %v2081
        %v2098 = vunpack.c.l.b16 %v2082
        %v2099 = vunpack.c.l.b16 %v2083
        %v2100 = vpack.c.b16 %v2097, %v2096
        %v2101 = vpack.c.b16 %v2099, %v2098
        %2104 = vmatprep.subr.bf16.mxu0 0
        %2105 = vmatpush1.bf16.msra.mxu0 %v2100
        %2106 = vmatprep.subr.bf16.mxu0 0
        %2107 = vmatpush1.bf16.msra.mxu0 %v2101
        %2108 = vmatprep.subr.bf16.mxu0 0
        %2109 = vmatpush1.bf16.msra.mxu0 0
        %2110 = vmatprep.subr.bf16.mxu0 0
        %2111 = vmatpush1.bf16.msra.mxu0 0
        %2112 = vmatprep.subr.bf16.mxu0 0
        %2113 = vmatpush1.bf16.msra.mxu0 0
        %2114 = vmatprep.subr.bf16.mxu0 0
        %2115 = vmatpush1.bf16.msra.mxu0 0
        %2116 = vmatprep.subr.bf16.mxu0 0
        %2117 = vmatpush1.bf16.msra.mxu0 0
        %2118 = vmatprep.subr.bf16.mxu0 0
        %2119 = vmatpush1.bf16.msra.mxu0 0
        %2120 = vmatprep.subr.bf16.mxu0 0
        %2121 = vmatpush1.bf16.msra.mxu0 0
        %2122 = vmatprep.subr.bf16.mxu0 0
        %2123 = vmatpush1.bf16.msra.mxu0 0
        %2124 = vmatprep.subr.bf16.mxu0 0
        %2125 = vmatpush1.bf16.msra.mxu0 0
        %2126 = vmatprep.subr.bf16.mxu0 0
        %2127 = vmatpush1.bf16.msra.mxu0 0
        %2128 = vmatprep.subr.bf16.mxu0 0
        %2129 = vmatpush1.bf16.msra.mxu0 0
        %2130 = vmatprep.subr.bf16.mxu0 0
        %2131 = vmatpush1.bf16.msra.mxu0 0
        %2132 = vmatprep.subr.bf16.mxu0 0
        %2133 = vmatpush1.bf16.msra.mxu0 0
        %2134 = vmatprep.subr.bf16.mxu0 0
        %2135 = vmatpush1.bf16.msra.mxu0 0
        %2136 = vmatprep.mubr.bf16.mxu0 0
        %2137 = vmatmul.mubr.bf16.gmra.mrb[0].mxu0 %v634
        %v2138 = vpop.f32.mrb[0].mxu0
        %v2139 = vadd.f32 %v2090, %v2138
        %v2140 = vpop.f32.mrb[0].mxu0
        %v2141 = vpop.f32.mrb[0].mxu0
        %v2142 = vadd.f32 %v2090, %v2141
        %v2143 = vpop.f32.mrb[0].mxu0
        %2144 = vmatprep.mubr.bf16.mxu0 0
        %2145 = vmatmul.mubr.bf16.gmra.mrb[0].mxu0 %v637
        %v2146 = vpop.f32.mrb[0].mxu0
        %v2147 = vadd.f32 %v2090, %v2146
        %v2148 = vpop.f32.mrb[0].mxu0
        %v2149 = vpop.f32.mrb[0].mxu0
        %v2150 = vpop.f32.mrb[0].mxu0
        %2151 = vdwg.mxu0
        %v2152 = vpack.c.bf16 %v1996, %v1993
        %v2153 = vpack.c.bf16 %v2001, %v2001
        %v2154 = vpack.c.bf16 %v2069, %v2066
        %v2155 = vpack.c.bf16 %v2074, %v2074
        %v2157 = vsel %vm833, %v2152, 0
        %v2160 = vsel %vm833, %v2153, 0
        %v2163 = vsel %vm833, %v2154, 0
        %v2166 = vsel %vm833, %v2155, 0
        %2168 = vmatprep.subr.bf16.mxu0 0
        %2169 = vmatpush1.bf16.xpose.msra.mxu0 %v2163
        %2170 = vmatprep.subr.bf16.mxu0 0
        %2171 = vmatpush1.bf16.xpose.msra.mxu0 %v2166
        %2172 = vmatprep.subr.bf16.mxu0 0
        %2173 = vmatpush1.bf16.xpose.msra.mxu0 0
        %2174 = vmatprep.subr.bf16.mxu0 0
        %2175 = vmatpush1.bf16.xpose.msra.mxu0 0
        %2176 = vmatprep.subr.bf16.mxu0 0
        %2177 = vmatpush1.bf16.xpose.msra.mxu0 0
        %2178 = vmatprep.subr.bf16.mxu0 0
        %2179 = vmatpush1.bf16.xpose.msra.mxu0 0
        %2180 = vmatprep.subr.bf16.mxu0 0
        %2181 = vmatpush1.bf16.xpose.msra.mxu0 0
        %2182 = vmatprep.subr.bf16.mxu0 0
        %2183 = vmatpush1.bf16.xpose.msra.mxu0 0
        %2184 = vmatprep.subr.bf16.mxu0 0
        %2185 = vmatpush1.bf16.xpose.msra.mxu0 0
        %2186 = vmatprep.subr.bf16.mxu0 0
        %2187 = vmatpush1.bf16.xpose.msra.mxu0 0
        %2188 = vmatprep.subr.bf16.mxu0 0
        %2189 = vmatpush1.bf16.xpose.msra.mxu0 0
        %2190 = vmatprep.subr.bf16.mxu0 0
        %2191 = vmatpush1.bf16.xpose.msra.mxu0 0
        %2192 = vmatprep.subr.bf16.mxu0 0
        %2193 = vmatpush1.bf16.xpose.msra.mxu0 0
        %2194 = vmatprep.subr.bf16.mxu0 0
        %2195 = vmatpush1.bf16.xpose.msra.mxu0 0
        %2196 = vmatprep.subr.bf16.mxu0 0
        %2197 = vmatpush1.bf16.xpose.msra.mxu0 0
        %2198 = vmatprep.subr.bf16.mxu0 0
        %2199 = vmatpush1.bf16.xpose.msra.mxu0 0
        %2200 = vmatprep.mubr.bf16.mxu0 0
        %2201 = vmatmul.mubr.bf16.gmra.mrb[0].mxu0 %v2157
        %v2202 = vpop.f32.mrb[0].mxu0
        %v2203 = vadd.f32 0.0, %v2202
        %v2204 = vpop.f32.mrb[0].mxu0
        %v2205 = vpop.f32.mrb[0].mxu0
        %v2206 = vadd.f32 0.0, %v2205
        %v2207 = vpop.f32.mrb[0].mxu0
        %2208 = vmatprep.mubr.bf16.mxu0 0
        %2209 = vmatmul.mubr.bf16.gmra.mrb[0].mxu0 %v2160
        %v2210 = vpop.f32.mrb[0].mxu0
        %v2211 = vadd.f32 0.0, %v2210
        %v2212 = vpop.f32.mrb[0].mxu0
        %v2213 = vpop.f32.mrb[0].mxu0
        %v2214 = vpop.f32.mrb[0].mxu0
        %2215 = vdwg.mxu0
        %v2216 = vsel %vm894, %v2203, -inf
        %2217 = vmax.xlane.f32.xlu0 %v2216
        %v2218 = vpop.xlane.xlu0 %2217
        %v2219 = vsel %vm894, %v2206, -inf
        %2220 = vmax.xlane.f32.xlu0 %v2219
        %v2221 = vpop.xlane.xlu0 %2220
        %v2222 = vsel %vm901, %v2211, -inf
        %2223 = vmax.xlane.f32.xlu0 %v2222
        %v2224 = vpop.xlane.xlu0 %2223
        %v2225 = vsub.f32 %v2203, %v2218
        %v2226 = vsub.f32 %v2206, %v2221
        %v2227 = vsub.f32 %v2211, %v2224
        %v2228 = vmul.f32 %v2225, 1.442695
        %v2229 = vpow.pop %v2228
        %v2230 = vmul.f32 %v2226, 1.442695
        %v2231 = vpow.pop %v2230
        %v2232 = vmul.f32 %v2227, 1.442695
        %v2233 = vpow.pop %v2232
        %v2234 = vsel %vm894, %v2229, 0.0
        %2235 = vadd.xlane.f32.xlu0 %v2234
        %v2236 = vpop.xlane.xlu0 %2235
        %v2237 = vsel %vm894, %v2231, 0.0
        %2238 = vadd.xlane.f32.xlu0 %v2237
        %v2239 = vpop.xlane.xlu0 %2238
        %v2240 = vsel %vm901, %v2233, 0.0
        %2241 = vadd.xlane.f32.xlu0 %v2240
        %v2242 = vpop.xlane.xlu0 %2241
        %v2243 = vrcp.pop %v2236
        %v2244 = vrcp.pop %v2239
        %v2245 = vrcp.pop %v2242
        %v2246 = vpack.c.bf16 %v2231, %v2229
        %v2247 = vpack.c.bf16 %v2233, %v2233
        %v2248 = vpack.c.bf16 %v2142, %v2139
        %v2249 = vpack.c.bf16 %v2147, %v2147
        %v2251 = vsel %vm894, %v2246, 0
        %v2254 = vsel %vm894, %v2247, 0
        %v2257 = vand.u32 %v2249, %v938
        %2259 = vmatprep.subr.bf16.mxu0 0
        %2260 = vmatpush1.bf16.msra.mxu0 %v2248
        %2261 = vmatprep.subr.bf16.mxu0 0
        %2262 = vmatpush1.bf16.msra.mxu0 %v2257
        %2263 = vmatprep.subr.bf16.mxu0 0
        %2264 = vmatpush1.bf16.msra.mxu0 0
        %2265 = vmatprep.subr.bf16.mxu0 0
        %2266 = vmatpush1.bf16.msra.mxu0 0
        %2267 = vmatprep.subr.bf16.mxu0 0
        %2268 = vmatpush1.bf16.msra.mxu0 0
        %2269 = vmatprep.subr.bf16.mxu0 0
        %2270 = vmatpush1.bf16.msra.mxu0 0
        %2271 = vmatprep.subr.bf16.mxu0 0
        %2272 = vmatpush1.bf16.msra.mxu0 0
        %2273 = vmatprep.subr.bf16.mxu0 0
        %2274 = vmatpush1.bf16.msra.mxu0 0
        %2275 = vmatprep.subr.bf16.mxu0 0
        %2276 = vmatpush1.bf16.msra.mxu0 0
        %2277 = vmatprep.subr.bf16.mxu0 0
        %2278 = vmatpush1.bf16.msra.mxu0 0
        %2279 = vmatprep.subr.bf16.mxu0 0
        %2280 = vmatpush1.bf16.msra.mxu0 0
        %2281 = vmatprep.subr.bf16.mxu0 0
        %2282 = vmatpush1.bf16.msra.mxu0 0
        %2283 = vmatprep.subr.bf16.mxu0 0
        %2284 = vmatpush1.bf16.msra.mxu0 0
        %2285 = vmatprep.subr.bf16.mxu0 0
        %2286 = vmatpush1.bf16.msra.mxu0 0
        %2287 = vmatprep.subr.bf16.mxu0 0
        %2288 = vmatpush1.bf16.msra.mxu0 0
        %2289 = vmatprep.subr.bf16.mxu0 0
        %2290 = vmatpush1.bf16.msra.mxu0 0
        %2291 = vmatprep.mubr.bf16.mxu0 0
        %2292 = vmatmul.mubr.bf16.gmra.mrb[0].mxu0 %v2251
        %v2293 = vpop.f32.mrb[0].mxu0
        %v2294 = vadd.f32 0.0, %v2293
        %v2295 = vpop.f32.mrb[0].mxu0
        %v2296 = vpop.f32.mrb[0].mxu0
        %v2297 = vadd.f32 0.0, %v2296
        %v2298 = vpop.f32.mrb[0].mxu0
        %2299 = vmatprep.mubr.bf16.mxu0 0
        %2300 = vmatmul.mubr.bf16.gmra.mrb[0].mxu0 %v2254
        %v2301 = vpop.f32.mrb[0].mxu0
        %v2302 = vadd.f32 0.0, %v2301
        %v2303 = vpop.f32.mrb[0].mxu0
        %v2304 = vpop.f32.mrb[0].mxu0
        %v2305 = vpop.f32.mrb[0].mxu0
        %2306 = vdwg.mxu0
        %v2307 = vmul.f32 %v2294, %v2243
        %v2308 = vmul.f32 %v2297, %v2244
        %v2309 = vmul.f32 %v2302, %v2245
        %v2310 = vpack.c.bf16 %v2308, %v2307
        %v2311 = vpack.c.bf16 %v2309, %v2309
        %s2312 = scalar_lea.vmem %s9, 12
        %v2313 = vld [vmem:[%s2312] sm:$0xf]
        %v2315 = vsel %vm833, %v2310, 0
        %v2318 = vsel %vm833, %v2311, 0
        %v2321 = vsel %vm1383, %v2313, 0
        %2323 = vmatprep.subr.bf16.mxu0 0
        %2324 = vmatpush1.bf16.msra.mxu0 %v2321
        %2325 = vmatprep.subr.bf16.mxu0 0
        %2326 = vmatpush1.bf16.msra.mxu0 0
        %2327 = vmatprep.subr.bf16.mxu0 0
        %2328 = vmatpush1.bf16.msra.mxu0 0
        %2329 = vmatprep.subr.bf16.mxu0 0
        %2330 = vmatpush1.bf16.msra.mxu0 0
        %2331 = vmatprep.subr.bf16.mxu0 0
        %2332 = vmatpush1.bf16.msra.mxu0 0
        %2333 = vmatprep.subr.bf16.mxu0 0
        %2334 = vmatpush1.bf16.msra.mxu0 0
        %2335 = vmatprep.subr.bf16.mxu0 0
        %2336 = vmatpush1.bf16.msra.mxu0 0
        %2337 = vmatprep.subr.bf16.mxu0 0
        %2338 = vmatpush1.bf16.msra.mxu0 0
        %2339 = vmatprep.subr.bf16.mxu0 0
        %2340 = vmatpush1.bf16.msra.mxu0 0
        %2341 = vmatprep.subr.bf16.mxu0 0
        %2342 = vmatpush1.bf16.msra.mxu0 0
        %2343 = vmatprep.subr.bf16.mxu0 0
        %2344 = vmatpush1.bf16.msra.mxu0 0
        %2345 = vmatprep.subr.bf16.mxu0 0
        %2346 = vmatpush1.bf16.msra.mxu0 0
        %2347 = vmatprep.subr.bf16.mxu0 0
        %2348 = vmatpush1.bf16.msra.mxu0 0
        %2349 = vmatprep.subr.bf16.mxu0 0
        %2350 = vmatpush1.bf16.msra.mxu0 0
        %2351 = vmatprep.subr.bf16.mxu0 0
        %2352 = vmatpush1.bf16.msra.mxu0 0
        %2353 = vmatprep.subr.bf16.mxu0 0
        %2354 = vmatpush1.bf16.msra.mxu0 0
        %2355 = vmatprep.mubr.bf16.mxu0 0
        %2356 = vmatmul.mubr.bf16.gmra.mrb[0].mxu0 %v2315
        %v2357 = vpop.f32.mrb[0].mxu0
        %v2358 = vadd.f32 0.0, %v2357
        %v2359 = vpop.f32.mrb[0].mxu0
        %v2360 = vpop.f32.mrb[0].mxu0
        %v2361 = vadd.f32 0.0, %v2360
        %v2362 = vpop.f32.mrb[0].mxu0
        %2363 = vmatprep.mubr.bf16.mxu0 0
        %2364 = vmatmul.mubr.bf16.gmra.mrb[0].mxu0 %v2318
        %v2365 = vpop.f32.mrb[0].mxu0
        %v2366 = vadd.f32 0.0, %v2365
        %v2367 = vpop.f32.mrb[0].mxu0
        %v2368 = vpop.f32.mrb[0].mxu0
        %v2369 = vpop.f32.mrb[0].mxu0
        %2370 = vdwg.mxu0
        %v2371 = vadd.f32 %v1930, %v2358
        %v2372 = vadd.f32 %v1931, %v2361
        %v2373 = vadd.f32 %v1932, %v2366
        %v2374 = vlaneseq
        %v2375 = vshrl.u32 %v2374, 7
        %v2376 = vsub.s32 2, %v2375
        %v2377 = vrot.slane %v551, %v2376
        %v2378 = vadd.f32 %v2371, %v2377
        %v2379 = vadd.f32 %v2372, %v2377
        %v2380 = vadd.f32 %v2373, %v2377
        %v2381 = vlaneseq
        %v2382 = vshrl.u32 %v2381, 7
        %v2383 = vsub.s32 3, %v2382
        %v2384 = vrot.slane %v551, %v2383
        %v2385 = vmul.f32 %v2384, %v2378
        %v2386 = vmul.f32 %v2384, %v2379
        %v2387 = vmul.f32 %v2384, %v2380
        %v2388 = vadd.f32 %v545, %v2385
        %v2389 = vadd.f32 %v548, %v2386
        %v2390 = vadd.f32 %v472, %v2387
        %v2391 = vsel %vm552, %v2388, 0.0
        %2392 = vadd.xlane.f32.xlu0 %v2391
        %v2393 = vpop.xlane.xlu0 %2392
        %v2394 = vsel %vm552, %v2389, 0.0
        %2395 = vadd.xlane.f32.xlu0 %v2394
        %v2396 = vpop.xlane.xlu0 %2395
        %v2397 = vsel %vm559, %v2390, 0.0
        %2398 = vadd.xlane.f32.xlu0 %v2397
        %v2399 = vpop.xlane.xlu0 %2398
        %v2400 = vmul.f32 %v2393, %v563
        %v2401 = vmul.f32 %v2396, %v563
        %v2402 = vmul.f32 %v2399, %v563
        %v2403 = vsub.f32 %v2388, %v2400
        %v2404 = vsub.f32 %v2389, %v2401
        %v2405 = vsub.f32 %v2390, %v2402
        %v2406 = vmul.f32 %v2403, %v2403
        %v2407 = vmul.f32 %v2404, %v2404
        %v2408 = vmul.f32 %v2405, %v2405
        %v2409 = vsel %vm552, %v2406, 0.0
        %2410 = vadd.xlane.f32.xlu0 %v2409
        %v2411 = vpop.xlane.xlu0 %2410
        %v2412 = vsel %vm552, %v2407, 0.0
        %2413 = vadd.xlane.f32.xlu0 %v2412
        %v2414 = vpop.xlane.xlu0 %2413
        %v2415 = vsel %vm559, %v2408, 0.0
        %2416 = vadd.xlane.f32.xlu0 %v2415
        %v2417 = vpop.xlane.xlu0 %2416
        %v2418 = vmul.f32 %v2411, %v563
        %v2419 = vmul.f32 %v2414, %v563
        %v2420 = vmul.f32 %v2417, %v563
        %v2421 = vadd.f32 %v2418, 1e-06
        %v2422 = vadd.f32 %v2419, 1e-06
        %v2423 = vadd.f32 %v2420, 1e-06
        %v2424 = vrsqrt.pop %v2421
        %v2425 = vrsqrt.pop %v2422
        %v2426 = vrsqrt.pop %v2423
        %v2427 = vmul.f32 %v2403, %v2424
        %v2428 = vmul.f32 %v2404, %v2425
        %v2429 = vmul.f32 %v2405, %v2426
        %v2430 = vlaneseq
        %v2431 = vshrl.u32 %v2430, 7
        %v2432 = vsub.s32 4, %v2431
        %v2433 = vrot.slane %v551, %v2432
        %v2434 = vmul.f32 %v2427, %v2433
        %v2435 = vmul.f32 %v2428, %v2433
        %v2436 = vmul.f32 %v2429, %v2433
        %v2437 = vlaneseq
        %v2438 = vshrl.u32 %v2437, 7
        %v2439 = vsub.s32 5, %v2438
        %v2440 = vrot.slane %v551, %v2439
        %v2441 = vadd.f32 %v2434, %v2440
        %v2442 = vadd.f32 %v2435, %v2440
        %v2443 = vadd.f32 %v2436, %v2440
        %v2444 = vpack.c.bf16 %v2442, %v2441
        %v2445 = vpack.c.bf16 %v2443, %v2443
        %v2446 = vld [vmem:[%s10] sm:$0xf]
        %v2447 = vld [vmem:[%s10 + $0x4] sm:$0xf]
        %v2448 = vld [vmem:[%s10 + $0x8] sm:$0xf]
        %v2449 = vld [vmem:[%s10 + $0xc] sm:$0xf]
        %v2450 = vld [vmem:[%s11] sm:$0x1]
        %v2452 = vlaneseq
        %v2453 = vshrl.u32 %v2452, 7
        %v2454 = vsub.s32 0, %v2453
        %v2455 = vrot.slane %v2450, %v2454
        %v2461 = vunpack.c.l.b16 %v2446
        %v2462 = vunpack.c.l.b16 %v2447
        %v2463 = vunpack.c.l.b16 %v2448
        %v2464 = vunpack.c.l.b16 %v2449
        %v2465 = vpack.c.b16 %v2462, %v2461
        %v2466 = vpack.c.b16 %v2464, %v2463
        %v2470 = vsel %vm552, %v2444, 0
        %v2473 = vsel %vm552, %v2445, 0
        %2475 = vmatprep.subr.bf16.mxu0 0
        %2476 = vmatpush1.bf16.msra.mxu0 %v2465
        %2477 = vmatprep.subr.bf16.mxu0 0
        %2478 = vmatpush1.bf16.msra.mxu0 %v2466
        %2479 = vmatprep.subr.bf16.mxu0 0
        %2480 = vmatpush1.bf16.msra.mxu0 0
        %2481 = vmatprep.subr.bf16.mxu0 0
        %2482 = vmatpush1.bf16.msra.mxu0 0
        %2483 = vmatprep.subr.bf16.mxu0 0
        %2484 = vmatpush1.bf16.msra.mxu0 0
        %2485 = vmatprep.subr.bf16.mxu0 0
        %2486 = vmatpush1.bf16.msra.mxu0 0
        %2487 = vmatprep.subr.bf16.mxu0 0
        %2488 = vmatpush1.bf16.msra.mxu0 0
        %2489 = vmatprep.subr.bf16.mxu0 0
        %2490 = vmatpush1.bf16.msra.mxu0 0
        %2491 = vmatprep.subr.bf16.mxu0 0
        %2492 = vmatpush1.bf16.msra.mxu0 0
        %2493 = vmatprep.subr.bf16.mxu0 0
        %2494 = vmatpush1.bf16.msra.mxu0 0
        %2495 = vmatprep.subr.bf16.mxu0 0
        %2496 = vmatpush1.bf16.msra.mxu0 0
        %2497 = vmatprep.subr.bf16.mxu0 0
        %2498 = vmatpush1.bf16.msra.mxu0 0
        %2499 = vmatprep.subr.bf16.mxu0 0
        %2500 = vmatpush1.bf16.msra.mxu0 0
        %2501 = vmatprep.subr.bf16.mxu0 0
        %2502 = vmatpush1.bf16.msra.mxu0 0
        %2503 = vmatprep.subr.bf16.mxu0 0
        %2504 = vmatpush1.bf16.msra.mxu0 0
        %2505 = vmatprep.subr.bf16.mxu0 0
        %2506 = vmatpush1.bf16.msra.mxu0 0
        %2507 = vmatprep.mubr.bf16.mxu0 0
        %2508 = vmatmul.mubr.bf16.gmra.mrb[0].mxu0 %v2470
        %v2509 = vpop.f32.mrb[0].mxu0
        %v2510 = vadd.f32 %v2455, %v2509
        %v2511 = vpop.f32.mrb[0].mxu0
        %v2512 = vpop.f32.mrb[0].mxu0
        %v2513 = vadd.f32 %v2455, %v2512
        %v2514 = vpop.f32.mrb[0].mxu0
        %2515 = vmatprep.mubr.bf16.mxu0 0
        %2516 = vmatmul.mubr.bf16.gmra.mrb[0].mxu0 %v2473
        %v2517 = vpop.f32.mrb[0].mxu0
        %v2518 = vadd.f32 %v2455, %v2517
        %v2519 = vpop.f32.mrb[0].mxu0
        %v2520 = vpop.f32.mrb[0].mxu0
        %v2521 = vpop.f32.mrb[0].mxu0
        %2522 = vdwg.mxu0
        %v2523 = vmul.f32 %v2510, 0.5
        %v2524 = vmul.f32 %v2513, 0.5
        %v2525 = vmul.f32 %v2518, 0.5
        %v2526 = vmul.f32 %v2510, 0.044715
        %v2527 = vmul.f32 %v2513, 0.044715
        %v2528 = vmul.f32 %v2518, 0.044715
        %v2529 = vmul.f32 %v2526, %v2510
        %v2530 = vmul.f32 %v2527, %v2513
        %v2531 = vmul.f32 %v2528, %v2518
        %v2532 = vmul.f32 %v2529, %v2510
        %v2533 = vmul.f32 %v2530, %v2513
        %v2534 = vmul.f32 %v2531, %v2518
        %v2535 = vadd.f32 %v2510, %v2532
        %v2536 = vadd.f32 %v2513, %v2533
        %v2537 = vadd.f32 %v2518, %v2534
        %v2538 = vmul.f32 %v2535, 0.7978846
        %v2539 = vmul.f32 %v2536, 0.7978846
        %v2540 = vmul.f32 %v2537, 0.7978846
        %v2541 = vtanh.pop %v2538
        %v2542 = vtanh.pop %v2539
        %v2543 = vtanh.pop %v2540
        %v2544 = vadd.f32 %v2541, 1.0
        %v2545 = vadd.f32 %v2542, 1.0
        %v2546 = vadd.f32 %v2543, 1.0
        %v2547 = vmul.f32 %v2523, %v2544
        %v2548 = vmul.f32 %v2524, %v2545
        %v2549 = vmul.f32 %v2525, %v2546
        %v2550 = vpack.c.bf16 %v2548, %v2547
        %v2551 = vpack.c.bf16 %v2549, %v2549
        %v2552 = vld [vmem:[%s12] sm:$0xf]
        %v2553 = vld [vmem:[%s12 + $0x4] sm:$0xf]
        %v2554 = vld [vmem:[%s12 + $0x8] sm:$0xf]
        %v2555 = vld [vmem:[%s12 + $0xc] sm:$0xf]
        %v2556 = vld [vmem:[%s12 + $0x10] sm:$0xf]
        %v2557 = vld [vmem:[%s12 + $0x14] sm:$0xf]
        %v2558 = vld [vmem:[%s12 + $0x18] sm:$0xf]
        %v2559 = vld [vmem:[%s12 + $0x1c] sm:$0xf]
        %v2560 = vld [vmem:[%s12 + $0x20] sm:$0xf]
        %v2561 = vld [vmem:[%s12 + $0x24] sm:$0xf]
        %v2562 = vld [vmem:[%s12 + $0x28] sm:$0xf]
        %v2563 = vld [vmem:[%s12 + $0x2c] sm:$0xf]
        %v2564 = vld [vmem:[%s12 + $0x30] sm:$0xf]
        %v2565 = vld [vmem:[%s12 + $0x34] sm:$0xf]
        %v2566 = vld [vmem:[%s12 + $0x38] sm:$0xf]
        %v2567 = vld [vmem:[%s12 + $0x3c] sm:$0xf]
        %v2568 = vlaneseq
        %v2569 = vshrl.u32 %v2568, 7
        %v2570 = vsub.s32 6, %v2569
        %v2571 = vrot.slane %v551, %v2570
        %v2588 = vunpack.c.l.b16 %v2552
        %v2589 = vunpack.c.l.b16 %v2553
        %v2590 = vunpack.c.l.b16 %v2554
        %v2591 = vunpack.c.l.b16 %v2555
        %v2592 = vunpack.c.l.b16 %v2556
        %v2593 = vunpack.c.l.b16 %v2557
        %v2594 = vunpack.c.l.b16 %v2558
        %v2595 = vunpack.c.l.b16 %v2559
        %v2596 = vunpack.c.l.b16 %v2560
        %v2597 = vunpack.c.l.b16 %v2561
        %v2598 = vunpack.c.l.b16 %v2562
        %v2599 = vunpack.c.l.b16 %v2563
        %v2600 = vunpack.c.l.b16 %v2564
        %v2601 = vunpack.c.l.b16 %v2565
        %v2602 = vunpack.c.l.b16 %v2566
        %v2603 = vunpack.c.l.b16 %v2567
        %v2604 = vpack.c.b16 %v2589, %v2588
        %v2605 = vpack.c.b16 %v2591, %v2590
        %v2606 = vpack.c.b16 %v2593, %v2592
        %v2607 = vpack.c.b16 %v2595, %v2594
        %v2608 = vpack.c.b16 %v2597, %v2596
        %v2609 = vpack.c.b16 %v2599, %v2598
        %v2610 = vpack.c.b16 %v2601, %v2600
        %v2611 = vpack.c.b16 %v2603, %v2602
        %2620 = vmatprep.subr.bf16.mxu0 0
        %2621 = vmatpush1.bf16.msra.mxu0 %v2604
        %2622 = vmatprep.subr.bf16.mxu0 0
        %2623 = vmatpush1.bf16.msra.mxu0 %v2605
        %2624 = vmatprep.subr.bf16.mxu0 0
        %2625 = vmatpush1.bf16.msra.mxu0 %v2606
        %2626 = vmatprep.subr.bf16.mxu0 0
        %2627 = vmatpush1.bf16.msra.mxu0 %v2607
        %2628 = vmatprep.subr.bf16.mxu0 0
        %2629 = vmatpush1.bf16.msra.mxu0 %v2608
        %2630 = vmatprep.subr.bf16.mxu0 0
        %2631 = vmatpush1.bf16.msra.mxu0 %v2609
        %2632 = vmatprep.subr.bf16.mxu0 0
        %2633 = vmatpush1.bf16.msra.mxu0 %v2610
        %2634 = vmatprep.subr.bf16.mxu0 0
        %2635 = vmatpush1.bf16.msra.mxu0 %v2611
        %2636 = vmatprep.subr.bf16.mxu0 0
        %2637 = vmatpush1.bf16.msra.mxu0 0
        %2638 = vmatprep.subr.bf16.mxu0 0
        %2639 = vmatpush1.bf16.msra.mxu0 0
        %2640 = vmatprep.subr.bf16.mxu0 0
        %2641 = vmatpush1.bf16.msra.mxu0 0
        %2642 = vmatprep.subr.bf16.mxu0 0
        %2643 = vmatpush1.bf16.msra.mxu0 0
        %2644 = vmatprep.subr.bf16.mxu0 0
        %2645 = vmatpush1.bf16.msra.mxu0 0
        %2646 = vmatprep.subr.bf16.mxu0 0
        %2647 = vmatpush1.bf16.msra.mxu0 0
        %2648 = vmatprep.subr.bf16.mxu0 0
        %2649 = vmatpush1.bf16.msra.mxu0 0
        %2650 = vmatprep.subr.bf16.mxu0 0
        %2651 = vmatpush1.bf16.msra.mxu0 0
        %2652 = vmatprep.mubr.bf16.mxu0 0
        %2653 = vmatmul.mubr.bf16.gmra.mrb[0].mxu0 %v2550
        %v2654 = vpop.f32.mrb[0].mxu0
        %v2655 = vadd.f32 %v2571, %v2654
        %v2656 = vpop.f32.mrb[0].mxu0
        %v2657 = vpop.f32.mrb[0].mxu0
        %v2658 = vadd.f32 %v2571, %v2657
        %v2659 = vpop.f32.mrb[0].mxu0
        %2660 = vmatprep.mubr.bf16.mxu0 0
        %2661 = vmatmul.mubr.bf16.gmra.mrb[0].mxu0 %v2551
        %v2662 = vpop.f32.mrb[0].mxu0
        %v2663 = vadd.f32 %v2571, %v2662
        %v2664 = vpop.f32.mrb[0].mxu0
        %v2665 = vpop.f32.mrb[0].mxu0
        %v2666 = vpop.f32.mrb[0].mxu0
        %2667 = vdwg.mxu0
        %v2668 = vlaneseq
        %v2669 = vshrl.u32 %v2668, 7
        %v2670 = vsub.s32 7, %v2669
        %v2671 = vrot.slane %v551, %v2670
        %v2672 = vmul.f32 %v2671, %v2655
        %v2673 = vmul.f32 %v2671, %v2658
        %v2674 = vmul.f32 %v2671, %v2663
        %v2675 = vadd.f32 %v2388, %v2672
        %v2676 = vadd.f32 %v2389, %v2673
        %v2677 = vadd.f32 %v2390, %v2674
        %s2678 = scalar_lea.vmem %s13, 8
        %v2679 = vld [vmem:[%s2678] sm:$0xff]
        %v2680 = vsel %vm552, %v2675, 0.0
        %2681 = vadd.xlane.f32.xlu0 %v2680
        %v2682 = vpop.xlane.xlu0 %2681
        %v2683 = vsel %vm552, %v2676, 0.0
        %2684 = vadd.xlane.f32.xlu0 %v2683
        %v2685 = vpop.xlane.xlu0 %2684
        %v2686 = vsel %vm559, %v2677, 0.0
        %2687 = vadd.xlane.f32.xlu0 %v2686
        %v2688 = vpop.xlane.xlu0 %2687
        %v2689 = vmul.f32 %v2682, %v563
        %v2690 = vmul.f32 %v2685, %v563
        %v2691 = vmul.f32 %v2688, %v563
        %v2692 = vsub.f32 %v2675, %v2689
        %v2693 = vsub.f32 %v2676, %v2690
        %v2694 = vsub.f32 %v2677, %v2691
        %v2695 = vmul.f32 %v2692, %v2692
        %v2696 = vmul.f32 %v2693, %v2693
        %v2697 = vmul.f32 %v2694, %v2694
        %v2698 = vsel %vm552, %v2695, 0.0
        %2699 = vadd.xlane.f32.xlu0 %v2698
        %v2700 = vpop.xlane.xlu0 %2699
        %v2701 = vsel %vm552, %v2696, 0.0
        %2702 = vadd.xlane.f32.xlu0 %v2701
        %v2703 = vpop.xlane.xlu0 %2702
        %v2704 = vsel %vm559, %v2697, 0.0
        %2705 = vadd.xlane.f32.xlu0 %v2704
        %v2706 = vpop.xlane.xlu0 %2705
        %v2707 = vmul.f32 %v2700, %v563
        %v2708 = vmul.f32 %v2703, %v563
        %v2709 = vmul.f32 %v2706, %v563
        %v2710 = vadd.f32 %v2707, 1e-06
        %v2711 = vadd.f32 %v2708, 1e-06
        %v2712 = vadd.f32 %v2709, 1e-06
        %v2713 = vrsqrt.pop %v2710
        %v2714 = vrsqrt.pop %v2711
        %v2715 = vrsqrt.pop %v2712
        %v2716 = vmul.f32 %v2692, %v2713
        %v2717 = vmul.f32 %v2693, %v2714
        %v2718 = vmul.f32 %v2694, %v2715
        %v2719 = vlaneseq
        %v2720 = vshrl.u32 %v2719, 7
        %v2721 = vsub.s32 0, %v2720
        %v2722 = vrot.slane %v2679, %v2721
        %v2723 = vmul.f32 %v2716, %v2722
        %v2724 = vmul.f32 %v2717, %v2722
        %v2725 = vmul.f32 %v2718, %v2722
        %v2726 = vlaneseq
        %v2727 = vshrl.u32 %v2726, 7
        %v2728 = vsub.s32 1, %v2727
        %v2729 = vrot.slane %v2679, %v2728
        %v2730 = vadd.f32 %v2723, %v2729
        %v2731 = vadd.f32 %v2724, %v2729
        %v2732 = vadd.f32 %v2725, %v2729
        %v2733 = vpack.c.bf16 %v2731, %v2730
        %v2734 = vpack.c.bf16 %v2732, %v2732
        %s2735 = scalar_lea.vmem %s3, 64
        %v2736 = vld [vmem:[%s2735] sm:$0xf]
        %v2737 = vld [vmem:[%s2735 + $0x4] sm:$0xf]
        %v2738 = vld [vmem:[%s2735 + $0x8] sm:$0xf]
        %v2739 = vld [vmem:[%s2735 + $0xc] sm:$0xf]
        %s2740 = scalar_lea.vmem %s6, 4
        %v2741 = vld [vmem:[%s2740] sm:$0x1]
        %v2743 = vlaneseq
        %v2744 = vshrl.u32 %v2743, 7
        %v2745 = vsub.s32 0, %v2744
        %v2746 = vrot.slane %v2741, %v2745
        %v2752 = vunpack.c.l.b16 %v2736
        %v2753 = vunpack.c.l.b16 %v2737
        %v2754 = vunpack.c.l.b16 %v2738
        %v2755 = vunpack.c.l.b16 %v2739
        %v2756 = vpack.c.b16 %v2753, %v2752
        %v2757 = vpack.c.b16 %v2755, %v2754
        %v2761 = vsel %vm552, %v2733, 0
        %v2764 = vsel %vm552, %v2734, 0
        %2766 = vmatprep.subr.bf16.mxu0 0
        %2767 = vmatpush1.bf16.msra.mxu0 %v2756
        %2768 = vmatprep.subr.bf16.mxu0 0
        %2769 = vmatpush1.bf16.msra.mxu0 %v2757
        %2770 = vmatprep.subr.bf16.mxu0 0
        %2771 = vmatpush1.bf16.msra.mxu0 0
        %2772 = vmatprep.subr.bf16.mxu0 0
        %2773 = vmatpush1.bf16.msra.mxu0 0
        %2774 = vmatprep.subr.bf16.mxu0 0
        %2775 = vmatpush1.bf16.msra.mxu0 0
        %2776 = vmatprep.subr.bf16.mxu0 0
        %2777 = vmatpush1.bf16.msra.mxu0 0
        %2778 = vmatprep.subr.bf16.mxu0 0
        %2779 = vmatpush1.bf16.msra.mxu0 0
        %2780 = vmatprep.subr.bf16.mxu0 0
        %2781 = vmatpush1.bf16.msra.mxu0 0
        %2782 = vmatprep.subr.bf16.mxu0 0
        %2783 = vmatpush1.bf16.msra.mxu0 0
        %2784 = vmatprep.subr.bf16.mxu0 0
        %2785 = vmatpush1.bf16.msra.mxu0 0
        %2786 = vmatprep.subr.bf16.mxu0 0
        %2787 = vmatpush1.bf16.msra.mxu0 0
        %2788 = vmatprep.subr.bf16.mxu0 0
        %2789 = vmatpush1.bf16.msra.mxu0 0
        %2790 = vmatprep.subr.bf16.mxu0 0
        %2791 = vmatpush1.bf16.msra.mxu0 0
        %2792 = vmatprep.subr.bf16.mxu0 0
        %2793 = vmatpush1.bf16.msra.mxu0 0
        %2794 = vmatprep.subr.bf16.mxu0 0
        %2795 = vmatpush1.bf16.msra.mxu0 0
        %2796 = vmatprep.subr.bf16.mxu0 0
        %2797 = vmatpush1.bf16.msra.mxu0 0
        %2798 = vmatprep.mubr.bf16.mxu0 0
        %2799 = vmatmul.mubr.bf16.gmra.mrb[0].mxu0 %v2761
        %v2800 = vpop.f32.mrb[0].mxu0
        %v2801 = vadd.f32 %v2746, %v2800
        %v2802 = vpop.f32.mrb[0].mxu0
        %v2803 = vpop.f32.mrb[0].mxu0
        %v2804 = vadd.f32 %v2746, %v2803
        %v2805 = vpop.f32.mrb[0].mxu0
        %2806 = vmatprep.mubr.bf16.mxu0 0
        %2807 = vmatmul.mubr.bf16.gmra.mrb[0].mxu0 %v2764
        %v2808 = vpop.f32.mrb[0].mxu0
        %v2809 = vadd.f32 %v2746, %v2808
        %v2810 = vpop.f32.mrb[0].mxu0
        %v2811 = vpop.f32.mrb[0].mxu0
        %v2812 = vpop.f32.mrb[0].mxu0
        %2813 = vdwg.mxu0
        %s2814 = scalar_lea.vmem %s4, 64
        %v2815 = vld [vmem:[%s2814] sm:$0xf]
        %v2816 = vld [vmem:[%s2814 + $0x4] sm:$0xf]
        %v2817 = vld [vmem:[%s2814 + $0x8] sm:$0xf]
        %v2818 = vld [vmem:[%s2814 + $0xc] sm:$0xf]
        %s2819 = scalar_lea.vmem %s7, 4
        %v2820 = vld [vmem:[%s2819] sm:$0x1]
        %v2822 = vlaneseq
        %v2823 = vshrl.u32 %v2822, 7
        %v2824 = vsub.s32 0, %v2823
        %v2825 = vrot.slane %v2820, %v2824
        %v2831 = vunpack.c.l.b16 %v2815
        %v2832 = vunpack.c.l.b16 %v2816
        %v2833 = vunpack.c.l.b16 %v2817
        %v2834 = vunpack.c.l.b16 %v2818
        %v2835 = vpack.c.b16 %v2832, %v2831
        %v2836 = vpack.c.b16 %v2834, %v2833
        %2839 = vmatprep.subr.bf16.mxu0 0
        %2840 = vmatpush1.bf16.msra.mxu0 %v2835
        %2841 = vmatprep.subr.bf16.mxu0 0
        %2842 = vmatpush1.bf16.msra.mxu0 %v2836
        %2843 = vmatprep.subr.bf16.mxu0 0
        %2844 = vmatpush1.bf16.msra.mxu0 0
        %2845 = vmatprep.subr.bf16.mxu0 0
        %2846 = vmatpush1.bf16.msra.mxu0 0
        %2847 = vmatprep.subr.bf16.mxu0 0
        %2848 = vmatpush1.bf16.msra.mxu0 0
        %2849 = vmatprep.subr.bf16.mxu0 0
        %2850 = vmatpush1.bf16.msra.mxu0 0
        %2851 = vmatprep.subr.bf16.mxu0 0
        %2852 = vmatpush1.bf16.msra.mxu0 0
        %2853 = vmatprep.subr.bf16.mxu0 0
        %2854 = vmatpush1.bf16.msra.mxu0 0
        %2855 = vmatprep.subr.bf16.mxu0 0
        %2856 = vmatpush1.bf16.msra.mxu0 0
        %2857 = vmatprep.subr.bf16.mxu0 0
        %2858 = vmatpush1.bf16.msra.mxu0 0
        %2859 = vmatprep.subr.bf16.mxu0 0
        %2860 = vmatpush1.bf16.msra.mxu0 0
        %2861 = vmatprep.subr.bf16.mxu0 0
        %2862 = vmatpush1.bf16.msra.mxu0 0
        %2863 = vmatprep.subr.bf16.mxu0 0
        %2864 = vmatpush1.bf16.msra.mxu0 0
        %2865 = vmatprep.subr.bf16.mxu0 0
        %2866 = vmatpush1.bf16.msra.mxu0 0
        %2867 = vmatprep.subr.bf16.mxu0 0
        %2868 = vmatpush1.bf16.msra.mxu0 0
        %2869 = vmatprep.subr.bf16.mxu0 0
        %2870 = vmatpush1.bf16.msra.mxu0 0
        %2871 = vmatprep.mubr.bf16.mxu0 0
        %2872 = vmatmul.mubr.bf16.gmra.mrb[0].mxu0 %v2761
        %v2873 = vpop.f32.mrb[0].mxu0
        %v2874 = vadd.f32 %v2825, %v2873
        %v2875 = vpop.f32.mrb[0].mxu0
        %v2876 = vpop.f32.mrb[0].mxu0
        %v2877 = vadd.f32 %v2825, %v2876
        %v2878 = vpop.f32.mrb[0].mxu0
        %2879 = vmatprep.mubr.bf16.mxu0 0
        %2880 = vmatmul.mubr.bf16.gmra.mrb[0].mxu0 %v2764
        %v2881 = vpop.f32.mrb[0].mxu0
        %v2882 = vadd.f32 %v2825, %v2881
        %v2883 = vpop.f32.mrb[0].mxu0
        %v2884 = vpop.f32.mrb[0].mxu0
        %v2885 = vpop.f32.mrb[0].mxu0
        %2886 = vdwg.mxu0
        %s2887 = scalar_lea.vmem %s5, 64
        %v2888 = vld [vmem:[%s2887] sm:$0xf]
        %v2889 = vld [vmem:[%s2887 + $0x4] sm:$0xf]
        %v2890 = vld [vmem:[%s2887 + $0x8] sm:$0xf]
        %v2891 = vld [vmem:[%s2887 + $0xc] sm:$0xf]
        %s2892 = scalar_lea.vmem %s8, 4
        %v2893 = vld [vmem:[%s2892] sm:$0x1]
        %v2895 = vlaneseq
        %v2896 = vshrl.u32 %v2895, 7
        %v2897 = vsub.s32 0, %v2896
        %v2898 = vrot.slane %v2893, %v2897
        %v2904 = vunpack.c.l.b16 %v2888
        %v2905 = vunpack.c.l.b16 %v2889
        %v2906 = vunpack.c.l.b16 %v2890
        %v2907 = vunpack.c.l.b16 %v2891
        %v2908 = vpack.c.b16 %v2905, %v2904
        %v2909 = vpack.c.b16 %v2907, %v2906
        %2912 = vmatprep.subr.bf16.mxu0 0
        %2913 = vmatpush1.bf16.msra.mxu0 %v2908
        %2914 = vmatprep.subr.bf16.mxu0 0
        %2915 = vmatpush1.bf16.msra.mxu0 %v2909
        %2916 = vmatprep.subr.bf16.mxu0 0
        %2917 = vmatpush1.bf16.msra.mxu0 0
        %2918 = vmatprep.subr.bf16.mxu0 0
        %2919 = vmatpush1.bf16.msra.mxu0 0
        %2920 = vmatprep.subr.bf16.mxu0 0
        %2921 = vmatpush1.bf16.msra.mxu0 0
        %2922 = vmatprep.subr.bf16.mxu0 0
        %2923 = vmatpush1.bf16.msra.mxu0 0
        %2924 = vmatprep.subr.bf16.mxu0 0
        %2925 = vmatpush1.bf16.msra.mxu0 0
        %2926 = vmatprep.subr.bf16.mxu0 0
        %2927 = vmatpush1.bf16.msra.mxu0 0
        %2928 = vmatprep.subr.bf16.mxu0 0
        %2929 = vmatpush1.bf16.msra.mxu0 0
        %2930 = vmatprep.subr.bf16.mxu0 0
        %2931 = vmatpush1.bf16.msra.mxu0 0
        %2932 = vmatprep.subr.bf16.mxu0 0
        %2933 = vmatpush1.bf16.msra.mxu0 0
        %2934 = vmatprep.subr.bf16.mxu0 0
        %2935 = vmatpush1.bf16.msra.mxu0 0
        %2936 = vmatprep.subr.bf16.mxu0 0
        %2937 = vmatpush1.bf16.msra.mxu0 0
        %2938 = vmatprep.subr.bf16.mxu0 0
        %2939 = vmatpush1.bf16.msra.mxu0 0
        %2940 = vmatprep.subr.bf16.mxu0 0
        %2941 = vmatpush1.bf16.msra.mxu0 0
        %2942 = vmatprep.subr.bf16.mxu0 0
        %2943 = vmatpush1.bf16.msra.mxu0 0
        %2944 = vmatprep.mubr.bf16.mxu0 0
        %2945 = vmatmul.mubr.bf16.gmra.mrb[0].mxu0 %v2761
        %v2946 = vpop.f32.mrb[0].mxu0
        %v2947 = vadd.f32 %v2898, %v2946
        %v2948 = vpop.f32.mrb[0].mxu0
        %v2949 = vpop.f32.mrb[0].mxu0
        %v2950 = vadd.f32 %v2898, %v2949
        %v2951 = vpop.f32.mrb[0].mxu0
        %2952 = vmatprep.mubr.bf16.mxu0 0
        %2953 = vmatmul.mubr.bf16.gmra.mrb[0].mxu0 %v2764
        %v2954 = vpop.f32.mrb[0].mxu0
        %v2955 = vadd.f32 %v2898, %v2954
        %v2956 = vpop.f32.mrb[0].mxu0
        %v2957 = vpop.f32.mrb[0].mxu0
        %v2958 = vpop.f32.mrb[0].mxu0
        %2959 = vdwg.mxu0
        %v2960 = vpack.c.bf16 %v2804, %v2801
        %v2961 = vpack.c.bf16 %v2809, %v2809
        %v2962 = vpack.c.bf16 %v2877, %v2874
        %v2963 = vpack.c.bf16 %v2882, %v2882
        %v2965 = vsel %vm833, %v2960, 0
        %v2968 = vsel %vm833, %v2961, 0
        %v2971 = vsel %vm833, %v2962, 0
        %v2974 = vsel %vm833, %v2963, 0
        %2976 = vmatprep.subr.bf16.mxu0 0
        %2977 = vmatpush1.bf16.xpose.msra.mxu0 %v2971
        %2978 = vmatprep.subr.bf16.mxu0 0
        %2979 = vmatpush1.bf16.xpose.msra.mxu0 %v2974
        %2980 = vmatprep.subr.bf16.mxu0 0
        %2981 = vmatpush1.bf16.xpose.msra.mxu0 0
        %2982 = vmatprep.subr.bf16.mxu0 0
        %2983 = vmatpush1.bf16.xpose.msra.mxu0 0
        %2984 = vmatprep.subr.bf16.mxu0 0
        %2985 = vmatpush1.bf16.xpose.msra.mxu0 0
        %2986 = vmatprep.subr.bf16.mxu0 0
        %2987 = vmatpush1.bf16.xpose.msra.mxu0 0
        %2988 = vmatprep.subr.bf16.mxu0 0
        %2989 = vmatpush1.bf16.xpose.msra.mxu0 0
        %2990 = vmatprep.subr.bf16.mxu0 0
        %2991 = vmatpush1.bf16.xpose.msra.mxu0 0
        %2992 = vmatprep.subr.bf16.mxu0 0
        %2993 = vmatpush1.bf16.xpose.msra.mxu0 0
        %2994 = vmatprep.subr.bf16.mxu0 0
        %2995 = vmatpush1.bf16.xpose.msra.mxu0 0
        %2996 = vmatprep.subr.bf16.mxu0 0
        %2997 = vmatpush1.bf16.xpose.msra.mxu0 0
        %2998 = vmatprep.subr.bf16.mxu0 0
        %2999 = vmatpush1.bf16.xpose.msra.mxu0 0
        %3000 = vmatprep.subr.bf16.mxu0 0
        %3001 = vmatpush1.bf16.xpose.msra.mxu0 0
        %3002 = vmatprep.subr.bf16.mxu0 0
        %3003 = vmatpush1.bf16.xpose.msra.mxu0 0
        %3004 = vmatprep.subr.bf16.mxu0 0
        %3005 = vmatpush1.bf16.xpose.msra.mxu0 0
        %3006 = vmatprep.subr.bf16.mxu0 0
        %3007 = vmatpush1.bf16.xpose.msra.mxu0 0
        %3008 = vmatprep.mubr.bf16.mxu0 0
        %3009 = vmatmul.mubr.bf16.gmra.mrb[0].mxu0 %v2965
        %v3010 = vpop.f32.mrb[0].mxu0
        %v3011 = vadd.f32 0.0, %v3010
        %v3012 = vpop.f32.mrb[0].mxu0
        %v3013 = vpop.f32.mrb[0].mxu0
        %v3014 = vadd.f32 0.0, %v3013
        %v3015 = vpop.f32.mrb[0].mxu0
        %3016 = vmatprep.mubr.bf16.mxu0 0
        %3017 = vmatmul.mubr.bf16.gmra.mrb[0].mxu0 %v2968
        %v3018 = vpop.f32.mrb[0].mxu0
        %v3019 = vadd.f32 0.0, %v3018
        %v3020 = vpop.f32.mrb[0].mxu0
        %v3021 = vpop.f32.mrb[0].mxu0
        %v3022 = vpop.f32.mrb[0].mxu0
        %3023 = vdwg.mxu0
        %v3024 = vsel %vm894, %v3011, -inf
        %3025 = vmax.xlane.f32.xlu0 %v3024
        %v3026 = vpop.xlane.xlu0 %3025
        %v3027 = vsel %vm894, %v3014, -inf
        %3028 = vmax.xlane.f32.xlu0 %v3027
        %v3029 = vpop.xlane.xlu0 %3028
        %v3030 = vsel %vm901, %v3019, -inf
        %3031 = vmax.xlane.f32.xlu0 %v3030
        %v3032 = vpop.xlane.xlu0 %3031
        %v3033 = vsub.f32 %v3011, %v3026
        %v3034 = vsub.f32 %v3014, %v3029
        %v3035 = vsub.f32 %v3019, %v3032
        %v3036 = vmul.f32 %v3033, 1.442695
        %v3037 = vpow.pop %v3036
        %v3038 = vmul.f32 %v3034, 1.442695
        %v3039 = vpow.pop %v3038
        %v3040 = vmul.f32 %v3035, 1.442695
        %v3041 = vpow.pop %v3040
        %v3042 = vsel %vm894, %v3037, 0.0
        %3043 = vadd.xlane.f32.xlu0 %v3042
        %v3044 = vpop.xlane.xlu0 %3043
        %v3045 = vsel %vm894, %v3039, 0.0
        %3046 = vadd.xlane.f32.xlu0 %v3045
        %v3047 = vpop.xlane.xlu0 %3046
        %v3048 = vsel %vm901, %v3041, 0.0
        %3049 = vadd.xlane.f32.xlu0 %v3048
        %v3050 = vpop.xlane.xlu0 %3049
        %v3051 = vrcp.pop %v3044
        %v3052 = vrcp.pop %v3047
        %v3053 = vrcp.pop %v3050
        %v3054 = vpack.c.bf16 %v3039, %v3037
        %v3055 = vpack.c.bf16 %v3041, %v3041
        %v3056 = vpack.c.bf16 %v2950, %v2947
        %v3057 = vpack.c.bf16 %v2955, %v2955
        %v3059 = vsel %vm894, %v3054, 0
        %v3062 = vsel %vm894, %v3055, 0
        %v3065 = vand.u32 %v3057, %v938
        %3067 = vmatprep.subr.bf16.mxu0 0
        %3068 = vmatpush1.bf16.msra.mxu0 %v3056
        %3069 = vmatprep.subr.bf16.mxu0 0
        %3070 = vmatpush1.bf16.msra.mxu0 %v3065
        %3071 = vmatprep.subr.bf16.mxu0 0
        %3072 = vmatpush1.bf16.msra.mxu0 0
        %3073 = vmatprep.subr.bf16.mxu0 0
        %3074 = vmatpush1.bf16.msra.mxu0 0
        %3075 = vmatprep.subr.bf16.mxu0 0
        %3076 = vmatpush1.bf16.msra.mxu0 0
        %3077 = vmatprep.subr.bf16.mxu0 0
        %3078 = vmatpush1.bf16.msra.mxu0 0
        %3079 = vmatprep.subr.bf16.mxu0 0
        %3080 = vmatpush1.bf16.msra.mxu0 0
        %3081 = vmatprep.subr.bf16.mxu0 0
        %3082 = vmatpush1.bf16.msra.mxu0 0
        %3083 = vmatprep.subr.bf16.mxu0 0
        %3084 = vmatpush1.bf16.msra.mxu0 0
        %3085 = vmatprep.subr.bf16.mxu0 0
        %3086 = vmatpush1.bf16.msra.mxu0 0
        %3087 = vmatprep.subr.bf16.mxu0 0
        %3088 = vmatpush1.bf16.msra.mxu0 0
        %3089 = vmatprep.subr.bf16.mxu0 0
        %3090 = vmatpush1.bf16.msra.mxu0 0
        %3091 = vmatprep.subr.bf16.mxu0 0
        %3092 = vmatpush1.bf16.msra.mxu0 0
        %3093 = vmatprep.subr.bf16.mxu0 0
        %3094 = vmatpush1.bf16.msra.mxu0 0
        %3095 = vmatprep.subr.bf16.mxu0 0
        %3096 = vmatpush1.bf16.msra.mxu0 0
        %3097 = vmatprep.subr.bf16.mxu0 0
        %3098 = vmatpush1.bf16.msra.mxu0 0
        %3099 = vmatprep.mubr.bf16.mxu0 0
        %3100 = vmatmul.mubr.bf16.gmra.mrb[0].mxu0 %v3059
        %v3101 = vpop.f32.mrb[0].mxu0
        %v3102 = vadd.f32 0.0, %v3101
        %v3103 = vpop.f32.mrb[0].mxu0
        %v3104 = vpop.f32.mrb[0].mxu0
        %v3105 = vadd.f32 0.0, %v3104
        %v3106 = vpop.f32.mrb[0].mxu0
        %3107 = vmatprep.mubr.bf16.mxu0 0
        %3108 = vmatmul.mubr.bf16.gmra.mrb[0].mxu0 %v3062
        %v3109 = vpop.f32.mrb[0].mxu0
        %v3110 = vadd.f32 0.0, %v3109
        %v3111 = vpop.f32.mrb[0].mxu0
        %v3112 = vpop.f32.mrb[0].mxu0
        %v3113 = vpop.f32.mrb[0].mxu0
        %3114 = vdwg.mxu0
        %v3115 = vmul.f32 %v3102, %v3051
        %v3116 = vmul.f32 %v3105, %v3052
        %v3117 = vmul.f32 %v3110, %v3053
        %v3118 = vpack.c.bf16 %v3116, %v3115
        %v3119 = vpack.c.bf16 %v3117, %v3117
        %s3120 = scalar_lea.vmem %s9, 16
        %v3121 = vld [vmem:[%s3120] sm:$0xf]
        %s3122 = scalar_lea.vmem %s3, 80
        %v3123 = vld [vmem:[%s3122] sm:$0xf]
        %v3124 = vld [vmem:[%s3122 + $0x4] sm:$0xf]
        %v3125 = vld [vmem:[%s3122 + $0x8] sm:$0xf]
        %v3126 = vld [vmem:[%s3122 + $0xc] sm:$0xf]
        %s3127 = scalar_lea.vmem %s6, 5
        %v3128 = vld [vmem:[%s3127] sm:$0x1]
        %v3130 = vlaneseq
        %v3131 = vshrl.u32 %v3130, 7
        %v3132 = vsub.s32 0, %v3131
        %v3133 = vrot.slane %v3128, %v3132
        %v3139 = vunpack.c.l.b16 %v3123
        %v3140 = vunpack.c.l.b16 %v3124
        %v3141 = vunpack.c.l.b16 %v3125
        %v3142 = vunpack.c.l.b16 %v3126
        %v3143 = vpack.c.b16 %v3140, %v3139
        %v3144 = vpack.c.b16 %v3142, %v3141
        %3147 = vmatprep.subr.bf16.mxu0 0
        %3148 = vmatpush1.bf16.msra.mxu0 %v3143
        %3149 = vmatprep.subr.bf16.mxu0 0
        %3150 = vmatpush1.bf16.msra.mxu0 %v3144
        %3151 = vmatprep.subr.bf16.mxu0 0
        %3152 = vmatpush1.bf16.msra.mxu0 0
        %3153 = vmatprep.subr.bf16.mxu0 0
        %3154 = vmatpush1.bf16.msra.mxu0 0
        %3155 = vmatprep.subr.bf16.mxu0 0
        %3156 = vmatpush1.bf16.msra.mxu0 0
        %3157 = vmatprep.subr.bf16.mxu0 0
        %3158 = vmatpush1.bf16.msra.mxu0 0
        %3159 = vmatprep.subr.bf16.mxu0 0
        %3160 = vmatpush1.bf16.msra.mxu0 0
        %3161 = vmatprep.subr.bf16.mxu0 0
        %3162 = vmatpush1.bf16.msra.mxu0 0
        %3163 = vmatprep.subr.bf16.mxu0 0
        %3164 = vmatpush1.bf16.msra.mxu0 0
        %3165 = vmatprep.subr.bf16.mxu0 0
        %3166 = vmatpush1.bf16.msra.mxu0 0
        %3167 = vmatprep.subr.bf16.mxu0 0
        %3168 = vmatpush1.bf16.msra.mxu0 0
        %3169 = vmatprep.subr.bf16.mxu0 0
        %3170 = vmatpush1.bf16.msra.mxu0 0
        %3171 = vmatprep.subr.bf16.mxu0 0
        %3172 = vmatpush1.bf16.msra.mxu0 0
        %3173 = vmatprep.subr.bf16.mxu0 0
        %3174 = vmatpush1.bf16.msra.mxu0 0
        %3175 = vmatprep.subr.bf16.mxu0 0
        %3176 = vmatpush1.bf16.msra.mxu0 0
        %3177 = vmatprep.subr.bf16.mxu0 0
        %3178 = vmatpush1.bf16.msra.mxu0 0
        %3179 = vmatprep.mubr.bf16.mxu0 0
        %3180 = vmatmul.mubr.bf16.gmra.mrb[0].mxu0 %v2761
        %v3181 = vpop.f32.mrb[0].mxu0
        %v3182 = vadd.f32 %v3133, %v3181
        %v3183 = vpop.f32.mrb[0].mxu0
        %v3184 = vpop.f32.mrb[0].mxu0
        %v3185 = vadd.f32 %v3133, %v3184
        %v3186 = vpop.f32.mrb[0].mxu0
        %3187 = vmatprep.mubr.bf16.mxu0 0
        %3188 = vmatmul.mubr.bf16.gmra.mrb[0].mxu0 %v2764
        %v3189 = vpop.f32.mrb[0].mxu0
        %v3190 = vadd.f32 %v3133, %v3189
        %v3191 = vpop.f32.mrb[0].mxu0
        %v3192 = vpop.f32.mrb[0].mxu0
        %v3193 = vpop.f32.mrb[0].mxu0
        %3194 = vdwg.mxu0
        %s3195 = scalar_lea.vmem %s4, 80
        %v3196 = vld [vmem:[%s3195] sm:$0xf]
        %v3197 = vld [vmem:[%s3195 + $0x4] sm:$0xf]
        %v3198 = vld [vmem:[%s3195 + $0x8] sm:$0xf]
        %v3199 = vld [vmem:[%s3195 + $0xc] sm:$0xf]
        %s3200 = scalar_lea.vmem %s7, 5
        %v3201 = vld [vmem:[%s3200] sm:$0x1]
        %v3203 = vlaneseq
        %v3204 = vshrl.u32 %v3203, 7
        %v3205 = vsub.s32 0, %v3204
        %v3206 = vrot.slane %v3201, %v3205
        %v3212 = vunpack.c.l.b16 %v3196
        %v3213 = vunpack.c.l.b16 %v3197
        %v3214 = vunpack.c.l.b16 %v3198
        %v3215 = vunpack.c.l.b16 %v3199
        %v3216 = vpack.c.b16 %v3213, %v3212
        %v3217 = vpack.c.b16 %v3215, %v3214
        %3220 = vmatprep.subr.bf16.mxu0 0
        %3221 = vmatpush1.bf16.msra.mxu0 %v3216
        %3222 = vmatprep.subr.bf16.mxu0 0
        %3223 = vmatpush1.bf16.msra.mxu0 %v3217
        %3224 = vmatprep.subr.bf16.mxu0 0
        %3225 = vmatpush1.bf16.msra.mxu0 0
        %3226 = vmatprep.subr.bf16.mxu0 0
        %3227 = vmatpush1.bf16.msra.mxu0 0
        %3228 = vmatprep.subr.bf16.mxu0 0
        %3229 = vmatpush1.bf16.msra.mxu0 0
        %3230 = vmatprep.subr.bf16.mxu0 0
        %3231 = vmatpush1.bf16.msra.mxu0 0
        %3232 = vmatprep.subr.bf16.mxu0 0
        %3233 = vmatpush1.bf16.msra.mxu0 0
        %3234 = vmatprep.subr.bf16.mxu0 0
        %3235 = vmatpush1.bf16.msra.mxu0 0
        %3236 = vmatprep.subr.bf16.mxu0 0
        %3237 = vmatpush1.bf16.msra.mxu0 0
        %3238 = vmatprep.subr.bf16.mxu0 0
        %3239 = vmatpush1.bf16.msra.mxu0 0
        %3240 = vmatprep.subr.bf16.mxu0 0
        %3241 = vmatpush1.bf16.msra.mxu0 0
        %3242 = vmatprep.subr.bf16.mxu0 0
        %3243 = vmatpush1.bf16.msra.mxu0 0
        %3244 = vmatprep.subr.bf16.mxu0 0
        %3245 = vmatpush1.bf16.msra.mxu0 0
        %3246 = vmatprep.subr.bf16.mxu0 0
        %3247 = vmatpush1.bf16.msra.mxu0 0
        %3248 = vmatprep.subr.bf16.mxu0 0
        %3249 = vmatpush1.bf16.msra.mxu0 0
        %3250 = vmatprep.subr.bf16.mxu0 0
        %3251 = vmatpush1.bf16.msra.mxu0 0
        %3252 = vmatprep.mubr.bf16.mxu0 0
        %3253 = vmatmul.mubr.bf16.gmra.mrb[0].mxu0 %v2761
        %v3254 = vpop.f32.mrb[0].mxu0
        %v3255 = vadd.f32 %v3206, %v3254
        %v3256 = vpop.f32.mrb[0].mxu0
        %v3257 = vpop.f32.mrb[0].mxu0
        %v3258 = vadd.f32 %v3206, %v3257
        %v3259 = vpop.f32.mrb[0].mxu0
        %3260 = vmatprep.mubr.bf16.mxu0 0
        %3261 = vmatmul.mubr.bf16.gmra.mrb[0].mxu0 %v2764
        %v3262 = vpop.f32.mrb[0].mxu0
        %v3263 = vadd.f32 %v3206, %v3262
        %v3264 = vpop.f32.mrb[0].mxu0
        %v3265 = vpop.f32.mrb[0].mxu0
        %v3266 = vpop.f32.mrb[0].mxu0
        %3267 = vdwg.mxu0
        %s3268 = scalar_lea.vmem %s5, 80
        %v3269 = vld [vmem:[%s3268] sm:$0xf]
        %v3270 = vld [vmem:[%s3268 + $0x4] sm:$0xf]
        %v3271 = vld [vmem:[%s3268 + $0x8] sm:$0xf]
        %v3272 = vld [vmem:[%s3268 + $0xc] sm:$0xf]
        %s3273 = scalar_lea.vmem %s8, 5
        %v3274 = vld [vmem:[%s3273] sm:$0x1]
        %v3276 = vlaneseq
        %v3277 = vshrl.u32 %v3276, 7
        %v3278 = vsub.s32 0, %v3277
        %v3279 = vrot.slane %v3274, %v3278
        %v3285 = vunpack.c.l.b16 %v3269
        %v3286 = vunpack.c.l.b16 %v3270
        %v3287 = vunpack.c.l.b16 %v3271
        %v3288 = vunpack.c.l.b16 %v3272
        %v3289 = vpack.c.b16 %v3286, %v3285
        %v3290 = vpack.c.b16 %v3288, %v3287
        %3293 = vmatprep.subr.bf16.mxu0 0
        %3294 = vmatpush1.bf16.msra.mxu0 %v3289
        %3295 = vmatprep.subr.bf16.mxu0 0
        %3296 = vmatpush1.bf16.msra.mxu0 %v3290
        %3297 = vmatprep.subr.bf16.mxu0 0
        %3298 = vmatpush1.bf16.msra.mxu0 0
        %3299 = vmatprep.subr.bf16.mxu0 0
        %3300 = vmatpush1.bf16.msra.mxu0 0
        %3301 = vmatprep.subr.bf16.mxu0 0
        %3302 = vmatpush1.bf16.msra.mxu0 0
        %3303 = vmatprep.subr.bf16.mxu0 0
        %3304 = vmatpush1.bf16.msra.mxu0 0
        %3305 = vmatprep.subr.bf16.mxu0 0
        %3306 = vmatpush1.bf16.msra.mxu0 0
        %3307 = vmatprep.subr.bf16.mxu0 0
        %3308 = vmatpush1.bf16.msra.mxu0 0
        %3309 = vmatprep.subr.bf16.mxu0 0
        %3310 = vmatpush1.bf16.msra.mxu0 0
        %3311 = vmatprep.subr.bf16.mxu0 0
        %3312 = vmatpush1.bf16.msra.mxu0 0
        %3313 = vmatprep.subr.bf16.mxu0 0
        %3314 = vmatpush1.bf16.msra.mxu0 0
        %3315 = vmatprep.subr.bf16.mxu0 0
        %3316 = vmatpush1.bf16.msra.mxu0 0
        %3317 = vmatprep.subr.bf16.mxu0 0
        %3318 = vmatpush1.bf16.msra.mxu0 0
        %3319 = vmatprep.subr.bf16.mxu0 0
        %3320 = vmatpush1.bf16.msra.mxu0 0
        %3321 = vmatprep.subr.bf16.mxu0 0
        %3322 = vmatpush1.bf16.msra.mxu0 0
        %3323 = vmatprep.subr.bf16.mxu0 0
        %3324 = vmatpush1.bf16.msra.mxu0 0
        %3325 = vmatprep.mubr.bf16.mxu0 0
        %3326 = vmatmul.mubr.bf16.gmra.mrb[0].mxu0 %v2761
        %v3327 = vpop.f32.mrb[0].mxu0
        %v3328 = vadd.f32 %v3279, %v3327
        %v3329 = vpop.f32.mrb[0].mxu0
        %v3330 = vpop.f32.mrb[0].mxu0
        %v3331 = vadd.f32 %v3279, %v3330
        %v3332 = vpop.f32.mrb[0].mxu0
        %3333 = vmatprep.mubr.bf16.mxu0 0
        %3334 = vmatmul.mubr.bf16.gmra.mrb[0].mxu0 %v2764
        %v3335 = vpop.f32.mrb[0].mxu0
        %v3336 = vadd.f32 %v3279, %v3335
        %v3337 = vpop.f32.mrb[0].mxu0
        %v3338 = vpop.f32.mrb[0].mxu0
        %v3339 = vpop.f32.mrb[0].mxu0
        %3340 = vdwg.mxu0
        %v3341 = vpack.c.bf16 %v3185, %v3182
        %v3342 = vpack.c.bf16 %v3190, %v3190
        %v3343 = vpack.c.bf16 %v3258, %v3255
        %v3344 = vpack.c.bf16 %v3263, %v3263
        %v3346 = vsel %vm833, %v3341, 0
        %v3349 = vsel %vm833, %v3342, 0
        %v3352 = vsel %vm833, %v3343, 0
        %v3355 = vsel %vm833, %v3344, 0
        %3357 = vmatprep.subr.bf16.mxu0 0
        %3358 = vmatpush1.bf16.xpose.msra.mxu0 %v3352
        %3359 = vmatprep.subr.bf16.mxu0 0
        %3360 = vmatpush1.bf16.xpose.msra.mxu0 %v3355
        %3361 = vmatprep.subr.bf16.mxu0 0
        %3362 = vmatpush1.bf16.xpose.msra.mxu0 0
        %3363 = vmatprep.subr.bf16.mxu0 0
        %3364 = vmatpush1.bf16.xpose.msra.mxu0 0
        %3365 = vmatprep.subr.bf16.mxu0 0
        %3366 = vmatpush1.bf16.xpose.msra.mxu0 0
        %3367 = vmatprep.subr.bf16.mxu0 0
        %3368 = vmatpush1.bf16.xpose.msra.mxu0 0
        %3369 = vmatprep.subr.bf16.mxu0 0
        %3370 = vmatpush1.bf16.xpose.msra.mxu0 0
        %3371 = vmatprep.subr.bf16.mxu0 0
        %3372 = vmatpush1.bf16.xpose.msra.mxu0 0
        %3373 = vmatprep.subr.bf16.mxu0 0
        %3374 = vmatpush1.bf16.xpose.msra.mxu0 0
        %3375 = vmatprep.subr.bf16.mxu0 0
        %3376 = vmatpush1.bf16.xpose.msra.mxu0 0
        %3377 = vmatprep.subr.bf16.mxu0 0
        %3378 = vmatpush1.bf16.xpose.msra.mxu0 0
        %3379 = vmatprep.subr.bf16.mxu0 0
        %3380 = vmatpush1.bf16.xpose.msra.mxu0 0
        %3381 = vmatprep.subr.bf16.mxu0 0
        %3382 = vmatpush1.bf16.xpose.msra.mxu0 0
        %3383 = vmatprep.subr.bf16.mxu0 0
        %3384 = vmatpush1.bf16.xpose.msra.mxu0 0
        %3385 = vmatprep.subr.bf16.mxu0 0
        %3386 = vmatpush1.bf16.xpose.msra.mxu0 0
        %3387 = vmatprep.subr.bf16.mxu0 0
        %3388 = vmatpush1.bf16.xpose.msra.mxu0 0
        %3389 = vmatprep.mubr.bf16.mxu0 0
        %3390 = vmatmul.mubr.bf16.gmra.mrb[0].mxu0 %v3346
        %v3391 = vpop.f32.mrb[0].mxu0
        %v3392 = vadd.f32 0.0, %v3391
        %v3393 = vpop.f32.mrb[0].mxu0
        %v3394 = vpop.f32.mrb[0].mxu0
        %v3395 = vadd.f32 0.0, %v3394
        %v3396 = vpop.f32.mrb[0].mxu0
        %3397 = vmatprep.mubr.bf16.mxu0 0
        %3398 = vmatmul.mubr.bf16.gmra.mrb[0].mxu0 %v3349
        %v3399 = vpop.f32.mrb[0].mxu0
        %v3400 = vadd.f32 0.0, %v3399
        %v3401 = vpop.f32.mrb[0].mxu0
        %v3402 = vpop.f32.mrb[0].mxu0
        %v3403 = vpop.f32.mrb[0].mxu0
        %3404 = vdwg.mxu0
        %v3405 = vsel %vm894, %v3392, -inf
        %3406 = vmax.xlane.f32.xlu0 %v3405
        %v3407 = vpop.xlane.xlu0 %3406
        %v3408 = vsel %vm894, %v3395, -inf
        %3409 = vmax.xlane.f32.xlu0 %v3408
        %v3410 = vpop.xlane.xlu0 %3409
        %v3411 = vsel %vm901, %v3400, -inf
        %3412 = vmax.xlane.f32.xlu0 %v3411
        %v3413 = vpop.xlane.xlu0 %3412
        %v3414 = vsub.f32 %v3392, %v3407
        %v3415 = vsub.f32 %v3395, %v3410
        %v3416 = vsub.f32 %v3400, %v3413
        %v3417 = vmul.f32 %v3414, 1.442695
        %v3418 = vpow.pop %v3417
        %v3419 = vmul.f32 %v3415, 1.442695
        %v3420 = vpow.pop %v3419
        %v3421 = vmul.f32 %v3416, 1.442695
        %v3422 = vpow.pop %v3421
        %v3423 = vsel %vm894, %v3418, 0.0
        %3424 = vadd.xlane.f32.xlu0 %v3423
        %v3425 = vpop.xlane.xlu0 %3424
        %v3426 = vsel %vm894, %v3420, 0.0
        %3427 = vadd.xlane.f32.xlu0 %v3426
        %v3428 = vpop.xlane.xlu0 %3427
        %v3429 = vsel %vm901, %v3422, 0.0
        %3430 = vadd.xlane.f32.xlu0 %v3429
        %v3431 = vpop.xlane.xlu0 %3430
        %v3432 = vrcp.pop %v3425
        %v3433 = vrcp.pop %v3428
        %v3434 = vrcp.pop %v3431
        %v3435 = vpack.c.bf16 %v3420, %v3418
        %v3436 = vpack.c.bf16 %v3422, %v3422
        %v3437 = vpack.c.bf16 %v3331, %v3328
        %v3438 = vpack.c.bf16 %v3336, %v3336
        %v3440 = vsel %vm894, %v3435, 0
        %v3443 = vsel %vm894, %v3436, 0
        %v3446 = vand.u32 %v3438, %v938
        %3448 = vmatprep.subr.bf16.mxu0 0
        %3449 = vmatpush1.bf16.msra.mxu0 %v3437
        %3450 = vmatprep.subr.bf16.mxu0 0
        %3451 = vmatpush1.bf16.msra.mxu0 %v3446
        %3452 = vmatprep.subr.bf16.mxu0 0
        %3453 = vmatpush1.bf16.msra.mxu0 0
        %3454 = vmatprep.subr.bf16.mxu0 0
        %3455 = vmatpush1.bf16.msra.mxu0 0
        %3456 = vmatprep.subr.bf16.mxu0 0
        %3457 = vmatpush1.bf16.msra.mxu0 0
        %3458 = vmatprep.subr.bf16.mxu0 0
        %3459 = vmatpush1.bf16.msra.mxu0 0
        %3460 = vmatprep.subr.bf16.mxu0 0
        %3461 = vmatpush1.bf16.msra.mxu0 0
        %3462 = vmatprep.subr.bf16.mxu0 0
        %3463 = vmatpush1.bf16.msra.mxu0 0
        %3464 = vmatprep.subr.bf16.mxu0 0
        %3465 = vmatpush1.bf16.msra.mxu0 0
        %3466 = vmatprep.subr.bf16.mxu0 0
        %3467 = vmatpush1.bf16.msra.mxu0 0
        %3468 = vmatprep.subr.bf16.mxu0 0
        %3469 = vmatpush1.bf16.msra.mxu0 0
        %3470 = vmatprep.subr.bf16.mxu0 0
        %3471 = vmatpush1.bf16.msra.mxu0 0
        %3472 = vmatprep.subr.bf16.mxu0 0
        %3473 = vmatpush1.bf16.msra.mxu0 0
        %3474 = vmatprep.subr.bf16.mxu0 0
        %3475 = vmatpush1.bf16.msra.mxu0 0
        %3476 = vmatprep.subr.bf16.mxu0 0
        %3477 = vmatpush1.bf16.msra.mxu0 0
        %3478 = vmatprep.subr.bf16.mxu0 0
        %3479 = vmatpush1.bf16.msra.mxu0 0
        %3480 = vmatprep.mubr.bf16.mxu0 0
        %3481 = vmatmul.mubr.bf16.gmra.mrb[0].mxu0 %v3440
        %v3482 = vpop.f32.mrb[0].mxu0
        %v3483 = vadd.f32 0.0, %v3482
        %v3484 = vpop.f32.mrb[0].mxu0
        %v3485 = vpop.f32.mrb[0].mxu0
        %v3486 = vadd.f32 0.0, %v3485
        %v3487 = vpop.f32.mrb[0].mxu0
        %3488 = vmatprep.mubr.bf16.mxu0 0
        %3489 = vmatmul.mubr.bf16.gmra.mrb[0].mxu0 %v3443
        %v3490 = vpop.f32.mrb[0].mxu0
        %v3491 = vadd.f32 0.0, %v3490
        %v3492 = vpop.f32.mrb[0].mxu0
        %v3493 = vpop.f32.mrb[0].mxu0
        %v3494 = vpop.f32.mrb[0].mxu0
        %3495 = vdwg.mxu0
        %v3496 = vmul.f32 %v3483, %v3432
        %v3497 = vmul.f32 %v3486, %v3433
        %v3498 = vmul.f32 %v3491, %v3434
        %v3499 = vpack.c.bf16 %v3497, %v3496
        %v3500 = vpack.c.bf16 %v3498, %v3498
        %s3501 = scalar_lea.vmem %s9, 20
        %v3502 = vld [vmem:[%s3501] sm:$0xf]
        %v3504 = vsel %vm833, %v3499, 0
        %v3507 = vsel %vm833, %v3500, 0
        %v3510 = vsel %vm1383, %v3502, 0
        %3512 = vmatprep.subr.bf16.mxu0 0
        %3513 = vmatpush1.bf16.msra.mxu0 %v3510
        %3514 = vmatprep.subr.bf16.mxu0 0
        %3515 = vmatpush1.bf16.msra.mxu0 0
        %3516 = vmatprep.subr.bf16.mxu0 0
        %3517 = vmatpush1.bf16.msra.mxu0 0
        %3518 = vmatprep.subr.bf16.mxu0 0
        %3519 = vmatpush1.bf16.msra.mxu0 0
        %3520 = vmatprep.subr.bf16.mxu0 0
        %3521 = vmatpush1.bf16.msra.mxu0 0
        %3522 = vmatprep.subr.bf16.mxu0 0
        %3523 = vmatpush1.bf16.msra.mxu0 0
        %3524 = vmatprep.subr.bf16.mxu0 0
        %3525 = vmatpush1.bf16.msra.mxu0 0
        %3526 = vmatprep.subr.bf16.mxu0 0
        %3527 = vmatpush1.bf16.msra.mxu0 0
        %3528 = vmatprep.subr.bf16.mxu0 0
        %3529 = vmatpush1.bf16.msra.mxu0 0
        %3530 = vmatprep.subr.bf16.mxu0 0
        %3531 = vmatpush1.bf16.msra.mxu0 0
        %3532 = vmatprep.subr.bf16.mxu0 0
        %3533 = vmatpush1.bf16.msra.mxu0 0
        %3534 = vmatprep.subr.bf16.mxu0 0
        %3535 = vmatpush1.bf16.msra.mxu0 0
        %3536 = vmatprep.subr.bf16.mxu0 0
        %3537 = vmatpush1.bf16.msra.mxu0 0
        %3538 = vmatprep.subr.bf16.mxu0 0
        %3539 = vmatpush1.bf16.msra.mxu0 0
        %3540 = vmatprep.subr.bf16.mxu0 0
        %3541 = vmatpush1.bf16.msra.mxu0 0
        %3542 = vmatprep.subr.bf16.mxu0 0
        %3543 = vmatpush1.bf16.msra.mxu0 0
        %3544 = vmatprep.mubr.bf16.mxu0 0
        %3545 = vmatmul.mubr.bf16.gmra.mrb[0].mxu0 %v3504
        %v3546 = vpop.f32.mrb[0].mxu0
        %v3547 = vadd.f32 0.0, %v3546
        %v3548 = vpop.f32.mrb[0].mxu0
        %v3549 = vpop.f32.mrb[0].mxu0
        %v3550 = vadd.f32 0.0, %v3549
        %v3551 = vpop.f32.mrb[0].mxu0
        %3552 = vmatprep.mubr.bf16.mxu0 0
        %3553 = vmatmul.mubr.bf16.gmra.mrb[0].mxu0 %v3507
        %v3554 = vpop.f32.mrb[0].mxu0
        %v3555 = vadd.f32 0.0, %v3554
        %v3556 = vpop.f32.mrb[0].mxu0
        %v3557 = vpop.f32.mrb[0].mxu0
        %v3558 = vpop.f32.mrb[0].mxu0
        %3559 = vdwg.mxu0
        %v3561 = vsel %vm833, %v3118, 0
        %v3564 = vsel %vm833, %v3119, 0
        %v3567 = vsel %vm1383, %v3121, 0
        %3569 = vmatprep.subr.bf16.mxu0 0
        %3570 = vmatpush1.bf16.msra.mxu0 %v3567
        %3571 = vmatprep.subr.bf16.mxu0 0
        %3572 = vmatpush1.bf16.msra.mxu0 0
        %3573 = vmatprep.subr.bf16.mxu0 0
        %3574 = vmatpush1.bf16.msra.mxu0 0
        %3575 = vmatprep.subr.bf16.mxu0 0
        %3576 = vmatpush1.bf16.msra.mxu0 0
        %3577 = vmatprep.subr.bf16.mxu0 0
        %3578 = vmatpush1.bf16.msra.mxu0 0
        %3579 = vmatprep.subr.bf16.mxu0 0
        %3580 = vmatpush1.bf16.msra.mxu0 0
        %3581 = vmatprep.subr.bf16.mxu0 0
        %3582 = vmatpush1.bf16.msra.mxu0 0
        %3583 = vmatprep.subr.bf16.mxu0 0
        %3584 = vmatpush1.bf16.msra.mxu0 0
        %3585 = vmatprep.subr.bf16.mxu0 0
        %3586 = vmatpush1.bf16.msra.mxu0 0
        %3587 = vmatprep.subr.bf16.mxu0 0
        %3588 = vmatpush1.bf16.msra.mxu0 0
        %3589 = vmatprep.subr.bf16.mxu0 0
        %3590 = vmatpush1.bf16.msra.mxu0 0
        %3591 = vmatprep.subr.bf16.mxu0 0
        %3592 = vmatpush1.bf16.msra.mxu0 0
        %3593 = vmatprep.subr.bf16.mxu0 0
        %3594 = vmatpush1.bf16.msra.mxu0 0
        %3595 = vmatprep.subr.bf16.mxu0 0
        %3596 = vmatpush1.bf16.msra.mxu0 0
        %3597 = vmatprep.subr.bf16.mxu0 0
        %3598 = vmatpush1.bf16.msra.mxu0 0
        %3599 = vmatprep.subr.bf16.mxu0 0
        %3600 = vmatpush1.bf16.msra.mxu0 0
        %3601 = vmatprep.mubr.bf16.mxu0 0
        %3602 = vmatmul.mubr.bf16.gmra.mrb[0].mxu0 %v3561
        %v3603 = vpop.f32.mrb[0].mxu0
        %v3604 = vadd.f32 %v3547, %v3603
        %v3605 = vpop.f32.mrb[0].mxu0
        %v3606 = vpop.f32.mrb[0].mxu0
        %v3607 = vadd.f32 %v3550, %v3606
        %v3608 = vpop.f32.mrb[0].mxu0
        %3609 = vmatprep.mubr.bf16.mxu0 0
        %3610 = vmatmul.mubr.bf16.gmra.mrb[0].mxu0 %v3564
        %v3611 = vpop.f32.mrb[0].mxu0
        %v3612 = vadd.f32 %v3555, %v3611
        %v3613 = vpop.f32.mrb[0].mxu0
        %v3614 = vpop.f32.mrb[0].mxu0
        %v3615 = vpop.f32.mrb[0].mxu0
        %3616 = vdwg.mxu0
        %s3617 = scalar_lea.vmem %s3, 96
        %v3618 = vld [vmem:[%s3617] sm:$0xf]
        %v3619 = vld [vmem:[%s3617 + $0x4] sm:$0xf]
        %v3620 = vld [vmem:[%s3617 + $0x8] sm:$0xf]
        %v3621 = vld [vmem:[%s3617 + $0xc] sm:$0xf]
        %s3622 = scalar_lea.vmem %s6, 6
        %v3623 = vld [vmem:[%s3622] sm:$0x1]
        %v3625 = vlaneseq
        %v3626 = vshrl.u32 %v3625, 7
        %v3627 = vsub.s32 0, %v3626
        %v3628 = vrot.slane %v3623, %v3627
        %v3634 = vunpack.c.l.b16 %v3618
        %v3635 = vunpack.c.l.b16 %v3619
        %v3636 = vunpack.c.l.b16 %v3620
        %v3637 = vunpack.c.l.b16 %v3621
        %v3638 = vpack.c.b16 %v3635, %v3634
        %v3639 = vpack.c.b16 %v3637, %v3636
        %3642 = vmatprep.subr.bf16.mxu0 0
        %3643 = vmatpush1.bf16.msra.mxu0 %v3638
        %3644 = vmatprep.subr.bf16.mxu0 0
        %3645 = vmatpush1.bf16.msra.mxu0 %v3639
        %3646 = vmatprep.subr.bf16.mxu0 0
        %3647 = vmatpush1.bf16.msra.mxu0 0
        %3648 = vmatprep.subr.bf16.mxu0 0
        %3649 = vmatpush1.bf16.msra.mxu0 0
        %3650 = vmatprep.subr.bf16.mxu0 0
        %3651 = vmatpush1.bf16.msra.mxu0 0
        %3652 = vmatprep.subr.bf16.mxu0 0
        %3653 = vmatpush1.bf16.msra.mxu0 0
        %3654 = vmatprep.subr.bf16.mxu0 0
        %3655 = vmatpush1.bf16.msra.mxu0 0
        %3656 = vmatprep.subr.bf16.mxu0 0
        %3657 = vmatpush1.bf16.msra.mxu0 0
        %3658 = vmatprep.subr.bf16.mxu0 0
        %3659 = vmatpush1.bf16.msra.mxu0 0
        %3660 = vmatprep.subr.bf16.mxu0 0
        %3661 = vmatpush1.bf16.msra.mxu0 0
        %3662 = vmatprep.subr.bf16.mxu0 0
        %3663 = vmatpush1.bf16.msra.mxu0 0
        %3664 = vmatprep.subr.bf16.mxu0 0
        %3665 = vmatpush1.bf16.msra.mxu0 0
        %3666 = vmatprep.subr.bf16.mxu0 0
        %3667 = vmatpush1.bf16.msra.mxu0 0
        %3668 = vmatprep.subr.bf16.mxu0 0
        %3669 = vmatpush1.bf16.msra.mxu0 0
        %3670 = vmatprep.subr.bf16.mxu0 0
        %3671 = vmatpush1.bf16.msra.mxu0 0
        %3672 = vmatprep.subr.bf16.mxu0 0
        %3673 = vmatpush1.bf16.msra.mxu0 0
        %3674 = vmatprep.mubr.bf16.mxu0 0
        %3675 = vmatmul.mubr.bf16.gmra.mrb[0].mxu0 %v2761
        %v3676 = vpop.f32.mrb[0].mxu0
        %v3677 = vadd.f32 %v3628, %v3676
        %v3678 = vpop.f32.mrb[0].mxu0
        %v3679 = vpop.f32.mrb[0].mxu0
        %v3680 = vadd.f32 %v3628, %v3679
        %v3681 = vpop.f32.mrb[0].mxu0
        %3682 = vmatprep.mubr.bf16.mxu0 0
        %3683 = vmatmul.mubr.bf16.gmra.mrb[0].mxu0 %v2764
        %v3684 = vpop.f32.mrb[0].mxu0
        %v3685 = vadd.f32 %v3628, %v3684
        %v3686 = vpop.f32.mrb[0].mxu0
        %v3687 = vpop.f32.mrb[0].mxu0
        %v3688 = vpop.f32.mrb[0].mxu0
        %3689 = vdwg.mxu0
        %s3690 = scalar_lea.vmem %s4, 96
        %v3691 = vld [vmem:[%s3690] sm:$0xf]
        %v3692 = vld [vmem:[%s3690 + $0x4] sm:$0xf]
        %v3693 = vld [vmem:[%s3690 + $0x8] sm:$0xf]
        %v3694 = vld [vmem:[%s3690 + $0xc] sm:$0xf]
        %s3695 = scalar_lea.vmem %s7, 6
        %v3696 = vld [vmem:[%s3695] sm:$0x1]
        %v3698 = vlaneseq
        %v3699 = vshrl.u32 %v3698, 7
        %v3700 = vsub.s32 0, %v3699
        %v3701 = vrot.slane %v3696, %v3700
        %v3707 = vunpack.c.l.b16 %v3691
        %v3708 = vunpack.c.l.b16 %v3692
        %v3709 = vunpack.c.l.b16 %v3693
        %v3710 = vunpack.c.l.b16 %v3694
        %v3711 = vpack.c.b16 %v3708, %v3707
        %v3712 = vpack.c.b16 %v3710, %v3709
        %3715 = vmatprep.subr.bf16.mxu0 0
        %3716 = vmatpush1.bf16.msra.mxu0 %v3711
        %3717 = vmatprep.subr.bf16.mxu0 0
        %3718 = vmatpush1.bf16.msra.mxu0 %v3712
        %3719 = vmatprep.subr.bf16.mxu0 0
        %3720 = vmatpush1.bf16.msra.mxu0 0
        %3721 = vmatprep.subr.bf16.mxu0 0
        %3722 = vmatpush1.bf16.msra.mxu0 0
        %3723 = vmatprep.subr.bf16.mxu0 0
        %3724 = vmatpush1.bf16.msra.mxu0 0
        %3725 = vmatprep.subr.bf16.mxu0 0
        %3726 = vmatpush1.bf16.msra.mxu0 0
        %3727 = vmatprep.subr.bf16.mxu0 0
        %3728 = vmatpush1.bf16.msra.mxu0 0
        %3729 = vmatprep.subr.bf16.mxu0 0
        %3730 = vmatpush1.bf16.msra.mxu0 0
        %3731 = vmatprep.subr.bf16.mxu0 0
        %3732 = vmatpush1.bf16.msra.mxu0 0
        %3733 = vmatprep.subr.bf16.mxu0 0
        %3734 = vmatpush1.bf16.msra.mxu0 0
        %3735 = vmatprep.subr.bf16.mxu0 0
        %3736 = vmatpush1.bf16.msra.mxu0 0
        %3737 = vmatprep.subr.bf16.mxu0 0
        %3738 = vmatpush1.bf16.msra.mxu0 0
        %3739 = vmatprep.subr.bf16.mxu0 0
        %3740 = vmatpush1.bf16.msra.mxu0 0
        %3741 = vmatprep.subr.bf16.mxu0 0
        %3742 = vmatpush1.bf16.msra.mxu0 0
        %3743 = vmatprep.subr.bf16.mxu0 0
        %3744 = vmatpush1.bf16.msra.mxu0 0
        %3745 = vmatprep.subr.bf16.mxu0 0
        %3746 = vmatpush1.bf16.msra.mxu0 0
        %3747 = vmatprep.mubr.bf16.mxu0 0
        %3748 = vmatmul.mubr.bf16.gmra.mrb[0].mxu0 %v2761
        %v3749 = vpop.f32.mrb[0].mxu0
        %v3750 = vadd.f32 %v3701, %v3749
        %v3751 = vpop.f32.mrb[0].mxu0
        %v3752 = vpop.f32.mrb[0].mxu0
        %v3753 = vadd.f32 %v3701, %v3752
        %v3754 = vpop.f32.mrb[0].mxu0
        %3755 = vmatprep.mubr.bf16.mxu0 0
        %3756 = vmatmul.mubr.bf16.gmra.mrb[0].mxu0 %v2764
        %v3757 = vpop.f32.mrb[0].mxu0
        %v3758 = vadd.f32 %v3701, %v3757
        %v3759 = vpop.f32.mrb[0].mxu0
        %v3760 = vpop.f32.mrb[0].mxu0
        %v3761 = vpop.f32.mrb[0].mxu0
        %3762 = vdwg.mxu0
        %s3763 = scalar_lea.vmem %s5, 96
        %v3764 = vld [vmem:[%s3763] sm:$0xf]
        %v3765 = vld [vmem:[%s3763 + $0x4] sm:$0xf]
        %v3766 = vld [vmem:[%s3763 + $0x8] sm:$0xf]
        %v3767 = vld [vmem:[%s3763 + $0xc] sm:$0xf]
        %s3768 = scalar_lea.vmem %s8, 6
        %v3769 = vld [vmem:[%s3768] sm:$0x1]
        %v3771 = vlaneseq
        %v3772 = vshrl.u32 %v3771, 7
        %v3773 = vsub.s32 0, %v3772
        %v3774 = vrot.slane %v3769, %v3773
        %v3780 = vunpack.c.l.b16 %v3764
        %v3781 = vunpack.c.l.b16 %v3765
        %v3782 = vunpack.c.l.b16 %v3766
        %v3783 = vunpack.c.l.b16 %v3767
        %v3784 = vpack.c.b16 %v3781, %v3780
        %v3785 = vpack.c.b16 %v3783, %v3782
        %3788 = vmatprep.subr.bf16.mxu0 0
        %3789 = vmatpush1.bf16.msra.mxu0 %v3784
        %3790 = vmatprep.subr.bf16.mxu0 0
        %3791 = vmatpush1.bf16.msra.mxu0 %v3785
        %3792 = vmatprep.subr.bf16.mxu0 0
        %3793 = vmatpush1.bf16.msra.mxu0 0
        %3794 = vmatprep.subr.bf16.mxu0 0
        %3795 = vmatpush1.bf16.msra.mxu0 0
        %3796 = vmatprep.subr.bf16.mxu0 0
        %3797 = vmatpush1.bf16.msra.mxu0 0
        %3798 = vmatprep.subr.bf16.mxu0 0
        %3799 = vmatpush1.bf16.msra.mxu0 0
        %3800 = vmatprep.subr.bf16.mxu0 0
        %3801 = vmatpush1.bf16.msra.mxu0 0
        %3802 = vmatprep.subr.bf16.mxu0 0
        %3803 = vmatpush1.bf16.msra.mxu0 0
        %3804 = vmatprep.subr.bf16.mxu0 0
        %3805 = vmatpush1.bf16.msra.mxu0 0
        %3806 = vmatprep.subr.bf16.mxu0 0
        %3807 = vmatpush1.bf16.msra.mxu0 0
        %3808 = vmatprep.subr.bf16.mxu0 0
        %3809 = vmatpush1.bf16.msra.mxu0 0
        %3810 = vmatprep.subr.bf16.mxu0 0
        %3811 = vmatpush1.bf16.msra.mxu0 0
        %3812 = vmatprep.subr.bf16.mxu0 0
        %3813 = vmatpush1.bf16.msra.mxu0 0
        %3814 = vmatprep.subr.bf16.mxu0 0
        %3815 = vmatpush1.bf16.msra.mxu0 0
        %3816 = vmatprep.subr.bf16.mxu0 0
        %3817 = vmatpush1.bf16.msra.mxu0 0
        %3818 = vmatprep.subr.bf16.mxu0 0
        %3819 = vmatpush1.bf16.msra.mxu0 0
        %3820 = vmatprep.mubr.bf16.mxu0 0
        %3821 = vmatmul.mubr.bf16.gmra.mrb[0].mxu0 %v2761
        %v3822 = vpop.f32.mrb[0].mxu0
        %v3823 = vadd.f32 %v3774, %v3822
        %v3824 = vpop.f32.mrb[0].mxu0
        %v3825 = vpop.f32.mrb[0].mxu0
        %v3826 = vadd.f32 %v3774, %v3825
        %v3827 = vpop.f32.mrb[0].mxu0
        %3828 = vmatprep.mubr.bf16.mxu0 0
        %3829 = vmatmul.mubr.bf16.gmra.mrb[0].mxu0 %v2764
        %v3830 = vpop.f32.mrb[0].mxu0
        %v3831 = vadd.f32 %v3774, %v3830
        %v3832 = vpop.f32.mrb[0].mxu0
        %v3833 = vpop.f32.mrb[0].mxu0
        %v3834 = vpop.f32.mrb[0].mxu0
        %3835 = vdwg.mxu0
        %v3836 = vpack.c.bf16 %v3680, %v3677
        %v3837 = vpack.c.bf16 %v3685, %v3685
        %v3838 = vpack.c.bf16 %v3753, %v3750
        %v3839 = vpack.c.bf16 %v3758, %v3758
        %v3841 = vsel %vm833, %v3836, 0
        %v3844 = vsel %vm833, %v3837, 0
        %v3847 = vsel %vm833, %v3838, 0
        %v3850 = vsel %vm833, %v3839, 0
        %3852 = vmatprep.subr.bf16.mxu0 0
        %3853 = vmatpush1.bf16.xpose.msra.mxu0 %v3847
        %3854 = vmatprep.subr.bf16.mxu0 0
        %3855 = vmatpush1.bf16.xpose.msra.mxu0 %v3850
        %3856 = vmatprep.subr.bf16.mxu0 0
        %3857 = vmatpush1.bf16.xpose.msra.mxu0 0
        %3858 = vmatprep.subr.bf16.mxu0 0
        %3859 = vmatpush1.bf16.xpose.msra.mxu0 0
        %3860 = vmatprep.subr.bf16.mxu0 0
        %3861 = vmatpush1.bf16.xpose.msra.mxu0 0
        %3862 = vmatprep.subr.bf16.mxu0 0
        %3863 = vmatpush1.bf16.xpose.msra.mxu0 0
        %3864 = vmatprep.subr.bf16.mxu0 0
        %3865 = vmatpush1.bf16.xpose.msra.mxu0 0
        %3866 = vmatprep.subr.bf16.mxu0 0
        %3867 = vmatpush1.bf16.xpose.msra.mxu0 0
        %3868 = vmatprep.subr.bf16.mxu0 0
        %3869 = vmatpush1.bf16.xpose.msra.mxu0 0
        %3870 = vmatprep.subr.bf16.mxu0 0
        %3871 = vmatpush1.bf16.xpose.msra.mxu0 0
        %3872 = vmatprep.subr.bf16.mxu0 0
        %3873 = vmatpush1.bf16.xpose.msra.mxu0 0
        %3874 = vmatprep.subr.bf16.mxu0 0
        %3875 = vmatpush1.bf16.xpose.msra.mxu0 0
        %3876 = vmatprep.subr.bf16.mxu0 0
        %3877 = vmatpush1.bf16.xpose.msra.mxu0 0
        %3878 = vmatprep.subr.bf16.mxu0 0
        %3879 = vmatpush1.bf16.xpose.msra.mxu0 0
        %3880 = vmatprep.subr.bf16.mxu0 0
        %3881 = vmatpush1.bf16.xpose.msra.mxu0 0
        %3882 = vmatprep.subr.bf16.mxu0 0
        %3883 = vmatpush1.bf16.xpose.msra.mxu0 0
        %3884 = vmatprep.mubr.bf16.mxu0 0
        %3885 = vmatmul.mubr.bf16.gmra.mrb[0].mxu0 %v3841
        %v3886 = vpop.f32.mrb[0].mxu0
        %v3887 = vadd.f32 0.0, %v3886
        %v3888 = vpop.f32.mrb[0].mxu0
        %v3889 = vpop.f32.mrb[0].mxu0
        %v3890 = vadd.f32 0.0, %v3889
        %v3891 = vpop.f32.mrb[0].mxu0
        %3892 = vmatprep.mubr.bf16.mxu0 0
        %3893 = vmatmul.mubr.bf16.gmra.mrb[0].mxu0 %v3844
        %v3894 = vpop.f32.mrb[0].mxu0
        %v3895 = vadd.f32 0.0, %v3894
        %v3896 = vpop.f32.mrb[0].mxu0
        %v3897 = vpop.f32.mrb[0].mxu0
        %v3898 = vpop.f32.mrb[0].mxu0
        %3899 = vdwg.mxu0
        %v3900 = vsel %vm894, %v3887, -inf
        %3901 = vmax.xlane.f32.xlu0 %v3900
        %v3902 = vpop.xlane.xlu0 %3901
        %v3903 = vsel %vm894, %v3890, -inf
        %3904 = vmax.xlane.f32.xlu0 %v3903
        %v3905 = vpop.xlane.xlu0 %3904
        %v3906 = vsel %vm901, %v3895, -inf
        %3907 = vmax.xlane.f32.xlu0 %v3906
        %v3908 = vpop.xlane.xlu0 %3907
        %v3909 = vsub.f32 %v3887, %v3902
        %v3910 = vsub.f32 %v3890, %v3905
        %v3911 = vsub.f32 %v3895, %v3908
        %v3912 = vmul.f32 %v3909, 1.442695
        %v3913 = vpow.pop %v3912
        %v3914 = vmul.f32 %v3910, 1.442695
        %v3915 = vpow.pop %v3914
        %v3916 = vmul.f32 %v3911, 1.442695
        %v3917 = vpow.pop %v3916
        %v3918 = vsel %vm894, %v3913, 0.0
        %3919 = vadd.xlane.f32.xlu0 %v3918
        %v3920 = vpop.xlane.xlu0 %3919
        %v3921 = vsel %vm894, %v3915, 0.0
        %3922 = vadd.xlane.f32.xlu0 %v3921
        %v3923 = vpop.xlane.xlu0 %3922
        %v3924 = vsel %vm901, %v3917, 0.0
        %3925 = vadd.xlane.f32.xlu0 %v3924
        %v3926 = vpop.xlane.xlu0 %3925
        %v3927 = vrcp.pop %v3920
        %v3928 = vrcp.pop %v3923
        %v3929 = vrcp.pop %v3926
        %v3930 = vpack.c.bf16 %v3915, %v3913
        %v3931 = vpack.c.bf16 %v3917, %v3917
        %v3932 = vpack.c.bf16 %v3826, %v3823
        %v3933 = vpack.c.bf16 %v3831, %v3831
        %v3935 = vsel %vm894, %v3930, 0
        %v3938 = vsel %vm894, %v3931, 0
        %v3941 = vand.u32 %v3933, %v938
        %3943 = vmatprep.subr.bf16.mxu0 0
        %3944 = vmatpush1.bf16.msra.mxu0 %v3932
        %3945 = vmatprep.subr.bf16.mxu0 0
        %3946 = vmatpush1.bf16.msra.mxu0 %v3941
        %3947 = vmatprep.subr.bf16.mxu0 0
        %3948 = vmatpush1.bf16.msra.mxu0 0
        %3949 = vmatprep.subr.bf16.mxu0 0
        %3950 = vmatpush1.bf16.msra.mxu0 0
        %3951 = vmatprep.subr.bf16.mxu0 0
        %3952 = vmatpush1.bf16.msra.mxu0 0
        %3953 = vmatprep.subr.bf16.mxu0 0
        %3954 = vmatpush1.bf16.msra.mxu0 0
        %3955 = vmatprep.subr.bf16.mxu0 0
        %3956 = vmatpush1.bf16.msra.mxu0 0
        %3957 = vmatprep.subr.bf16.mxu0 0
        %3958 = vmatpush1.bf16.msra.mxu0 0
        %3959 = vmatprep.subr.bf16.mxu0 0
        %3960 = vmatpush1.bf16.msra.mxu0 0
        %3961 = vmatprep.subr.bf16.mxu0 0
        %3962 = vmatpush1.bf16.msra.mxu0 0
        %3963 = vmatprep.subr.bf16.mxu0 0
        %3964 = vmatpush1.bf16.msra.mxu0 0
        %3965 = vmatprep.subr.bf16.mxu0 0
        %3966 = vmatpush1.bf16.msra.mxu0 0
        %3967 = vmatprep.subr.bf16.mxu0 0
        %3968 = vmatpush1.bf16.msra.mxu0 0
        %3969 = vmatprep.subr.bf16.mxu0 0
        %3970 = vmatpush1.bf16.msra.mxu0 0
        %3971 = vmatprep.subr.bf16.mxu0 0
        %3972 = vmatpush1.bf16.msra.mxu0 0
        %3973 = vmatprep.subr.bf16.mxu0 0
        %3974 = vmatpush1.bf16.msra.mxu0 0
        %3975 = vmatprep.mubr.bf16.mxu0 0
        %3976 = vmatmul.mubr.bf16.gmra.mrb[0].mxu0 %v3935
        %v3977 = vpop.f32.mrb[0].mxu0
        %v3978 = vadd.f32 0.0, %v3977
        %v3979 = vpop.f32.mrb[0].mxu0
        %v3980 = vpop.f32.mrb[0].mxu0
        %v3981 = vadd.f32 0.0, %v3980
        %v3982 = vpop.f32.mrb[0].mxu0
        %3983 = vmatprep.mubr.bf16.mxu0 0
        %3984 = vmatmul.mubr.bf16.gmra.mrb[0].mxu0 %v3938
        %v3985 = vpop.f32.mrb[0].mxu0
        %v3986 = vadd.f32 0.0, %v3985
        %v3987 = vpop.f32.mrb[0].mxu0
        %v3988 = vpop.f32.mrb[0].mxu0
        %v3989 = vpop.f32.mrb[0].mxu0
        %3990 = vdwg.mxu0
        %v3991 = vmul.f32 %v3978, %v3927
        %v3992 = vmul.f32 %v3981, %v3928
        %v3993 = vmul.f32 %v3986, %v3929
        %v3994 = vpack.c.bf16 %v3992, %v3991
        %v3995 = vpack.c.bf16 %v3993, %v3993
        %s3996 = scalar_lea.vmem %s9, 24
        %v3997 = vld [vmem:[%s3996] sm:$0xf]
        %v3999 = vsel %vm833, %v3994, 0
        %v4002 = vsel %vm833, %v3995, 0
        %v4005 = vsel %vm1383, %v3997, 0
        %4007 = vmatprep.subr.bf16.mxu0 0
        %4008 = vmatpush1.bf16.msra.mxu0 %v4005
        %4009 = vmatprep.subr.bf16.mxu0 0
        %4010 = vmatpush1.bf16.msra.mxu0 0
        %4011 = vmatprep.subr.bf16.mxu0 0
        %4012 = vmatpush1.bf16.msra.mxu0 0
        %4013 = vmatprep.subr.bf16.mxu0 0
        %4014 = vmatpush1.bf16.msra.mxu0 0
        %4015 = vmatprep.subr.bf16.mxu0 0
        %4016 = vmatpush1.bf16.msra.mxu0 0
        %4017 = vmatprep.subr.bf16.mxu0 0
        %4018 = vmatpush1.bf16.msra.mxu0 0
        %4019 = vmatprep.subr.bf16.mxu0 0
        %4020 = vmatpush1.bf16.msra.mxu0 0
        %4021 = vmatprep.subr.bf16.mxu0 0
        %4022 = vmatpush1.bf16.msra.mxu0 0
        %4023 = vmatprep.subr.bf16.mxu0 0
        %4024 = vmatpush1.bf16.msra.mxu0 0
        %4025 = vmatprep.subr.bf16.mxu0 0
        %4026 = vmatpush1.bf16.msra.mxu0 0
        %4027 = vmatprep.subr.bf16.mxu0 0
        %4028 = vmatpush1.bf16.msra.mxu0 0
        %4029 = vmatprep.subr.bf16.mxu0 0
        %4030 = vmatpush1.bf16.msra.mxu0 0
        %4031 = vmatprep.subr.bf16.mxu0 0
        %4032 = vmatpush1.bf16.msra.mxu0 0
        %4033 = vmatprep.subr.bf16.mxu0 0
        %4034 = vmatpush1.bf16.msra.mxu0 0
        %4035 = vmatprep.subr.bf16.mxu0 0
        %4036 = vmatpush1.bf16.msra.mxu0 0
        %4037 = vmatprep.subr.bf16.mxu0 0
        %4038 = vmatpush1.bf16.msra.mxu0 0
        %4039 = vmatprep.mubr.bf16.mxu0 0
        %4040 = vmatmul.mubr.bf16.gmra.mrb[0].mxu0 %v3999
        %v4041 = vpop.f32.mrb[0].mxu0
        %v4042 = vadd.f32 0.0, %v4041
        %v4043 = vpop.f32.mrb[0].mxu0
        %v4044 = vpop.f32.mrb[0].mxu0
        %v4045 = vadd.f32 0.0, %v4044
        %v4046 = vpop.f32.mrb[0].mxu0
        %4047 = vmatprep.mubr.bf16.mxu0 0
        %4048 = vmatmul.mubr.bf16.gmra.mrb[0].mxu0 %v4002
        %v4049 = vpop.f32.mrb[0].mxu0
        %v4050 = vadd.f32 0.0, %v4049
        %v4051 = vpop.f32.mrb[0].mxu0
        %v4052 = vpop.f32.mrb[0].mxu0
        %v4053 = vpop.f32.mrb[0].mxu0
        %4054 = vdwg.mxu0
        %v4055 = vadd.f32 %v3604, %v4042
        %v4056 = vadd.f32 %v3607, %v4045
        %v4057 = vadd.f32 %v3612, %v4050
        %s4058 = scalar_lea.vmem %s3, 112
        %v4059 = vld [vmem:[%s4058] sm:$0xf]
        %v4060 = vld [vmem:[%s4058 + $0x4] sm:$0xf]
        %v4061 = vld [vmem:[%s4058 + $0x8] sm:$0xf]
        %v4062 = vld [vmem:[%s4058 + $0xc] sm:$0xf]
        %s4063 = scalar_lea.vmem %s6, 7
        %v4064 = vld [vmem:[%s4063] sm:$0x1]
        %v4066 = vlaneseq
        %v4067 = vshrl.u32 %v4066, 7
        %v4068 = vsub.s32 0, %v4067
        %v4069 = vrot.slane %v4064, %v4068
        %v4075 = vunpack.c.l.b16 %v4059
        %v4076 = vunpack.c.l.b16 %v4060
        %v4077 = vunpack.c.l.b16 %v4061
        %v4078 = vunpack.c.l.b16 %v4062
        %v4079 = vpack.c.b16 %v4076, %v4075
        %v4080 = vpack.c.b16 %v4078, %v4077
        %4083 = vmatprep.subr.bf16.mxu0 0
        %4084 = vmatpush1.bf16.msra.mxu0 %v4079
        %4085 = vmatprep.subr.bf16.mxu0 0
        %4086 = vmatpush1.bf16.msra.mxu0 %v4080
        %4087 = vmatprep.subr.bf16.mxu0 0
        %4088 = vmatpush1.bf16.msra.mxu0 0
        %4089 = vmatprep.subr.bf16.mxu0 0
        %4090 = vmatpush1.bf16.msra.mxu0 0
        %4091 = vmatprep.subr.bf16.mxu0 0
        %4092 = vmatpush1.bf16.msra.mxu0 0
        %4093 = vmatprep.subr.bf16.mxu0 0
        %4094 = vmatpush1.bf16.msra.mxu0 0
        %4095 = vmatprep.subr.bf16.mxu0 0
        %4096 = vmatpush1.bf16.msra.mxu0 0
        %4097 = vmatprep.subr.bf16.mxu0 0
        %4098 = vmatpush1.bf16.msra.mxu0 0
        %4099 = vmatprep.subr.bf16.mxu0 0
        %4100 = vmatpush1.bf16.msra.mxu0 0
        %4101 = vmatprep.subr.bf16.mxu0 0
        %4102 = vmatpush1.bf16.msra.mxu0 0
        %4103 = vmatprep.subr.bf16.mxu0 0
        %4104 = vmatpush1.bf16.msra.mxu0 0
        %4105 = vmatprep.subr.bf16.mxu0 0
        %4106 = vmatpush1.bf16.msra.mxu0 0
        %4107 = vmatprep.subr.bf16.mxu0 0
        %4108 = vmatpush1.bf16.msra.mxu0 0
        %4109 = vmatprep.subr.bf16.mxu0 0
        %4110 = vmatpush1.bf16.msra.mxu0 0
        %4111 = vmatprep.subr.bf16.mxu0 0
        %4112 = vmatpush1.bf16.msra.mxu0 0
        %4113 = vmatprep.subr.bf16.mxu0 0
        %4114 = vmatpush1.bf16.msra.mxu0 0
        %4115 = vmatprep.mubr.bf16.mxu0 0
        %4116 = vmatmul.mubr.bf16.gmra.mrb[0].mxu0 %v2761
        %v4117 = vpop.f32.mrb[0].mxu0
        %v4118 = vadd.f32 %v4069, %v4117
        %v4119 = vpop.f32.mrb[0].mxu0
        %v4120 = vpop.f32.mrb[0].mxu0
        %v4121 = vadd.f32 %v4069, %v4120
        %v4122 = vpop.f32.mrb[0].mxu0
        %4123 = vmatprep.mubr.bf16.mxu0 0
        %4124 = vmatmul.mubr.bf16.gmra.mrb[0].mxu0 %v2764
        %v4125 = vpop.f32.mrb[0].mxu0
        %v4126 = vadd.f32 %v4069, %v4125
        %v4127 = vpop.f32.mrb[0].mxu0
        %v4128 = vpop.f32.mrb[0].mxu0
        %v4129 = vpop.f32.mrb[0].mxu0
        %4130 = vdwg.mxu0
        %s4131 = scalar_lea.vmem %s4, 112
        %v4132 = vld [vmem:[%s4131] sm:$0xf]
        %v4133 = vld [vmem:[%s4131 + $0x4] sm:$0xf]
        %v4134 = vld [vmem:[%s4131 + $0x8] sm:$0xf]
        %v4135 = vld [vmem:[%s4131 + $0xc] sm:$0xf]
        %s4136 = scalar_lea.vmem %s7, 7
        %v4137 = vld [vmem:[%s4136] sm:$0x1]
        %v4139 = vlaneseq
        %v4140 = vshrl.u32 %v4139, 7
        %v4141 = vsub.s32 0, %v4140
        %v4142 = vrot.slane %v4137, %v4141
        %v4148 = vunpack.c.l.b16 %v4132
        %v4149 = vunpack.c.l.b16 %v4133
        %v4150 = vunpack.c.l.b16 %v4134
        %v4151 = vunpack.c.l.b16 %v4135
        %v4152 = vpack.c.b16 %v4149, %v4148
        %v4153 = vpack.c.b16 %v4151, %v4150
        %4156 = vmatprep.subr.bf16.mxu0 0
        %4157 = vmatpush1.bf16.msra.mxu0 %v4152
        %4158 = vmatprep.subr.bf16.mxu0 0
        %4159 = vmatpush1.bf16.msra.mxu0 %v4153
        %4160 = vmatprep.subr.bf16.mxu0 0
        %4161 = vmatpush1.bf16.msra.mxu0 0
        %4162 = vmatprep.subr.bf16.mxu0 0
        %4163 = vmatpush1.bf16.msra.mxu0 0
        %4164 = vmatprep.subr.bf16.mxu0 0
        %4165 = vmatpush1.bf16.msra.mxu0 0
        %4166 = vmatprep.subr.bf16.mxu0 0
        %4167 = vmatpush1.bf16.msra.mxu0 0
        %4168 = vmatprep.subr.bf16.mxu0 0
        %4169 = vmatpush1.bf16.msra.mxu0 0
        %4170 = vmatprep.subr.bf16.mxu0 0
        %4171 = vmatpush1.bf16.msra.mxu0 0
        %4172 = vmatprep.subr.bf16.mxu0 0
        %4173 = vmatpush1.bf16.msra.mxu0 0
        %4174 = vmatprep.subr.bf16.mxu0 0
        %4175 = vmatpush1.bf16.msra.mxu0 0
        %4176 = vmatprep.subr.bf16.mxu0 0
        %4177 = vmatpush1.bf16.msra.mxu0 0
        %4178 = vmatprep.subr.bf16.mxu0 0
        %4179 = vmatpush1.bf16.msra.mxu0 0
        %4180 = vmatprep.subr.bf16.mxu0 0
        %4181 = vmatpush1.bf16.msra.mxu0 0
        %4182 = vmatprep.subr.bf16.mxu0 0
        %4183 = vmatpush1.bf16.msra.mxu0 0
        %4184 = vmatprep.subr.bf16.mxu0 0
        %4185 = vmatpush1.bf16.msra.mxu0 0
        %4186 = vmatprep.subr.bf16.mxu0 0
        %4187 = vmatpush1.bf16.msra.mxu0 0
        %4188 = vmatprep.mubr.bf16.mxu0 0
        %4189 = vmatmul.mubr.bf16.gmra.mrb[0].mxu0 %v2761
        %v4190 = vpop.f32.mrb[0].mxu0
        %v4191 = vadd.f32 %v4142, %v4190
        %v4192 = vpop.f32.mrb[0].mxu0
        %v4193 = vpop.f32.mrb[0].mxu0
        %v4194 = vadd.f32 %v4142, %v4193
        %v4195 = vpop.f32.mrb[0].mxu0
        %4196 = vmatprep.mubr.bf16.mxu0 0
        %4197 = vmatmul.mubr.bf16.gmra.mrb[0].mxu0 %v2764
        %v4198 = vpop.f32.mrb[0].mxu0
        %v4199 = vadd.f32 %v4142, %v4198
        %v4200 = vpop.f32.mrb[0].mxu0
        %v4201 = vpop.f32.mrb[0].mxu0
        %v4202 = vpop.f32.mrb[0].mxu0
        %4203 = vdwg.mxu0
        %s4204 = scalar_lea.vmem %s5, 112
        %v4205 = vld [vmem:[%s4204] sm:$0xf]
        %v4206 = vld [vmem:[%s4204 + $0x4] sm:$0xf]
        %v4207 = vld [vmem:[%s4204 + $0x8] sm:$0xf]
        %v4208 = vld [vmem:[%s4204 + $0xc] sm:$0xf]
        %s4209 = scalar_lea.vmem %s8, 7
        %v4210 = vld [vmem:[%s4209] sm:$0x1]
        %v4212 = vlaneseq
        %v4213 = vshrl.u32 %v4212, 7
        %v4214 = vsub.s32 0, %v4213
        %v4215 = vrot.slane %v4210, %v4214
        %v4221 = vunpack.c.l.b16 %v4205
        %v4222 = vunpack.c.l.b16 %v4206
        %v4223 = vunpack.c.l.b16 %v4207
        %v4224 = vunpack.c.l.b16 %v4208
        %v4225 = vpack.c.b16 %v4222, %v4221
        %v4226 = vpack.c.b16 %v4224, %v4223
        %4229 = vmatprep.subr.bf16.mxu0 0
        %4230 = vmatpush1.bf16.msra.mxu0 %v4225
        %4231 = vmatprep.subr.bf16.mxu0 0
        %4232 = vmatpush1.bf16.msra.mxu0 %v4226
        %4233 = vmatprep.subr.bf16.mxu0 0
        %4234 = vmatpush1.bf16.msra.mxu0 0
        %4235 = vmatprep.subr.bf16.mxu0 0
        %4236 = vmatpush1.bf16.msra.mxu0 0
        %4237 = vmatprep.subr.bf16.mxu0 0
        %4238 = vmatpush1.bf16.msra.mxu0 0
        %4239 = vmatprep.subr.bf16.mxu0 0
        %4240 = vmatpush1.bf16.msra.mxu0 0
        %4241 = vmatprep.subr.bf16.mxu0 0
        %4242 = vmatpush1.bf16.msra.mxu0 0
        %4243 = vmatprep.subr.bf16.mxu0 0
        %4244 = vmatpush1.bf16.msra.mxu0 0
        %4245 = vmatprep.subr.bf16.mxu0 0
        %4246 = vmatpush1.bf16.msra.mxu0 0
        %4247 = vmatprep.subr.bf16.mxu0 0
        %4248 = vmatpush1.bf16.msra.mxu0 0
        %4249 = vmatprep.subr.bf16.mxu0 0
        %4250 = vmatpush1.bf16.msra.mxu0 0
        %4251 = vmatprep.subr.bf16.mxu0 0
        %4252 = vmatpush1.bf16.msra.mxu0 0
        %4253 = vmatprep.subr.bf16.mxu0 0
        %4254 = vmatpush1.bf16.msra.mxu0 0
        %4255 = vmatprep.subr.bf16.mxu0 0
        %4256 = vmatpush1.bf16.msra.mxu0 0
        %4257 = vmatprep.subr.bf16.mxu0 0
        %4258 = vmatpush1.bf16.msra.mxu0 0
        %4259 = vmatprep.subr.bf16.mxu0 0
        %4260 = vmatpush1.bf16.msra.mxu0 0
        %4261 = vmatprep.mubr.bf16.mxu0 0
        %4262 = vmatmul.mubr.bf16.gmra.mrb[0].mxu0 %v2761
        %v4263 = vpop.f32.mrb[0].mxu0
        %v4264 = vadd.f32 %v4215, %v4263
        %v4265 = vpop.f32.mrb[0].mxu0
        %v4266 = vpop.f32.mrb[0].mxu0
        %v4267 = vadd.f32 %v4215, %v4266
        %v4268 = vpop.f32.mrb[0].mxu0
        %4269 = vmatprep.mubr.bf16.mxu0 0
        %4270 = vmatmul.mubr.bf16.gmra.mrb[0].mxu0 %v2764
        %v4271 = vpop.f32.mrb[0].mxu0
        %v4272 = vadd.f32 %v4215, %v4271
        %v4273 = vpop.f32.mrb[0].mxu0
        %v4274 = vpop.f32.mrb[0].mxu0
        %v4275 = vpop.f32.mrb[0].mxu0
        %4276 = vdwg.mxu0
        %v4277 = vpack.c.bf16 %v4121, %v4118
        %v4278 = vpack.c.bf16 %v4126, %v4126
        %v4279 = vpack.c.bf16 %v4194, %v4191
        %v4280 = vpack.c.bf16 %v4199, %v4199
        %v4282 = vsel %vm833, %v4277, 0
        %v4285 = vsel %vm833, %v4278, 0
        %v4288 = vsel %vm833, %v4279, 0
        %v4291 = vsel %vm833, %v4280, 0
        %4293 = vmatprep.subr.bf16.mxu0 0
        %4294 = vmatpush1.bf16.xpose.msra.mxu0 %v4288
        %4295 = vmatprep.subr.bf16.mxu0 0
        %4296 = vmatpush1.bf16.xpose.msra.mxu0 %v4291
        %4297 = vmatprep.subr.bf16.mxu0 0
        %4298 = vmatpush1.bf16.xpose.msra.mxu0 0
        %4299 = vmatprep.subr.bf16.mxu0 0
        %4300 = vmatpush1.bf16.xpose.msra.mxu0 0
        %4301 = vmatprep.subr.bf16.mxu0 0
        %4302 = vmatpush1.bf16.xpose.msra.mxu0 0
        %4303 = vmatprep.subr.bf16.mxu0 0
        %4304 = vmatpush1.bf16.xpose.msra.mxu0 0
        %4305 = vmatprep.subr.bf16.mxu0 0
        %4306 = vmatpush1.bf16.xpose.msra.mxu0 0
        %4307 = vmatprep.subr.bf16.mxu0 0
        %4308 = vmatpush1.bf16.xpose.msra.mxu0 0
        %4309 = vmatprep.subr.bf16.mxu0 0
        %4310 = vmatpush1.bf16.xpose.msra.mxu0 0
        %4311 = vmatprep.subr.bf16.mxu0 0
        %4312 = vmatpush1.bf16.xpose.msra.mxu0 0
        %4313 = vmatprep.subr.bf16.mxu0 0
        %4314 = vmatpush1.bf16.xpose.msra.mxu0 0
        %4315 = vmatprep.subr.bf16.mxu0 0
        %4316 = vmatpush1.bf16.xpose.msra.mxu0 0
        %4317 = vmatprep.subr.bf16.mxu0 0
        %4318 = vmatpush1.bf16.xpose.msra.mxu0 0
        %4319 = vmatprep.subr.bf16.mxu0 0
        %4320 = vmatpush1.bf16.xpose.msra.mxu0 0
        %4321 = vmatprep.subr.bf16.mxu0 0
        %4322 = vmatpush1.bf16.xpose.msra.mxu0 0
        %4323 = vmatprep.subr.bf16.mxu0 0
        %4324 = vmatpush1.bf16.xpose.msra.mxu0 0
        %4325 = vmatprep.mubr.bf16.mxu0 0
        %4326 = vmatmul.mubr.bf16.gmra.mrb[0].mxu0 %v4282
        %v4327 = vpop.f32.mrb[0].mxu0
        %v4328 = vadd.f32 0.0, %v4327
        %v4329 = vpop.f32.mrb[0].mxu0
        %v4330 = vpop.f32.mrb[0].mxu0
        %v4331 = vadd.f32 0.0, %v4330
        %v4332 = vpop.f32.mrb[0].mxu0
        %4333 = vmatprep.mubr.bf16.mxu0 0
        %4334 = vmatmul.mubr.bf16.gmra.mrb[0].mxu0 %v4285
        %v4335 = vpop.f32.mrb[0].mxu0
        %v4336 = vadd.f32 0.0, %v4335
        %v4337 = vpop.f32.mrb[0].mxu0
        %v4338 = vpop.f32.mrb[0].mxu0
        %v4339 = vpop.f32.mrb[0].mxu0
        %4340 = vdwg.mxu0
        %v4341 = vsel %vm894, %v4328, -inf
        %4342 = vmax.xlane.f32.xlu0 %v4341
        %v4343 = vpop.xlane.xlu0 %4342
        %v4344 = vsel %vm894, %v4331, -inf
        %4345 = vmax.xlane.f32.xlu0 %v4344
        %v4346 = vpop.xlane.xlu0 %4345
        %v4347 = vsel %vm901, %v4336, -inf
        %4348 = vmax.xlane.f32.xlu0 %v4347
        %v4349 = vpop.xlane.xlu0 %4348
        %v4350 = vsub.f32 %v4328, %v4343
        %v4351 = vsub.f32 %v4331, %v4346
        %v4352 = vsub.f32 %v4336, %v4349
        %v4353 = vmul.f32 %v4350, 1.442695
        %v4354 = vpow.pop %v4353
        %v4355 = vmul.f32 %v4351, 1.442695
        %v4356 = vpow.pop %v4355
        %v4357 = vmul.f32 %v4352, 1.442695
        %v4358 = vpow.pop %v4357
        %v4359 = vsel %vm894, %v4354, 0.0
        %4360 = vadd.xlane.f32.xlu0 %v4359
        %v4361 = vpop.xlane.xlu0 %4360
        %v4362 = vsel %vm894, %v4356, 0.0
        %4363 = vadd.xlane.f32.xlu0 %v4362
        %v4364 = vpop.xlane.xlu0 %4363
        %v4365 = vsel %vm901, %v4358, 0.0
        %4366 = vadd.xlane.f32.xlu0 %v4365
        %v4367 = vpop.xlane.xlu0 %4366
        %v4368 = vrcp.pop %v4361
        %v4369 = vrcp.pop %v4364
        %v4370 = vrcp.pop %v4367
        %v4371 = vpack.c.bf16 %v4356, %v4354
        %v4372 = vpack.c.bf16 %v4358, %v4358
        %v4373 = vpack.c.bf16 %v4267, %v4264
        %v4374 = vpack.c.bf16 %v4272, %v4272
        %v4376 = vsel %vm894, %v4371, 0
        %v4379 = vsel %vm894, %v4372, 0
        %v4382 = vand.u32 %v4374, %v938
        %4384 = vmatprep.subr.bf16.mxu0 0
        %4385 = vmatpush1.bf16.msra.mxu0 %v4373
        %4386 = vmatprep.subr.bf16.mxu0 0
        %4387 = vmatpush1.bf16.msra.mxu0 %v4382
        %4388 = vmatprep.subr.bf16.mxu0 0
        %4389 = vmatpush1.bf16.msra.mxu0 0
        %4390 = vmatprep.subr.bf16.mxu0 0
        %4391 = vmatpush1.bf16.msra.mxu0 0
        %4392 = vmatprep.subr.bf16.mxu0 0
        %4393 = vmatpush1.bf16.msra.mxu0 0
        %4394 = vmatprep.subr.bf16.mxu0 0
        %4395 = vmatpush1.bf16.msra.mxu0 0
        %4396 = vmatprep.subr.bf16.mxu0 0
        %4397 = vmatpush1.bf16.msra.mxu0 0
        %4398 = vmatprep.subr.bf16.mxu0 0
        %4399 = vmatpush1.bf16.msra.mxu0 0
        %4400 = vmatprep.subr.bf16.mxu0 0
        %4401 = vmatpush1.bf16.msra.mxu0 0
        %4402 = vmatprep.subr.bf16.mxu0 0
        %4403 = vmatpush1.bf16.msra.mxu0 0
        %4404 = vmatprep.subr.bf16.mxu0 0
        %4405 = vmatpush1.bf16.msra.mxu0 0
        %4406 = vmatprep.subr.bf16.mxu0 0
        %4407 = vmatpush1.bf16.msra.mxu0 0
        %4408 = vmatprep.subr.bf16.mxu0 0
        %4409 = vmatpush1.bf16.msra.mxu0 0
        %4410 = vmatprep.subr.bf16.mxu0 0
        %4411 = vmatpush1.bf16.msra.mxu0 0
        %4412 = vmatprep.subr.bf16.mxu0 0
        %4413 = vmatpush1.bf16.msra.mxu0 0
        %4414 = vmatprep.subr.bf16.mxu0 0
        %4415 = vmatpush1.bf16.msra.mxu0 0
        %4416 = vmatprep.mubr.bf16.mxu0 0
        %4417 = vmatmul.mubr.bf16.gmra.mrb[0].mxu0 %v4376
        %v4418 = vpop.f32.mrb[0].mxu0
        %v4419 = vadd.f32 0.0, %v4418
        %v4420 = vpop.f32.mrb[0].mxu0
        %v4421 = vpop.f32.mrb[0].mxu0
        %v4422 = vadd.f32 0.0, %v4421
        %v4423 = vpop.f32.mrb[0].mxu0
        %4424 = vmatprep.mubr.bf16.mxu0 0
        %4425 = vmatmul.mubr.bf16.gmra.mrb[0].mxu0 %v4379
        %v4426 = vpop.f32.mrb[0].mxu0
        %v4427 = vadd.f32 0.0, %v4426
        %v4428 = vpop.f32.mrb[0].mxu0
        %v4429 = vpop.f32.mrb[0].mxu0
        %v4430 = vpop.f32.mrb[0].mxu0
        %4431 = vdwg.mxu0
        %v4432 = vmul.f32 %v4419, %v4368
        %v4433 = vmul.f32 %v4422, %v4369
        %v4434 = vmul.f32 %v4427, %v4370
        %v4435 = vpack.c.bf16 %v4433, %v4432
        %v4436 = vpack.c.bf16 %v4434, %v4434
        %s4437 = scalar_lea.vmem %s9, 28
        %v4438 = vld [vmem:[%s4437] sm:$0xf]
        %v4440 = vsel %vm833, %v4435, 0
        %v4443 = vsel %vm833, %v4436, 0
        %v4446 = vsel %vm1383, %v4438, 0
        %4448 = vmatprep.subr.bf16.mxu0 0
        %4449 = vmatpush1.bf16.msra.mxu0 %v4446
        %4450 = vmatprep.subr.bf16.mxu0 0
        %4451 = vmatpush1.bf16.msra.mxu0 0
        %4452 = vmatprep.subr.bf16.mxu0 0
        %4453 = vmatpush1.bf16.msra.mxu0 0
        %4454 = vmatprep.subr.bf16.mxu0 0
        %4455 = vmatpush1.bf16.msra.mxu0 0
        %4456 = vmatprep.subr.bf16.mxu0 0
        %4457 = vmatpush1.bf16.msra.mxu0 0
        %4458 = vmatprep.subr.bf16.mxu0 0
        %4459 = vmatpush1.bf16.msra.mxu0 0
        %4460 = vmatprep.subr.bf16.mxu0 0
        %4461 = vmatpush1.bf16.msra.mxu0 0
        %4462 = vmatprep.subr.bf16.mxu0 0
        %4463 = vmatpush1.bf16.msra.mxu0 0
        %4464 = vmatprep.subr.bf16.mxu0 0
        %4465 = vmatpush1.bf16.msra.mxu0 0
        %4466 = vmatprep.subr.bf16.mxu0 0
        %4467 = vmatpush1.bf16.msra.mxu0 0
        %4468 = vmatprep.subr.bf16.mxu0 0
        %4469 = vmatpush1.bf16.msra.mxu0 0
        %4470 = vmatprep.subr.bf16.mxu0 0
        %4471 = vmatpush1.bf16.msra.mxu0 0
        %4472 = vmatprep.subr.bf16.mxu0 0
        %4473 = vmatpush1.bf16.msra.mxu0 0
        %4474 = vmatprep.subr.bf16.mxu0 0
        %4475 = vmatpush1.bf16.msra.mxu0 0
        %4476 = vmatprep.subr.bf16.mxu0 0
        %4477 = vmatpush1.bf16.msra.mxu0 0
        %4478 = vmatprep.subr.bf16.mxu0 0
        %4479 = vmatpush1.bf16.msra.mxu0 0
        %4480 = vmatprep.mubr.bf16.mxu0 0
        %4481 = vmatmul.mubr.bf16.gmra.mrb[0].mxu0 %v4440
        %v4482 = vpop.f32.mrb[0].mxu0
        %v4483 = vadd.f32 0.0, %v4482
        %v4484 = vpop.f32.mrb[0].mxu0
        %v4485 = vpop.f32.mrb[0].mxu0
        %v4486 = vadd.f32 0.0, %v4485
        %v4487 = vpop.f32.mrb[0].mxu0
        %4488 = vmatprep.mubr.bf16.mxu0 0
        %4489 = vmatmul.mubr.bf16.gmra.mrb[0].mxu0 %v4443
        %v4490 = vpop.f32.mrb[0].mxu0
        %v4491 = vadd.f32 0.0, %v4490
        %v4492 = vpop.f32.mrb[0].mxu0
        %v4493 = vpop.f32.mrb[0].mxu0
        %v4494 = vpop.f32.mrb[0].mxu0
        %4495 = vdwg.mxu0
        %v4496 = vadd.f32 %v4055, %v4483
        %v4497 = vadd.f32 %v4056, %v4486
        %v4498 = vadd.f32 %v4057, %v4491
        %v4499 = vlaneseq
        %v4500 = vshrl.u32 %v4499, 7
        %v4501 = vsub.s32 2, %v4500
        %v4502 = vrot.slane %v2679, %v4501
        %v4503 = vadd.f32 %v4496, %v4502
        %v4504 = vadd.f32 %v4497, %v4502
        %v4505 = vadd.f32 %v4498, %v4502
        %v4506 = vlaneseq
        %v4507 = vshrl.u32 %v4506, 7
        %v4508 = vsub.s32 3, %v4507
        %v4509 = vrot.slane %v2679, %v4508
        %v4510 = vmul.f32 %v4509, %v4503
        %v4511 = vmul.f32 %v4509, %v4504
        %v4512 = vmul.f32 %v4509, %v4505
        %v4513 = vadd.f32 %v2675, %v4510
        %v4514 = vadd.f32 %v2676, %v4511
        %v4515 = vadd.f32 %v2677, %v4512
        %v4516 = vsel %vm552, %v4513, 0.0
        %4517 = vadd.xlane.f32.xlu0 %v4516
        %v4518 = vpop.xlane.xlu0 %4517
        %v4519 = vsel %vm552, %v4514, 0.0
        %4520 = vadd.xlane.f32.xlu0 %v4519
        %v4521 = vpop.xlane.xlu0 %4520
        %v4522 = vsel %vm559, %v4515, 0.0
        %4523 = vadd.xlane.f32.xlu0 %v4522
        %v4524 = vpop.xlane.xlu0 %4523
        %v4525 = vmul.f32 %v4518, %v563
        %v4526 = vmul.f32 %v4521, %v563
        %v4527 = vmul.f32 %v4524, %v563
        %v4528 = vsub.f32 %v4513, %v4525
        %v4529 = vsub.f32 %v4514, %v4526
        %v4530 = vsub.f32 %v4515, %v4527
        %v4531 = vmul.f32 %v4528, %v4528
        %v4532 = vmul.f32 %v4529, %v4529
        %v4533 = vmul.f32 %v4530, %v4530
        %v4534 = vsel %vm552, %v4531, 0.0
        %4535 = vadd.xlane.f32.xlu0 %v4534
        %v4536 = vpop.xlane.xlu0 %4535
        %v4537 = vsel %vm552, %v4532, 0.0
        %4538 = vadd.xlane.f32.xlu0 %v4537
        %v4539 = vpop.xlane.xlu0 %4538
        %v4540 = vsel %vm559, %v4533, 0.0
        %4541 = vadd.xlane.f32.xlu0 %v4540
        %v4542 = vpop.xlane.xlu0 %4541
        %v4543 = vmul.f32 %v4536, %v563
        %v4544 = vmul.f32 %v4539, %v563
        %v4545 = vmul.f32 %v4542, %v563
        %v4546 = vadd.f32 %v4543, 1e-06
        %v4547 = vadd.f32 %v4544, 1e-06
        %v4548 = vadd.f32 %v4545, 1e-06
        %v4549 = vrsqrt.pop %v4546
        %v4550 = vrsqrt.pop %v4547
        %v4551 = vrsqrt.pop %v4548
        %v4552 = vmul.f32 %v4528, %v4549
        %v4553 = vmul.f32 %v4529, %v4550
        %v4554 = vmul.f32 %v4530, %v4551
        %v4555 = vlaneseq
        %v4556 = vshrl.u32 %v4555, 7
        %v4557 = vsub.s32 4, %v4556
        %v4558 = vrot.slane %v2679, %v4557
        %v4559 = vmul.f32 %v4552, %v4558
        %v4560 = vmul.f32 %v4553, %v4558
        %v4561 = vmul.f32 %v4554, %v4558
        %v4562 = vlaneseq
        %v4563 = vshrl.u32 %v4562, 7
        %v4564 = vsub.s32 5, %v4563
        %v4565 = vrot.slane %v2679, %v4564
        %v4566 = vadd.f32 %v4559, %v4565
        %v4567 = vadd.f32 %v4560, %v4565
        %v4568 = vadd.f32 %v4561, %v4565
        %v4569 = vpack.c.bf16 %v4567, %v4566
        %v4570 = vpack.c.bf16 %v4568, %v4568
        %s4571 = scalar_lea.vmem %s10, 16
        %v4572 = vld [vmem:[%s4571] sm:$0xf]
        %v4573 = vld [vmem:[%s4571 + $0x4] sm:$0xf]
        %v4574 = vld [vmem:[%s4571 + $0x8] sm:$0xf]
        %v4575 = vld [vmem:[%s4571 + $0xc] sm:$0xf]
        %s4576 = scalar_lea.vmem %s11, 1
        %v4577 = vld [vmem:[%s4576] sm:$0x1]
        %v4579 = vlaneseq
        %v4580 = vshrl.u32 %v4579, 7
        %v4581 = vsub.s32 0, %v4580
        %v4582 = vrot.slane %v4577, %v4581
        %v4588 = vunpack.c.l.b16 %v4572
        %v4589 = vunpack.c.l.b16 %v4573
        %v4590 = vunpack.c.l.b16 %v4574
        %v4591 = vunpack.c.l.b16 %v4575
        %v4592 = vpack.c.b16 %v4589, %v4588
        %v4593 = vpack.c.b16 %v4591, %v4590
        %v4597 = vsel %vm552, %v4569, 0
        %v4600 = vsel %vm552, %v4570, 0
        %4602 = vmatprep.subr.bf16.mxu0 0
        %4603 = vmatpush1.bf16.msra.mxu0 %v4592
        %4604 = vmatprep.subr.bf16.mxu0 0
        %4605 = vmatpush1.bf16.msra.mxu0 %v4593
        %4606 = vmatprep.subr.bf16.mxu0 0
        %4607 = vmatpush1.bf16.msra.mxu0 0
        %4608 = vmatprep.subr.bf16.mxu0 0
        %4609 = vmatpush1.bf16.msra.mxu0 0
        %4610 = vmatprep.subr.bf16.mxu0 0
        %4611 = vmatpush1.bf16.msra.mxu0 0
        %4612 = vmatprep.subr.bf16.mxu0 0
        %4613 = vmatpush1.bf16.msra.mxu0 0
        %4614 = vmatprep.subr.bf16.mxu0 0
        %4615 = vmatpush1.bf16.msra.mxu0 0
        %4616 = vmatprep.subr.bf16.mxu0 0
        %4617 = vmatpush1.bf16.msra.mxu0 0
        %4618 = vmatprep.subr.bf16.mxu0 0
        %4619 = vmatpush1.bf16.msra.mxu0 0
        %4620 = vmatprep.subr.bf16.mxu0 0
        %4621 = vmatpush1.bf16.msra.mxu0 0
        %4622 = vmatprep.subr.bf16.mxu0 0
        %4623 = vmatpush1.bf16.msra.mxu0 0
        %4624 = vmatprep.subr.bf16.mxu0 0
        %4625 = vmatpush1.bf16.msra.mxu0 0
        %4626 = vmatprep.subr.bf16.mxu0 0
        %4627 = vmatpush1.bf16.msra.mxu0 0
        %4628 = vmatprep.subr.bf16.mxu0 0
        %4629 = vmatpush1.bf16.msra.mxu0 0
        %4630 = vmatprep.subr.bf16.mxu0 0
        %4631 = vmatpush1.bf16.msra.mxu0 0
        %4632 = vmatprep.subr.bf16.mxu0 0
        %4633 = vmatpush1.bf16.msra.mxu0 0
        %4634 = vmatprep.mubr.bf16.mxu0 0
        %4635 = vmatmul.mubr.bf16.gmra.mrb[0].mxu0 %v4597
        %v4636 = vpop.f32.mrb[0].mxu0
        %v4637 = vadd.f32 %v4582, %v4636
        %v4638 = vpop.f32.mrb[0].mxu0
        %v4639 = vpop.f32.mrb[0].mxu0
        %v4640 = vadd.f32 %v4582, %v4639
        %v4641 = vpop.f32.mrb[0].mxu0
        %4642 = vmatprep.mubr.bf16.mxu0 0
        %4643 = vmatmul.mubr.bf16.gmra.mrb[0].mxu0 %v4600
        %v4644 = vpop.f32.mrb[0].mxu0
        %v4645 = vadd.f32 %v4582, %v4644
        %v4646 = vpop.f32.mrb[0].mxu0
        %v4647 = vpop.f32.mrb[0].mxu0
        %v4648 = vpop.f32.mrb[0].mxu0
        %4649 = vdwg.mxu0
        %v4650 = vmul.f32 %v4637, 0.5
        %v4651 = vmul.f32 %v4640, 0.5
        %v4652 = vmul.f32 %v4645, 0.5
        %v4653 = vmul.f32 %v4637, 0.044715
        %v4654 = vmul.f32 %v4640, 0.044715
        %v4655 = vmul.f32 %v4645, 0.044715
        %v4656 = vmul.f32 %v4653, %v4637
        %v4657 = vmul.f32 %v4654, %v4640
        %v4658 = vmul.f32 %v4655, %v4645
        %v4659 = vmul.f32 %v4656, %v4637
        %v4660 = vmul.f32 %v4657, %v4640
        %v4661 = vmul.f32 %v4658, %v4645
        %v4662 = vadd.f32 %v4637, %v4659
        %v4663 = vadd.f32 %v4640, %v4660
        %v4664 = vadd.f32 %v4645, %v4661
        %v4665 = vmul.f32 %v4662, 0.7978846
        %v4666 = vmul.f32 %v4663, 0.7978846
        %v4667 = vmul.f32 %v4664, 0.7978846
        %v4668 = vtanh.pop %v4665
        %v4669 = vtanh.pop %v4666
        %v4670 = vtanh.pop %v4667
        %v4671 = vadd.f32 %v4668, 1.0
        %v4672 = vadd.f32 %v4669, 1.0
        %v4673 = vadd.f32 %v4670, 1.0
        %v4674 = vmul.f32 %v4650, %v4671
        %v4675 = vmul.f32 %v4651, %v4672
        %v4676 = vmul.f32 %v4652, %v4673
        %v4677 = vpack.c.bf16 %v4675, %v4674
        %v4678 = vpack.c.bf16 %v4676, %v4676
        %s4679 = scalar_lea.vmem %s12, 64
        %v4680 = vld [vmem:[%s4679] sm:$0xf]
        %v4681 = vld [vmem:[%s4679 + $0x4] sm:$0xf]
        %v4682 = vld [vmem:[%s4679 + $0x8] sm:$0xf]
        %v4683 = vld [vmem:[%s4679 + $0xc] sm:$0xf]
        %v4684 = vld [vmem:[%s4679 + $0x10] sm:$0xf]
        %v4685 = vld [vmem:[%s4679 + $0x14] sm:$0xf]
        %v4686 = vld [vmem:[%s4679 + $0x18] sm:$0xf]
        %v4687 = vld [vmem:[%s4679 + $0x1c] sm:$0xf]
        %v4688 = vld [vmem:[%s4679 + $0x20] sm:$0xf]
        %v4689 = vld [vmem:[%s4679 + $0x24] sm:$0xf]
        %v4690 = vld [vmem:[%s4679 + $0x28] sm:$0xf]
        %v4691 = vld [vmem:[%s4679 + $0x2c] sm:$0xf]
        %v4692 = vld [vmem:[%s4679 + $0x30] sm:$0xf]
        %v4693 = vld [vmem:[%s4679 + $0x34] sm:$0xf]
        %v4694 = vld [vmem:[%s4679 + $0x38] sm:$0xf]
        %v4695 = vld [vmem:[%s4679 + $0x3c] sm:$0xf]
        %v4696 = vlaneseq
        %v4697 = vshrl.u32 %v4696, 7
        %v4698 = vsub.s32 6, %v4697
        %v4699 = vrot.slane %v2679, %v4698
        %v4716 = vunpack.c.l.b16 %v4680
        %v4717 = vunpack.c.l.b16 %v4681
        %v4718 = vunpack.c.l.b16 %v4682
        %v4719 = vunpack.c.l.b16 %v4683
        %v4720 = vunpack.c.l.b16 %v4684
        %v4721 = vunpack.c.l.b16 %v4685
        %v4722 = vunpack.c.l.b16 %v4686
        %v4723 = vunpack.c.l.b16 %v4687
        %v4724 = vunpack.c.l.b16 %v4688
        %v4725 = vunpack.c.l.b16 %v4689
        %v4726 = vunpack.c.l.b16 %v4690
        %v4727 = vunpack.c.l.b16 %v4691
        %v4728 = vunpack.c.l.b16 %v4692
        %v4729 = vunpack.c.l.b16 %v4693
        %v4730 = vunpack.c.l.b16 %v4694
        %v4731 = vunpack.c.l.b16 %v4695
        %v4732 = vpack.c.b16 %v4717, %v4716
        %v4733 = vpack.c.b16 %v4719, %v4718
        %v4734 = vpack.c.b16 %v4721, %v4720
        %v4735 = vpack.c.b16 %v4723, %v4722
        %v4736 = vpack.c.b16 %v4725, %v4724
        %v4737 = vpack.c.b16 %v4727, %v4726
        %v4738 = vpack.c.b16 %v4729, %v4728
        %v4739 = vpack.c.b16 %v4731, %v4730
        %4748 = vmatprep.subr.bf16.mxu0 0
        %4749 = vmatpush1.bf16.msra.mxu0 %v4732
        %4750 = vmatprep.subr.bf16.mxu0 0
        %4751 = vmatpush1.bf16.msra.mxu0 %v4733
        %4752 = vmatprep.subr.bf16.mxu0 0
        %4753 = vmatpush1.bf16.msra.mxu0 %v4734
        %4754 = vmatprep.subr.bf16.mxu0 0
        %4755 = vmatpush1.bf16.msra.mxu0 %v4735
        %4756 = vmatprep.subr.bf16.mxu0 0
        %4757 = vmatpush1.bf16.msra.mxu0 %v4736
        %4758 = vmatprep.subr.bf16.mxu0 0
        %4759 = vmatpush1.bf16.msra.mxu0 %v4737
        %4760 = vmatprep.subr.bf16.mxu0 0
        %4761 = vmatpush1.bf16.msra.mxu0 %v4738
        %4762 = vmatprep.subr.bf16.mxu0 0
        %4763 = vmatpush1.bf16.msra.mxu0 %v4739
        %4764 = vmatprep.subr.bf16.mxu0 0
        %4765 = vmatpush1.bf16.msra.mxu0 0
        %4766 = vmatprep.subr.bf16.mxu0 0
        %4767 = vmatpush1.bf16.msra.mxu0 0
        %4768 = vmatprep.subr.bf16.mxu0 0
        %4769 = vmatpush1.bf16.msra.mxu0 0
        %4770 = vmatprep.subr.bf16.mxu0 0
        %4771 = vmatpush1.bf16.msra.mxu0 0
        %4772 = vmatprep.subr.bf16.mxu0 0
        %4773 = vmatpush1.bf16.msra.mxu0 0
        %4774 = vmatprep.subr.bf16.mxu0 0
        %4775 = vmatpush1.bf16.msra.mxu0 0
        %4776 = vmatprep.subr.bf16.mxu0 0
        %4777 = vmatpush1.bf16.msra.mxu0 0
        %4778 = vmatprep.subr.bf16.mxu0 0
        %4779 = vmatpush1.bf16.msra.mxu0 0
        %4780 = vmatprep.mubr.bf16.mxu0 0
        %4781 = vmatmul.mubr.bf16.gmra.mrb[0].mxu0 %v4677
        %v4782 = vpop.f32.mrb[0].mxu0
        %v4783 = vadd.f32 %v4699, %v4782
        %v4784 = vpop.f32.mrb[0].mxu0
        %v4785 = vpop.f32.mrb[0].mxu0
        %v4786 = vadd.f32 %v4699, %v4785
        %v4787 = vpop.f32.mrb[0].mxu0
        %4788 = vmatprep.mubr.bf16.mxu0 0
        %4789 = vmatmul.mubr.bf16.gmra.mrb[0].mxu0 %v4678
        %v4790 = vpop.f32.mrb[0].mxu0
        %v4791 = vpop.f32.mrb[0].mxu0
        %v4792 = vpop.f32.mrb[0].mxu0
        %v4793 = vpop.f32.mrb[0].mxu0
        %4794 = vdwg.mxu0
        %v4795 = vlaneseq
        %v4796 = vshrl.u32 %v4795, 7
        %v4797 = vsub.s32 7, %v4796
        %v4798 = vrot.slane %v2679, %v4797
        %v4799 = vmul.f32 %v4798, %v4783
        %v4800 = vmul.f32 %v4798, %v4786
        %v4801 = vadd.f32 %v4513, %v4799
        %v4802 = vadd.f32 %v4514, %v4800
        %v4803 = vsel %vm552, %v4801, 0.0
        %4804 = vadd.xlane.f32.xlu0 %v4803
        %v4805 = vpop.xlane.xlu0 %4804
        %v4806 = vsel %vm552, %v4802, 0.0
        %4807 = vadd.xlane.f32.xlu0 %v4806
        %v4808 = vpop.xlane.xlu0 %4807
        %v4809 = vmul.f32 %v4805, %v563
        %v4810 = vmul.f32 %v4808, %v563
        %v4811 = vsub.f32 %v4801, %v4809
        %v4812 = vsub.f32 %v4802, %v4810
        %v4813 = vmul.f32 %v4811, %v4811
        %v4814 = vmul.f32 %v4812, %v4812
        %v4815 = vsel %vm552, %v4813, 0.0
        %4816 = vadd.xlane.f32.xlu0 %v4815
        %v4817 = vpop.xlane.xlu0 %4816
        %v4818 = vsel %vm552, %v4814, 0.0
        %4819 = vadd.xlane.f32.xlu0 %v4818
        %v4820 = vpop.xlane.xlu0 %4819
        %v4821 = vmul.f32 %v4817, %v563
        %v4822 = vmul.f32 %v4820, %v563
        %v4823 = vadd.f32 %v4821, 1e-06
        %v4824 = vadd.f32 %v4822, 1e-06
        %v4825 = vrsqrt.pop %v4823
        %v4826 = vrsqrt.pop %v4824
        %v4827 = vmul.f32 %v4811, %v4825
        %v4828 = vmul.f32 %v4812, %v4826
        %v4829 = vlaneseq
        %v4830 = vshrl.u32 %v4829, 7
        %v4831 = vsub.s32 0, %v4830
        %v4832 = vrot.slane %v470, %v4831
        %v4833 = vmul.f32 %v4827, %v4832
        %v4834 = vmul.f32 %v4828, %v4832
        %v4835 = vlaneseq
        %v4836 = vshrl.u32 %v4835, 7
        %v4837 = vsub.s32 0, %v4836
        %v4838 = vrot.slane %v471, %v4837
        %v4839 = vadd.f32 %v4833, %v4838
        %v4840 = vadd.f32 %v4834, %v4838
        %4841 = vst.msk [vmem:[%s461] sm:$0xff] %vm552, %v4839
        %4842 = vst.msk [vmem:[%s461 + $0x8] sm:$0xff] %vm552, %v4840
        %s4843 = sand.u32 %s335, 1
        %s4844 = scalar_lea.sflag [#allocation3], %s4843
        %s4845 = sand.u32 %s335, 1
        %s4846 = smul.addr %s4845, 16
        %s4847 = scalar_lea.vmem [#allocation2], %s4846
        // Predicated region
        $region77: #{tpu_custom_call.1} parent=75 // pred_check
          %p4848 = pneg %p345
        $region78: #{tpu_custom_call.1} parent=75 // pred_check_branch
          %4850 = sbr.rel (%p4848) target = $region80
        $region79: #{tpu_custom_call.1} parent=75 // pred_region
          %s4851 = smul.u32 2, %s28
          %s4853 = ssub.s32 256, 256
          %4854 = vsyncadd %s4844, %s4853
          %s4855 = smul.addr %s4851, 128
          %s4856 = scalar_lea.hbm %s14, %s4855
          %s4857 = sshll.u32 %s4847, 4
          %s4858 = int_to_ptr.vmem [resolvable:$true] %s4857
          %4863 = dma.vmem_to_hbm [thread:$0]  %s4858, 256, %s4856, %s4844, 128, 128, 8
        $region80: #{tpu_custom_call.1} parent=75 // pred_fallthru
          _
      $region76: #{tpu_custom_call.1} parent=5 // pred_fallthru
        _
      %p4864 = scmp.le.s32.totalorder 2, %s23
      // Predicated region
      $region81: #{tpu_custom_call.1} parent=5 // pred_check
        %p4865 = pneg %p4864
      $region82: #{tpu_custom_call.1} parent=5 // pred_check_branch
        %4867 = sbr.rel (%p4865) target = $region84
      $region83: #{tpu_custom_call.1} parent=5 // pred_region
        %s4868 = ssub.s32 %s23, 2
        // Predicated region
        $region85: #{tpu_custom_call.1} parent=83 // pred_check
          %p4869 = pneg %p351
        $region86: #{tpu_custom_call.1} parent=83 // pred_check_branch
          %4871 = sbr.rel (%p4869) target = $region88
        $region87: #{tpu_custom_call.1} parent=83 // pred_region
          %s4872 = sand.u32 %s336, 1
          %s4873 = scalar_lea.sflag [#allocation3], %s4872
          %s4874 = sand.u32 %s336, 1
          %s4875 = smul.addr %s4874, 16
          %s4876 = scalar_lea.vmem [#allocation2], %s4875
          %4877 = dma.done %s4873, 256
        $region88: #{tpu_custom_call.1} parent=83 // pred_fallthru
          _
      $region84: #{tpu_custom_call.1} parent=5 // pred_fallthru
        _
    $region6: #{tpu_custom_call.1} parent=1 // loop_footer
      %s27 = sadd.s32 1, %s23
    $region7: #{tpu_custom_call.1} parent=1 // loop_footer_branch
      %22 = sbr.rel target = $region3
    $region8: #{tpu_custom_call.1} parent=1 // loop_exit
      _
    %4878 = vsyncpa [#allocation3], 1
    %s4879 = scalar_lea.sflag [#allocation3], 1
    %4880 = vsyncpa %s4879, 1

</llo_original>
